<compile_context>
chip_gen: v7x
topology: tpu7x:2x2x1
jax: 0.10.0
libtpu: 0.0.40
codegen_flags: <defaults>
</compile_context>

<pallas_src>
import functools

import jax
import jax.numpy as jnp
from jax.experimental import pallas as pl
from jax.experimental.pallas import tpu as pltpu


def _mha_kernel(x_ref, wqkv_ref, wor_ref, br_ref, gamma_ref, beta_ref, out_ref,
                *, seqs_per_step, seq_len, num_heads, d_qk, d_v, inv_T, eps,
                approx_recip):
    n = seq_len
    mdt = wqkv_ref.dtype            # MXU operand dtype (f32, or host-pre-cast bf16)

    x = x_ref[...]                                               # (bb*N, C) f32
    xm = x.astype(mdt)

    # One fused, lane-dense QKV projection over every row of this step's block.
    qkv = jnp.dot(xm, wqkv_ref[...],
                  preferred_element_type=jnp.float32)            # (bb*N, H*(2dqk+dv))

    hq = num_heads * d_qk
    # Temperature folded onto q (scales bb*N*H*d_qk elems, not H*N*N scores).
    # Casts hoisted out of the per-head loop (no-ops on the f32 path).
    q_all = (qkv[:, :hq] * inv_T).astype(mdt)
    k_all = qkv[:, hq:2 * hq].astype(mdt)
    v_all = qkv[:, 2 * hq:].astype(mdt)

    # Attention core per (sequence, head).  seqs_per_step and num_heads are small
    # & static, so this unrolls and the scheduler interleaves the small
    # MXU / VPU / EUP ops across iterations.
    ctx_rows = []
    for b in range(seqs_per_step):
        r0 = b * n
        head_parts = []
        for h in range(num_heads):
            q_h = q_all[r0:r0 + n, h * d_qk:(h + 1) * d_qk]      # (N, d_qk)
            k_h = k_all[r0:r0 + n, h * d_qk:(h + 1) * d_qk]      # (N, d_qk)
            v_h = v_all[r0:r0 + n, h * d_v:(h + 1) * d_v]        # (N, d_v)

            # scores[i, j] = q_i . k_j  -- contract the shared last dim directly
            # (no k.T / XLU transpose).
            s = jax.lax.dot_general(q_h, k_h, (((1,), (1,)), ((), ())),
                                    preferred_element_type=jnp.float32)  # (N, N)

            # Softmax over keys (PyTorch softmax dim=1), max-subtracted; the
            # normalization is a reciprocal-multiply (EUP when approx=True).
            s = s - jnp.max(s, axis=-1, keepdims=True)
            e = jnp.exp(s)
            att = e * pl.reciprocal(jnp.sum(e, axis=-1, keepdims=True),
                                    approx=approx_recip)
            head_parts.append(
                jnp.dot(att.astype(mdt), v_h, preferred_element_type=jnp.float32))
        # TODO(synk): verify in the bundle whether these 16-lane concats show up
        #             on the critical path; if so, accumulate ctx_h @ W_o[h] per
        #             head into an f32 accumulator instead.
        ctx_rows.append(jnp.concatenate(head_parts, axis=-1))    # (N, H*d_v)

    ctx = jnp.concatenate(ctx_rows, axis=0).astype(mdt)          # (bb*N, H*d_v)

    # Single fused output-projection + residual-Linear matmul on [ctx | x],
    # then the bias add.
    out = jnp.dot(jnp.concatenate([ctx, xm], axis=-1), wor_ref[...],
                  preferred_element_type=jnp.float32)            # (bb*N, num_output)
    out = out + br_ref[...]

    # LayerNorm over the feature dim (nn.LayerNorm default eps), kept in f32.
    mean = jnp.mean(out, axis=-1, keepdims=True)
    var = jnp.mean((out - mean) ** 2, axis=-1, keepdims=True)
    normed = (out - mean) * jax.lax.rsqrt(var + eps)
    out_ref[...] = (normed * gamma_ref[...] + beta_ref[...]).astype(out_ref.dtype)


def pack_mha_weights(wq, wk, wv, wo, wr=None, br=None, *, num_output,
                     mxu_dtype=None):
    """Pack per-head weights into the kernel's fused operands.  Do this ONCE
    (outside the hot path); the packed arrays are what the kernel consumes.

    wq/wk: (H, C, d_qk); wv: (H, C, d_v); wo: (H, d_v, num_output);
    wr: (C, num_output) or None (None = Identity residual, requires C == num_output);
    br: (1, num_output) or None.
    """
    H, C, d_qk = wq.shape
    d_v = wv.shape[-1]
    if wr is None:
        assert C == num_output, "Identity residual requires num_input == num_output"
        wr = jnp.eye(C, num_output, dtype=jnp.float32)
        br = jnp.zeros((1, num_output), jnp.float32)
    if br is None:
        br = jnp.zeros((1, num_output), jnp.float32)

    # [Q | K | V] for all heads, head-blocked along lanes (one fused QKV matmul).
    w_qkv = jnp.concatenate(
        [wq.transpose(1, 0, 2).reshape(C, H * d_qk),
         wk.transpose(1, 0, 2).reshape(C, H * d_qk),
         wv.transpose(1, 0, 2).reshape(C, H * d_v)], axis=1)     # (C, H*(2dqk+dv))
    # [W_o ; W_r] stacked so the output projection + residual Linear is one matmul.
    w_or = jnp.concatenate([wo.reshape(H * d_v, num_output), wr],
                           axis=0)                               # (H*d_v + C, num_output)

    if mxu_dtype is not None:   # pre-cast MXU operands on the host (v6e/v7x perf path)
        w_qkv = w_qkv.astype(mxu_dtype)
        w_or = w_or.astype(mxu_dtype)
    return w_qkv, w_or, br


def multi_head_attention(x, w_qkv, w_or, br, gamma, beta, *, num_heads, d_qk,
                         d_v, num_output, seqs_per_step=None, approx_recip=False):
    """x: (B, N, C) f32; packed weights from pack_mha_weights().
    Returns (B, N, num_output) f32."""
    B, N, C = x.shape
    if seqs_per_step is None:
        seqs_per_step = next(bb for bb in (4, 2, 1) if B % bb == 0)
    assert B % seqs_per_step == 0, "B must be divisible by seqs_per_step"
    bb = seqs_per_step
    rows = bb * N
    inv_T = 1.0 / (num_output ** 0.5)   # module uses T = sqrt(num_output)

    kernel = functools.partial(
        _mha_kernel, seqs_per_step=bb, seq_len=N, num_heads=num_heads,
        d_qk=d_qk, d_v=d_v, inv_T=inv_T, eps=1e-5, approx_recip=approx_recip)

    # Flat (B*N, C) row slab -> lane/sublane-dense per-step input/output blocks.
    x2 = x.reshape(B * N, C)

    out = pl.pallas_call(
        kernel,
        out_shape=jax.ShapeDtypeStruct((B * N, num_output), jnp.float32),
        grid=(B // bb,),
        in_specs=[
            pl.BlockSpec((rows, C), lambda i: (i, 0)),       # this step's sequences
            pl.BlockSpec(w_qkv.shape, lambda i: (0, 0)),     # weights resident across steps
            pl.BlockSpec(w_or.shape, lambda i: (0, 0)),
            pl.BlockSpec(br.shape, lambda i: (0, 0)),
            pl.BlockSpec(gamma.shape, lambda i: (0, 0)),
            pl.BlockSpec(beta.shape, lambda i: (0, 0)),
        ],
        out_specs=pl.BlockSpec((rows, num_output), lambda i: (i, 0)),
        compiler_params=pltpu.CompilerParams(
            dimension_semantics=("parallel",),               # v7x: shard steps over 2 TCs
            vmem_limit_bytes=32 * 1024 * 1024),
    )(x2, w_qkv, w_or, br, gamma, beta)
    return out.reshape(B, N, num_output)


def mha_reference(x, wq, wk, wv, wo, wr, br, gamma, beta, *, num_output):
    """Pure-JAX reference matching the PyTorch module's forward (batched)."""
    T = num_output ** 0.5
    q = jnp.einsum('bnc,hcd->bhnd', x, wq)
    k = jnp.einsum('bnc,hcd->bhnd', x, wk)
    v = jnp.einsum('bnc,hcd->bhnd', x, wv)
    scores = jnp.einsum('bhnd,bhmd->bhnm', q, k) / T
    att = jax.nn.softmax(scores, axis=-1)
    ctx = jnp.einsum('bhnm,bhmd->bhnd', att, v)
    out = jnp.einsum('bhnd,hdo->bno', ctx, wo)
    out = out + x @ wr + br[0]
    mean = out.mean(-1, keepdims=True)
    var = ((out - mean) ** 2).mean(-1, keepdims=True)
    return (out - mean) / jnp.sqrt(var + 1e-5) * gamma[0] + beta[0]


if __name__ == "__main__":
    # Small shapes consistent with the module's forward; batched per perf review.
    B = 8             # independent sequences processed by ONE pallas_call
    N = 64            # tokens / rows per sequence
    num_input = 32
    num_output = 48   # != num_input -> residual is a Linear (with bias)
    d_qk = 16
    d_v = 16
    num_heads = 4

    key = jax.random.PRNGKey(0)
    ks = jax.random.split(key, 10)
    x = jax.random.normal(ks[0], (B, N, num_input), jnp.float32)
    wq = jax.random.normal(ks[1], (num_heads, num_input, d_qk), jnp.float32) * 0.1
    wk = jax.random.normal(ks[2], (num_heads, num_input, d_qk), jnp.float32) * 0.1
    wv = jax.random.normal(ks[3], (num_heads, num_input, d_v), jnp.float32) * 0.1
    wo = jax.random.normal(ks[4], (num_heads, d_v, num_output), jnp.float32) * 0.1
    wr = jax.random.normal(ks[5], (num_input, num_output), jnp.float32) * 0.1
    br = jax.random.normal(ks[6], (1, num_output), jnp.float32) * 0.1
    gamma = 1.0 + 0.1 * jax.random.normal(ks[7], (1, num_output), jnp.float32)
    beta = 0.1 * jax.random.normal(ks[8], (1, num_output), jnp.float32)

    ref = mha_reference(x, wq, wk, wv, wo, wr, br, gamma, beta,
                        num_output=num_output)

    # f32 MXU-operand path (parity with the fp32 PyTorch module; exact softmax divide).
    w_qkv, w_or, br_p = pack_mha_weights(wq, wk, wv, wo, wr, br,
                                         num_output=num_output)
    out = multi_head_attention(x, w_qkv, w_or, br_p, gamma, beta,
                               num_heads=num_heads, d_qk=d_qk, d_v=d_v,
                               num_output=num_output, seqs_per_step=2)
    out = jax.block_until_ready(out)
    assert out.shape == (B, N, num_output)
    err = float(jnp.max(jnp.abs(out - ref)))
    assert err < 2e-3, err

    # bf16 MXU-operand path (perf option for v6e/v7x): weights pre-cast on the
    # host, approximate EUP reciprocal in the softmax; looser tolerance.
    # NOTE: the fused [W_o; W_r] means the residual matmul also runs in bf16.
    w_qkv_bf, w_or_bf, br_p = pack_mha_weights(wq, wk, wv, wo, wr, br,
                                               num_output=num_output,
                                               mxu_dtype=jnp.bfloat16)
    out_bf16 = jax.block_until_ready(
        multi_head_attention(x, w_qkv_bf, w_or_bf, br_p, gamma, beta,
                             num_heads=num_heads, d_qk=d_qk, d_v=d_v,
                             num_output=num_output, seqs_per_step=2,
                             approx_recip=True))
    err_bf16 = float(jnp.max(jnp.abs(out_bf16 - ref)))
    assert err_bf16 < 1.5e-1, err_bf16

    print("KERNEL_OK")
</pallas_src>

<mosaic_0001>
module attributes {stable_mosaic.version = 11 : i64} {
  func.func @_mha_kernel(%arg0: i32, %arg1: memref<128x32xf32, #tpu.memory_space<vmem>>, %arg2: memref<32x192xf32, #tpu.memory_space<vmem>>, %arg3: memref<96x48xf32, #tpu.memory_space<vmem>>, %arg4: memref<1x48xf32, #tpu.memory_space<vmem>>, %arg5: memref<1x48xf32, #tpu.memory_space<vmem>>, %arg6: memref<1x48xf32, #tpu.memory_space<vmem>>, %arg7: memref<128x48xf32, #tpu.memory_space<vmem>>) attributes {dimension_semantics = [#tpu.dimension_semantics<parallel>], iteration_bounds = array<i64: 4>, scalar_prefetch = 0 : i64, scratch_operands = 0 : i64, tpu.core_type = #tpu.core_type<tc>, window_params = [{transform_indices = @transform_0, window_bounds = array<i64: 128, 32>}, {pipeline_mode = #tpu.pipeline_mode<synchronous>, transform_indices = @transform_1, window_bounds = array<i64: 32, 192>}, {pipeline_mode = #tpu.pipeline_mode<synchronous>, transform_indices = @transform_2, window_bounds = array<i64: 96, 48>}, {pipeline_mode = #tpu.pipeline_mode<synchronous>, transform_indices = @transform_3, window_bounds = array<i64: 1, 48>}, {pipeline_mode = #tpu.pipeline_mode<synchronous>, transform_indices = @transform_4, window_bounds = array<i64: 1, 48>}, {pipeline_mode = #tpu.pipeline_mode<synchronous>, transform_indices = @transform_5, window_bounds = array<i64: 1, 48>}, {transform_indices = @transform_6, window_bounds = array<i64: 128, 48>}]} {
    %c0 = arith.constant 0 : index
    %c0_0 = arith.constant 0 : index
    %0 = vector.load %arg1[%c0, %c0_0] : memref<128x32xf32, #tpu.memory_space<vmem>>, vector<128x32xf32>
    %c0_1 = arith.constant 0 : index
    %c0_2 = arith.constant 0 : index
    %1 = vector.load %arg2[%c0_1, %c0_2] : memref<32x192xf32, #tpu.memory_space<vmem>>, vector<32x192xf32>
    %cst = arith.constant dense<0.000000e+00> : vector<128x192xf32>
    %2 = tpu.matmul %0, %1, %cst {dimension_numbers = #tpu.dot_dimension_numbers<[1], [0], [0], [1], [0, 0, 1, 1], [], []>} : vector<128x32xf32>, vector<32x192xf32>, vector<128x192xf32> -> vector<128x192xf32>
    %3 = vector.extract_strided_slice %2 {offsets = [0, 0], sizes = [128, 64], strides = [1, 1]} : vector<128x192xf32> to vector<128x64xf32>
    %cst_3 = arith.constant 0.144337565 : f32
    %4 = vector.broadcast %cst_3 : f32 to vector<128x64xf32>
    %5 = arith.mulf %3, %4 : vector<128x64xf32>
    %6 = vector.extract_strided_slice %2 {offsets = [0, 64], sizes = [128, 64], strides = [1, 1]} : vector<128x192xf32> to vector<128x64xf32>
    %7 = vector.extract_strided_slice %2 {offsets = [0, 128], sizes = [128, 64], strides = [1, 1]} : vector<128x192xf32> to vector<128x64xf32>
    %8 = vector.extract_strided_slice %5 {offsets = [0, 0], sizes = [64, 16], strides = [1, 1]} : vector<128x64xf32> to vector<64x16xf32>
    %9 = vector.extract_strided_slice %6 {offsets = [0, 0], sizes = [64, 16], strides = [1, 1]} : vector<128x64xf32> to vector<64x16xf32>
    %10 = vector.extract_strided_slice %7 {offsets = [0, 0], sizes = [64, 16], strides = [1, 1]} : vector<128x64xf32> to vector<64x16xf32>
    %cst_4 = arith.constant dense<0.000000e+00> : vector<64x64xf32>
    %11 = tpu.matmul %8, %9, %cst_4 {dimension_numbers = #tpu.dot_dimension_numbers<[1], [1], [0], [0], [0, 0, 1, 0], [], []>} : vector<64x16xf32>, vector<64x16xf32>, vector<64x64xf32> -> vector<64x64xf32>
    %cst_5 = arith.constant dense<0xFF800000> : vector<64xf32>
    %12 = vector.multi_reduction <maximumf>, %11, %cst_5 [1] : vector<64x64xf32> to vector<64xf32>
    %13 = vector.shape_cast %12 : vector<64xf32> to vector<64x1xf32>
    %14 = vector.broadcast %13 : vector<64x1xf32> to vector<64x64xf32>
    %15 = arith.subf %11, %14 : vector<64x64xf32>
    %16 = math.exp %15 : vector<64x64xf32>
    %cst_6 = arith.constant dense<0.000000e+00> : vector<64xf32>
    %17 = vector.multi_reduction <add>, %16, %cst_6 [1] : vector<64x64xf32> to vector<64xf32>
    %18 = vector.shape_cast %17 : vector<64xf32> to vector<64x1xf32>
    %19 = tpu.reciprocal %18 : vector<64x1xf32> -> vector<64x1xf32>
    %20 = vector.broadcast %19 : vector<64x1xf32> to vector<64x64xf32>
    %21 = arith.mulf %16, %20 : vector<64x64xf32>
    %cst_7 = arith.constant dense<0.000000e+00> : vector<64x16xf32>
    %22 = tpu.matmul %21, %10, %cst_7 {dimension_numbers = #tpu.dot_dimension_numbers<[1], [0], [0], [1], [0, 0, 1, 1], [], []>} : vector<64x64xf32>, vector<64x16xf32>, vector<64x16xf32> -> vector<64x16xf32>
    %23 = vector.extract_strided_slice %5 {offsets = [0, 16], sizes = [64, 16], strides = [1, 1]} : vector<128x64xf32> to vector<64x16xf32>
    %24 = vector.extract_strided_slice %6 {offsets = [0, 16], sizes = [64, 16], strides = [1, 1]} : vector<128x64xf32> to vector<64x16xf32>
    %25 = vector.extract_strided_slice %7 {offsets = [0, 16], sizes = [64, 16], strides = [1, 1]} : vector<128x64xf32> to vector<64x16xf32>
    %cst_8 = arith.constant dense<0.000000e+00> : vector<64x64xf32>
    %26 = tpu.matmul %23, %24, %cst_8 {dimension_numbers = #tpu.dot_dimension_numbers<[1], [1], [0], [0], [0, 0, 1, 0], [], []>} : vector<64x16xf32>, vector<64x16xf32>, vector<64x64xf32> -> vector<64x64xf32>
    %cst_9 = arith.constant dense<0xFF800000> : vector<64xf32>
    %27 = vector.multi_reduction <maximumf>, %26, %cst_9 [1] : vector<64x64xf32> to vector<64xf32>
    %28 = vector.shape_cast %27 : vector<64xf32> to vector<64x1xf32>
    %29 = vector.broadcast %28 : vector<64x1xf32> to vector<64x64xf32>
    %30 = arith.subf %26, %29 : vector<64x64xf32>
    %31 = math.exp %30 : vector<64x64xf32>
    %cst_10 = arith.constant dense<0.000000e+00> : vector<64xf32>
    %32 = vector.multi_reduction <add>, %31, %cst_10 [1] : vector<64x64xf32> to vector<64xf32>
    %33 = vector.shape_cast %32 : vector<64xf32> to vector<64x1xf32>
    %34 = tpu.reciprocal %33 : vector<64x1xf32> -> vector<64x1xf32>
    %35 = vector.broadcast %34 : vector<64x1xf32> to vector<64x64xf32>
    %36 = arith.mulf %31, %35 : vector<64x64xf32>
    %cst_11 = arith.constant dense<0.000000e+00> : vector<64x16xf32>
    %37 = tpu.matmul %36, %25, %cst_11 {dimension_numbers = #tpu.dot_dimension_numbers<[1], [0], [0], [1], [0, 0, 1, 1], [], []>} : vector<64x64xf32>, vector<64x16xf32>, vector<64x16xf32> -> vector<64x16xf32>
    %38 = vector.extract_strided_slice %5 {offsets = [0, 32], sizes = [64, 16], strides = [1, 1]} : vector<128x64xf32> to vector<64x16xf32>
    %39 = vector.extract_strided_slice %6 {offsets = [0, 32], sizes = [64, 16], strides = [1, 1]} : vector<128x64xf32> to vector<64x16xf32>
    %40 = vector.extract_strided_slice %7 {offsets = [0, 32], sizes = [64, 16], strides = [1, 1]} : vector<128x64xf32> to vector<64x16xf32>
    %cst_12 = arith.constant dense<0.000000e+00> : vector<64x64xf32>
    %41 = tpu.matmul %38, %39, %cst_12 {dimension_numbers = #tpu.dot_dimension_numbers<[1], [1], [0], [0], [0, 0, 1, 0], [], []>} : vector<64x16xf32>, vector<64x16xf32>, vector<64x64xf32> -> vector<64x64xf32>
    %cst_13 = arith.constant dense<0xFF800000> : vector<64xf32>
    %42 = vector.multi_reduction <maximumf>, %41, %cst_13 [1] : vector<64x64xf32> to vector<64xf32>
    %43 = vector.shape_cast %42 : vector<64xf32> to vector<64x1xf32>
    %44 = vector.broadcast %43 : vector<64x1xf32> to vector<64x64xf32>
    %45 = arith.subf %41, %44 : vector<64x64xf32>
    %46 = math.exp %45 : vector<64x64xf32>
    %cst_14 = arith.constant dense<0.000000e+00> : vector<64xf32>
    %47 = vector.multi_reduction <add>, %46, %cst_14 [1] : vector<64x64xf32> to vector<64xf32>
    %48 = vector.shape_cast %47 : vector<64xf32> to vector<64x1xf32>
    %49 = tpu.reciprocal %48 : vector<64x1xf32> -> vector<64x1xf32>
    %50 = vector.broadcast %49 : vector<64x1xf32> to vector<64x64xf32>
    %51 = arith.mulf %46, %50 : vector<64x64xf32>
    %cst_15 = arith.constant dense<0.000000e+00> : vector<64x16xf32>
    %52 = tpu.matmul %51, %40, %cst_15 {dimension_numbers = #tpu.dot_dimension_numbers<[1], [0], [0], [1], [0, 0, 1, 1], [], []>} : vector<64x64xf32>, vector<64x16xf32>, vector<64x16xf32> -> vector<64x16xf32>
    %53 = vector.extract_strided_slice %5 {offsets = [0, 48], sizes = [64, 16], strides = [1, 1]} : vector<128x64xf32> to vector<64x16xf32>
    %54 = vector.extract_strided_slice %6 {offsets = [0, 48], sizes = [64, 16], strides = [1, 1]} : vector<128x64xf32> to vector<64x16xf32>
    %55 = vector.extract_strided_slice %7 {offsets = [0, 48], sizes = [64, 16], strides = [1, 1]} : vector<128x64xf32> to vector<64x16xf32>
    %cst_16 = arith.constant dense<0.000000e+00> : vector<64x64xf32>
    %56 = tpu.matmul %53, %54, %cst_16 {dimension_numbers = #tpu.dot_dimension_numbers<[1], [1], [0], [0], [0, 0, 1, 0], [], []>} : vector<64x16xf32>, vector<64x16xf32>, vector<64x64xf32> -> vector<64x64xf32>
    %cst_17 = arith.constant dense<0xFF800000> : vector<64xf32>
    %57 = vector.multi_reduction <maximumf>, %56, %cst_17 [1] : vector<64x64xf32> to vector<64xf32>
    %58 = vector.shape_cast %57 : vector<64xf32> to vector<64x1xf32>
    %59 = vector.broadcast %58 : vector<64x1xf32> to vector<64x64xf32>
    %60 = arith.subf %56, %59 : vector<64x64xf32>
    %61 = math.exp %60 : vector<64x64xf32>
    %cst_18 = arith.constant dense<0.000000e+00> : vector<64xf32>
    %62 = vector.multi_reduction <add>, %61, %cst_18 [1] : vector<64x64xf32> to vector<64xf32>
    %63 = vector.shape_cast %62 : vector<64xf32> to vector<64x1xf32>
    %64 = tpu.reciprocal %63 : vector<64x1xf32> -> vector<64x1xf32>
    %65 = vector.broadcast %64 : vector<64x1xf32> to vector<64x64xf32>
    %66 = arith.mulf %61, %65 : vector<64x64xf32>
    %cst_19 = arith.constant dense<0.000000e+00> : vector<64x16xf32>
    %67 = tpu.matmul %66, %55, %cst_19 {dimension_numbers = #tpu.dot_dimension_numbers<[1], [0], [0], [1], [0, 0, 1, 1], [], []>} : vector<64x64xf32>, vector<64x16xf32>, vector<64x16xf32> -> vector<64x16xf32>
    %68 = tpu.concatenate %22, %37, %52, %67 in 1 : vector<64x16xf32>, vector<64x16xf32>, vector<64x16xf32>, vector<64x16xf32> -> vector<64x64xf32>
    %69 = vector.extract_strided_slice %5 {offsets = [64, 0], sizes = [64, 16], strides = [1, 1]} : vector<128x64xf32> to vector<64x16xf32>
    %70 = vector.extract_strided_slice %6 {offsets = [64, 0], sizes = [64, 16], strides = [1, 1]} : vector<128x64xf32> to vector<64x16xf32>
    %71 = vector.extract_strided_slice %7 {offsets = [64, 0], sizes = [64, 16], strides = [1, 1]} : vector<128x64xf32> to vector<64x16xf32>
    %cst_20 = arith.constant dense<0.000000e+00> : vector<64x64xf32>
    %72 = tpu.matmul %69, %70, %cst_20 {dimension_numbers = #tpu.dot_dimension_numbers<[1], [1], [0], [0], [0, 0, 1, 0], [], []>} : vector<64x16xf32>, vector<64x16xf32>, vector<64x64xf32> -> vector<64x64xf32>
    %cst_21 = arith.constant dense<0xFF800000> : vector<64xf32>
    %73 = vector.multi_reduction <maximumf>, %72, %cst_21 [1] : vector<64x64xf32> to vector<64xf32>
    %74 = vector.shape_cast %73 : vector<64xf32> to vector<64x1xf32>
    %75 = vector.broadcast %74 : vector<64x1xf32> to vector<64x64xf32>
    %76 = arith.subf %72, %75 : vector<64x64xf32>
    %77 = math.exp %76 : vector<64x64xf32>
    %cst_22 = arith.constant dense<0.000000e+00> : vector<64xf32>
    %78 = vector.multi_reduction <add>, %77, %cst_22 [1] : vector<64x64xf32> to vector<64xf32>
    %79 = vector.shape_cast %78 : vector<64xf32> to vector<64x1xf32>
    %80 = tpu.reciprocal %79 : vector<64x1xf32> -> vector<64x1xf32>
    %81 = vector.broadcast %80 : vector<64x1xf32> to vector<64x64xf32>
    %82 = arith.mulf %77, %81 : vector<64x64xf32>
    %cst_23 = arith.constant dense<0.000000e+00> : vector<64x16xf32>
    %83 = tpu.matmul %82, %71, %cst_23 {dimension_numbers = #tpu.dot_dimension_numbers<[1], [0], [0], [1], [0, 0, 1, 1], [], []>} : vector<64x64xf32>, vector<64x16xf32>, vector<64x16xf32> -> vector<64x16xf32>
    %84 = vector.extract_strided_slice %5 {offsets = [64, 16], sizes = [64, 16], strides = [1, 1]} : vector<128x64xf32> to vector<64x16xf32>
    %85 = vector.extract_strided_slice %6 {offsets = [64, 16], sizes = [64, 16], strides = [1, 1]} : vector<128x64xf32> to vector<64x16xf32>
    %86 = vector.extract_strided_slice %7 {offsets = [64, 16], sizes = [64, 16], strides = [1, 1]} : vector<128x64xf32> to vector<64x16xf32>
    %cst_24 = arith.constant dense<0.000000e+00> : vector<64x64xf32>
    %87 = tpu.matmul %84, %85, %cst_24 {dimension_numbers = #tpu.dot_dimension_numbers<[1], [1], [0], [0], [0, 0, 1, 0], [], []>} : vector<64x16xf32>, vector<64x16xf32>, vector<64x64xf32> -> vector<64x64xf32>
    %cst_25 = arith.constant dense<0xFF800000> : vector<64xf32>
    %88 = vector.multi_reduction <maximumf>, %87, %cst_25 [1] : vector<64x64xf32> to vector<64xf32>
    %89 = vector.shape_cast %88 : vector<64xf32> to vector<64x1xf32>
    %90 = vector.broadcast %89 : vector<64x1xf32> to vector<64x64xf32>
    %91 = arith.subf %87, %90 : vector<64x64xf32>
    %92 = math.exp %91 : vector<64x64xf32>
    %cst_26 = arith.constant dense<0.000000e+00> : vector<64xf32>
    %93 = vector.multi_reduction <add>, %92, %cst_26 [1] : vector<64x64xf32> to vector<64xf32>
    %94 = vector.shape_cast %93 : vector<64xf32> to vector<64x1xf32>
    %95 = tpu.reciprocal %94 : vector<64x1xf32> -> vector<64x1xf32>
    %96 = vector.broadcast %95 : vector<64x1xf32> to vector<64x64xf32>
    %97 = arith.mulf %92, %96 : vector<64x64xf32>
    %cst_27 = arith.constant dense<0.000000e+00> : vector<64x16xf32>
    %98 = tpu.matmul %97, %86, %cst_27 {dimension_numbers = #tpu.dot_dimension_numbers<[1], [0], [0], [1], [0, 0, 1, 1], [], []>} : vector<64x64xf32>, vector<64x16xf32>, vector<64x16xf32> -> vector<64x16xf32>
    %99 = vector.extract_strided_slice %5 {offsets = [64, 32], sizes = [64, 16], strides = [1, 1]} : vector<128x64xf32> to vector<64x16xf32>
    %100 = vector.extract_strided_slice %6 {offsets = [64, 32], sizes = [64, 16], strides = [1, 1]} : vector<128x64xf32> to vector<64x16xf32>
    %101 = vector.extract_strided_slice %7 {offsets = [64, 32], sizes = [64, 16], strides = [1, 1]} : vector<128x64xf32> to vector<64x16xf32>
    %cst_28 = arith.constant dense<0.000000e+00> : vector<64x64xf32>
    %102 = tpu.matmul %99, %100, %cst_28 {dimension_numbers = #tpu.dot_dimension_numbers<[1], [1], [0], [0], [0, 0, 1, 0], [], []>} : vector<64x16xf32>, vector<64x16xf32>, vector<64x64xf32> -> vector<64x64xf32>
    %cst_29 = arith.constant dense<0xFF800000> : vector<64xf32>
    %103 = vector.multi_reduction <maximumf>, %102, %cst_29 [1] : vector<64x64xf32> to vector<64xf32>
    %104 = vector.shape_cast %103 : vector<64xf32> to vector<64x1xf32>
    %105 = vector.broadcast %104 : vector<64x1xf32> to vector<64x64xf32>
    %106 = arith.subf %102, %105 : vector<64x64xf32>
    %107 = math.exp %106 : vector<64x64xf32>
    %cst_30 = arith.constant dense<0.000000e+00> : vector<64xf32>
    %108 = vector.multi_reduction <add>, %107, %cst_30 [1] : vector<64x64xf32> to vector<64xf32>
    %109 = vector.shape_cast %108 : vector<64xf32> to vector<64x1xf32>
    %110 = tpu.reciprocal %109 : vector<64x1xf32> -> vector<64x1xf32>
    %111 = vector.broadcast %110 : vector<64x1xf32> to vector<64x64xf32>
    %112 = arith.mulf %107, %111 : vector<64x64xf32>
    %cst_31 = arith.constant dense<0.000000e+00> : vector<64x16xf32>
    %113 = tpu.matmul %112, %101, %cst_31 {dimension_numbers = #tpu.dot_dimension_numbers<[1], [0], [0], [1], [0, 0, 1, 1], [], []>} : vector<64x64xf32>, vector<64x16xf32>, vector<64x16xf32> -> vector<64x16xf32>
    %114 = vector.extract_strided_slice %5 {offsets = [64, 48], sizes = [64, 16], strides = [1, 1]} : vector<128x64xf32> to vector<64x16xf32>
    %115 = vector.extract_strided_slice %6 {offsets = [64, 48], sizes = [64, 16], strides = [1, 1]} : vector<128x64xf32> to vector<64x16xf32>
    %116 = vector.extract_strided_slice %7 {offsets = [64, 48], sizes = [64, 16], strides = [1, 1]} : vector<128x64xf32> to vector<64x16xf32>
    %cst_32 = arith.constant dense<0.000000e+00> : vector<64x64xf32>
    %117 = tpu.matmul %114, %115, %cst_32 {dimension_numbers = #tpu.dot_dimension_numbers<[1], [1], [0], [0], [0, 0, 1, 0], [], []>} : vector<64x16xf32>, vector<64x16xf32>, vector<64x64xf32> -> vector<64x64xf32>
    %cst_33 = arith.constant dense<0xFF800000> : vector<64xf32>
    %118 = vector.multi_reduction <maximumf>, %117, %cst_33 [1] : vector<64x64xf32> to vector<64xf32>
    %119 = vector.shape_cast %118 : vector<64xf32> to vector<64x1xf32>
    %120 = vector.broadcast %119 : vector<64x1xf32> to vector<64x64xf32>
    %121 = arith.subf %117, %120 : vector<64x64xf32>
    %122 = math.exp %121 : vector<64x64xf32>
    %cst_34 = arith.constant dense<0.000000e+00> : vector<64xf32>
    %123 = vector.multi_reduction <add>, %122, %cst_34 [1] : vector<64x64xf32> to vector<64xf32>
    %124 = vector.shape_cast %123 : vector<64xf32> to vector<64x1xf32>
    %125 = tpu.reciprocal %124 : vector<64x1xf32> -> vector<64x1xf32>
    %126 = vector.broadcast %125 : vector<64x1xf32> to vector<64x64xf32>
    %127 = arith.mulf %122, %126 : vector<64x64xf32>
    %cst_35 = arith.constant dense<0.000000e+00> : vector<64x16xf32>
    %128 = tpu.matmul %127, %116, %cst_35 {dimension_numbers = #tpu.dot_dimension_numbers<[1], [0], [0], [1], [0, 0, 1, 1], [], []>} : vector<64x64xf32>, vector<64x16xf32>, vector<64x16xf32> -> vector<64x16xf32>
    %129 = tpu.concatenate %83, %98, %113, %128 in 1 : vector<64x16xf32>, vector<64x16xf32>, vector<64x16xf32>, vector<64x16xf32> -> vector<64x64xf32>
    %130 = tpu.concatenate %68, %129 in 0 : vector<64x64xf32>, vector<64x64xf32> -> vector<128x64xf32>
    %131 = tpu.concatenate %130, %0 in 1 : vector<128x64xf32>, vector<128x32xf32> -> vector<128x96xf32>
    %c0_36 = arith.constant 0 : index
    %c0_37 = arith.constant 0 : index
    %132 = vector.load %arg3[%c0_36, %c0_37] : memref<96x48xf32, #tpu.memory_space<vmem>>, vector<96x48xf32>
    %cst_38 = arith.constant dense<0.000000e+00> : vector<128x48xf32>
    %133 = tpu.matmul %131, %132, %cst_38 {dimension_numbers = #tpu.dot_dimension_numbers<[1], [0], [0], [1], [0, 0, 1, 1], [], []>} : vector<128x96xf32>, vector<96x48xf32>, vector<128x48xf32> -> vector<128x48xf32>
    %c0_39 = arith.constant 0 : index
    %c0_40 = arith.constant 0 : index
    %134 = vector.load %arg4[%c0_39, %c0_40] : memref<1x48xf32, #tpu.memory_space<vmem>>, vector<1x48xf32>
    %135 = vector.broadcast %134 : vector<1x48xf32> to vector<128x48xf32>
    %136 = arith.addf %133, %135 : vector<128x48xf32>
    %cst_41 = arith.constant dense<0.000000e+00> : vector<128xf32>
    %137 = vector.multi_reduction <add>, %136, %cst_41 [1] : vector<128x48xf32> to vector<128xf32>
    %138 = vector.shape_cast %137 : vector<128xf32> to vector<128x1xf32>
    %cst_42 = arith.constant 4.800000e+01 : f32
    %139 = vector.broadcast %cst_42 : f32 to vector<128x1xf32>
    %140 = arith.divf %138, %139 : vector<128x1xf32>
    %141 = vector.broadcast %140 : vector<128x1xf32> to vector<128x48xf32>
    %142 = arith.subf %136, %141 : vector<128x48xf32>
    %143 = arith.mulf %142, %142 : vector<128x48xf32>
    %cst_43 = arith.constant dense<0.000000e+00> : vector<128xf32>
    %144 = vector.multi_reduction <add>, %143, %cst_43 [1] : vector<128x48xf32> to vector<128xf32>
    %145 = vector.shape_cast %144 : vector<128xf32> to vector<128x1xf32>
    %cst_44 = arith.constant 4.800000e+01 : f32
    %146 = vector.broadcast %cst_44 : f32 to vector<128x1xf32>
    %147 = arith.divf %145, %146 : vector<128x1xf32>
    %148 = vector.broadcast %140 : vector<128x1xf32> to vector<128x48xf32>
    %149 = arith.subf %136, %148 : vector<128x48xf32>
    %cst_45 = arith.constant 9.99999974E-6 : f32
    %150 = vector.broadcast %cst_45 : f32 to vector<128x1xf32>
    %151 = arith.addf %147, %150 : vector<128x1xf32>
    %152 = math.rsqrt %151 : vector<128x1xf32>
    %153 = vector.broadcast %152 : vector<128x1xf32> to vector<128x48xf32>
    %154 = arith.mulf %149, %153 : vector<128x48xf32>
    %c0_46 = arith.constant 0 : index
    %c0_47 = arith.constant 0 : index
    %155 = vector.load %arg5[%c0_46, %c0_47] : memref<1x48xf32, #tpu.memory_space<vmem>>, vector<1x48xf32>
    %156 = vector.broadcast %155 : vector<1x48xf32> to vector<128x48xf32>
    %157 = arith.mulf %154, %156 : vector<128x48xf32>
    %c0_48 = arith.constant 0 : index
    %c0_49 = arith.constant 0 : index
    %158 = vector.load %arg6[%c0_48, %c0_49] : memref<1x48xf32, #tpu.memory_space<vmem>>, vector<1x48xf32>
    %159 = vector.broadcast %158 : vector<1x48xf32> to vector<128x48xf32>
    %160 = arith.addf %157, %159 : vector<128x48xf32>
    %c0_50 = arith.constant 0 : index
    %c0_51 = arith.constant 0 : index
    %161 = vector.load %arg7[%c0_50, %c0_51] : memref<128x48xf32, #tpu.memory_space<vmem>>, vector<128x48xf32>
    tpu.vector_store %arg7[%c0_50, %c0_51], %160 {strides = array<i32>} : memref<128x48xf32, #tpu.memory_space<vmem>>, vector<128x48xf32>,
    return
  }
  func.func @transform_0(%arg0: i32) -> (i32, i32) {
    %c0_i32 = arith.constant 0 : i32
    %c0_i32_0 = arith.constant 0 : i32
    return %arg0, %c0_i32 : i32, i32
  }
  func.func @transform_1(%arg0: i32) -> (i32, i32) {
    %c0_i32 = arith.constant 0 : i32
    %c0_i32_0 = arith.constant 0 : i32
    %c0_i32_1 = arith.constant 0 : i32
    return %c0_i32, %c0_i32_0 : i32, i32
  }
  func.func @transform_2(%arg0: i32) -> (i32, i32) {
    %c0_i32 = arith.constant 0 : i32
    %c0_i32_0 = arith.constant 0 : i32
    %c0_i32_1 = arith.constant 0 : i32
    return %c0_i32, %c0_i32_0 : i32, i32
  }
  func.func @transform_3(%arg0: i32) -> (i32, i32) {
    %c0_i32 = arith.constant 0 : i32
    %c0_i32_0 = arith.constant 0 : i32
    %c0_i32_1 = arith.constant 0 : i32
    return %c0_i32, %c0_i32_0 : i32, i32
  }
  func.func @transform_4(%arg0: i32) -> (i32, i32) {
    %c0_i32 = arith.constant 0 : i32
    %c0_i32_0 = arith.constant 0 : i32
    %c0_i32_1 = arith.constant 0 : i32
    return %c0_i32, %c0_i32_0 : i32, i32
  }
  func.func @transform_5(%arg0: i32) -> (i32, i32) {
    %c0_i32 = arith.constant 0 : i32
    %c0_i32_0 = arith.constant 0 : i32
    %c0_i32_1 = arith.constant 0 : i32
    return %c0_i32, %c0_i32_0 : i32, i32
  }
  func.func @transform_6(%arg0: i32) -> (i32, i32) {
    %c0_i32 = arith.constant 0 : i32
    %c0_i32_0 = arith.constant 0 : i32
    return %arg0, %c0_i32 : i32, i32
  }
}

</mosaic_0001>

<llo_original>
// kernel: tpu_custom_call.1
$region0: #{tpu_custom_call.1}
  #allocation0 [shape = 'u32[]', space=smem, size = 0x4, offset = 0x4, fixed_abs, tag = 'smem constant byte address 0x4 - core index']
  #allocation1 [shape = 'u32[144,128]{1,0:T(1,128)}', space=vmem, size = 0x12000, scoped, tag = 'internal scratch']
  %s0 = inlined_call_operand.vmem [shape: f32[512,32], index: 0, kind: input, shape index: {}]
  %s1 = inlined_call_operand.vmem [shape: f32[32,192], index: 1, kind: input, shape index: {}]
  %s2 = inlined_call_operand.vmem [shape: f32[96,48], index: 2, kind: input, shape index: {}]
  %s3 = inlined_call_operand.vmem [shape: f32[1,48], index: 3, kind: input, shape index: {}]
  %s4 = inlined_call_operand.vmem [shape: f32[1,48], index: 4, kind: input, shape index: {}]
  %s5 = inlined_call_operand.vmem [shape: f32[1,48], index: 5, kind: input, shape index: {}]
  %s6 = inlined_call_operand.vmem [shape: f32[512,48], index: 6, kind: output, shape index: {}]
  %s7 = sld [smem:[#allocation0]]
  $region57: #{tpu_custom_call.1} parent=0
    _
  %s9 = ssub.s32 1, %s7
  %s10 = scalar_select 0, %s9, %s7
  loop: start=0, step=1, limit=6
  $region2: #{tpu_custom_call.1} parent=0 // loop_pre_header
    _
  $region3: #{tpu_custom_call.1} parent=0 // loop_header
    %s12 = sphi 0, %s16
    %p13 = scmp.ge.s32.totalorder %s12, 6
    %s22 = sphi 0, %s24
    %s25 = sphi 0, %s22
    %s26 = sphi 0, %s25
    %s42 = sphi 0, %s26
    %s46 = sphi 0, %s46
    %s48 = sphi 0, %s46
    %s49 = sphi 0, %s48
    %s63 = sphi 0, %s49
    %s67 = sphi 0, %s67
    %s69 = sphi 0, %s67
    %s70 = sphi 0, %s69
    %s84 = sphi 0, %s70
    %s88 = sphi 0, %s88
    %s90 = sphi 0, %s88
    %s91 = sphi 0, %s90
    %s105 = sphi 0, %s91
    %s109 = sphi 0, %s109
    %s111 = sphi 0, %s109
    %s112 = sphi 0, %s111
    %s126 = sphi 0, %s112
    %s130 = sphi 0, %s130
    %s132 = sphi 0, %s130
    %s133 = sphi 0, %s132
    %s147 = sphi 0, %s133
    %s153 = sphi 0, %s155
    %s156 = sphi 0, %s153
    %s157 = sphi 0, %s156
    %s173 = sphi 0, %s157
  $region4: #{tpu_custom_call.1} parent=0 // loop_header_branch
    %15 = sbr.rel (%p13) target = $region8
  $region5: #{tpu_custom_call.1} parent=0 // loop_body
    %s17 = ssub.s32 %s12, 1
    %s18 = ssub.s32 %s12, 2
    %s19 = sadd.s32 %s12, 1
    %s20 = ssub.s32 %s12, %s19
    %p21 = scmp.eq.s32.totalorder %s20, 0
    %s23 = sadd.s32 %s22, 1
    %s24 = scalar_select %p21, %s22, %s23
    %p27 = pneg %p21
    %p28 = scmp.eq.s32.totalorder %s12, 3
    %p29 = por %p27, %p28
    %p30 = scmp.ne.s32.totalorder %s22, %s25
    %p31 = scmp.eq.s32.totalorder %s12, 0
    %p32 = por %p30, %p31
    %p33 = scmp.ne.s32.totalorder %s22, %s25
    %p34 = scmp.eq.s32.totalorder %s17, 3
    %p35 = por %p33, %p34
    %p36 = scmp.ne.s32.totalorder %s25, %s26
    %p37 = scmp.eq.s32.totalorder %s17, 0
    %p38 = por %p36, %p37
    %p39 = scmp.ne.s32.totalorder %s25, %s26
    %p40 = scmp.eq.s32.totalorder %s18, 3
    %p41 = por %p39, %p40
    %p43 = scmp.ne.s32.totalorder %s26, %s42
    %p44 = scmp.eq.s32.totalorder %s18, 0
    %p45 = por %p43, %p44
    %s47 = sadd.s32 %s46, 1
    %p50 = scmp.eq.s32.totalorder %s12, 3
    %p51 = scmp.ne.s32.totalorder %s46, %s48
    %p52 = scmp.eq.s32.totalorder %s12, 0
    %p53 = por %p51, %p52
    %p54 = scmp.ne.s32.totalorder %s46, %s48
    %p55 = scmp.eq.s32.totalorder %s17, 3
    %p56 = por %p54, %p55
    %p57 = scmp.ne.s32.totalorder %s48, %s49
    %p58 = scmp.eq.s32.totalorder %s17, 0
    %p59 = por %p57, %p58
    %p60 = scmp.ne.s32.totalorder %s48, %s49
    %p61 = scmp.eq.s32.totalorder %s18, 3
    %p62 = por %p60, %p61
    %p64 = scmp.ne.s32.totalorder %s49, %s63
    %p65 = scmp.eq.s32.totalorder %s18, 0
    %p66 = por %p64, %p65
    %s68 = sadd.s32 %s67, 1
    %p71 = scmp.eq.s32.totalorder %s12, 3
    %p72 = scmp.ne.s32.totalorder %s67, %s69
    %p73 = scmp.eq.s32.totalorder %s12, 0
    %p74 = por %p72, %p73
    %p75 = scmp.ne.s32.totalorder %s67, %s69
    %p76 = scmp.eq.s32.totalorder %s17, 3
    %p77 = por %p75, %p76
    %p78 = scmp.ne.s32.totalorder %s69, %s70
    %p79 = scmp.eq.s32.totalorder %s17, 0
    %p80 = por %p78, %p79
    %p81 = scmp.ne.s32.totalorder %s69, %s70
    %p82 = scmp.eq.s32.totalorder %s18, 3
    %p83 = por %p81, %p82
    %p85 = scmp.ne.s32.totalorder %s70, %s84
    %p86 = scmp.eq.s32.totalorder %s18, 0
    %p87 = por %p85, %p86
    %s89 = sadd.s32 %s88, 1
    %p92 = scmp.eq.s32.totalorder %s12, 3
    %p93 = scmp.ne.s32.totalorder %s88, %s90
    %p94 = scmp.eq.s32.totalorder %s12, 0
    %p95 = por %p93, %p94
    %p96 = scmp.ne.s32.totalorder %s88, %s90
    %p97 = scmp.eq.s32.totalorder %s17, 3
    %p98 = por %p96, %p97
    %p99 = scmp.ne.s32.totalorder %s90, %s91
    %p100 = scmp.eq.s32.totalorder %s17, 0
    %p101 = por %p99, %p100
    %p102 = scmp.ne.s32.totalorder %s90, %s91
    %p103 = scmp.eq.s32.totalorder %s18, 3
    %p104 = por %p102, %p103
    %p106 = scmp.ne.s32.totalorder %s91, %s105
    %p107 = scmp.eq.s32.totalorder %s18, 0
    %p108 = por %p106, %p107
    %s110 = sadd.s32 %s109, 1
    %p113 = scmp.eq.s32.totalorder %s12, 3
    %p114 = scmp.ne.s32.totalorder %s109, %s111
    %p115 = scmp.eq.s32.totalorder %s12, 0
    %p116 = por %p114, %p115
    %p117 = scmp.ne.s32.totalorder %s109, %s111
    %p118 = scmp.eq.s32.totalorder %s17, 3
    %p119 = por %p117, %p118
    %p120 = scmp.ne.s32.totalorder %s111, %s112
    %p121 = scmp.eq.s32.totalorder %s17, 0
    %p122 = por %p120, %p121
    %p123 = scmp.ne.s32.totalorder %s111, %s112
    %p124 = scmp.eq.s32.totalorder %s18, 3
    %p125 = por %p123, %p124
    %p127 = scmp.ne.s32.totalorder %s112, %s126
    %p128 = scmp.eq.s32.totalorder %s18, 0
    %p129 = por %p127, %p128
    %s131 = sadd.s32 %s130, 1
    %p134 = scmp.eq.s32.totalorder %s12, 3
    %p135 = scmp.ne.s32.totalorder %s130, %s132
    %p136 = scmp.eq.s32.totalorder %s12, 0
    %p137 = por %p135, %p136
    %p138 = scmp.ne.s32.totalorder %s130, %s132
    %p139 = scmp.eq.s32.totalorder %s17, 3
    %p140 = por %p138, %p139
    %p141 = scmp.ne.s32.totalorder %s132, %s133
    %p142 = scmp.eq.s32.totalorder %s17, 0
    %p143 = por %p141, %p142
    %p144 = scmp.ne.s32.totalorder %s132, %s133
    %p145 = scmp.eq.s32.totalorder %s18, 3
    %p146 = por %p144, %p145
    %p148 = scmp.ne.s32.totalorder %s133, %s147
    %p149 = scmp.eq.s32.totalorder %s18, 0
    %p150 = por %p148, %p149
    %s151 = ssub.s32 %s12, %s19
    %p152 = scmp.eq.s32.totalorder %s151, 0
    %s154 = sadd.s32 %s153, 1
    %s155 = scalar_select %p152, %s153, %s154
    %p158 = pneg %p152
    %p159 = scmp.eq.s32.totalorder %s12, 3
    %p160 = por %p158, %p159
    %p161 = scmp.ne.s32.totalorder %s153, %s156
    %p162 = scmp.eq.s32.totalorder %s12, 0
    %p163 = por %p161, %p162
    %p164 = scmp.ne.s32.totalorder %s153, %s156
    %p165 = scmp.eq.s32.totalorder %s17, 3
    %p166 = por %p164, %p165
    %p167 = scmp.ne.s32.totalorder %s156, %s157
    %p168 = scmp.eq.s32.totalorder %s17, 0
    %p169 = por %p167, %p168
    %p170 = scmp.ne.s32.totalorder %s156, %s157
    %p171 = scmp.eq.s32.totalorder %s18, 3
    %p172 = por %p170, %p171
    %p174 = scmp.ne.s32.totalorder %s157, %s173
    %p175 = scmp.eq.s32.totalorder %s18, 0
    %p176 = por %p174, %p175
    %p177 = scmp.le.s32.totalorder 1, %s12
    %p178 = scmp.lt.s32.totalorder %s12, 5
    %p179 = pnand %p177, %p178
    %p180 = pneg %p179
    // Predicated region
    $region9: #{tpu_custom_call.1} parent=5 // pred_check
      _
    $region10: #{tpu_custom_call.1} parent=5 // pred_check_branch
      %182 = sbr.rel (%p179) target = $region12
    $region11: #{tpu_custom_call.1} parent=5 // pred_region
      %s183 = ssub.s32 %s12, 1
      // Predicated region
      $region13: #{tpu_custom_call.1} parent=11 // pred_check
        %p184 = pneg %p59
      $region14: #{tpu_custom_call.1} parent=11 // pred_check_branch
        %186 = sbr.rel (%p184) target = $region16
      $region15: #{tpu_custom_call.1} parent=11 // pred_region
        _
      $region16: #{tpu_custom_call.1} parent=11 // pred_fallthru
        _
      // Predicated region
      $region17: #{tpu_custom_call.1} parent=11 // pred_check
        %p187 = pneg %p80
      $region18: #{tpu_custom_call.1} parent=11 // pred_check_branch
        %189 = sbr.rel (%p187) target = $region20
      $region19: #{tpu_custom_call.1} parent=11 // pred_region
        _
      $region20: #{tpu_custom_call.1} parent=11 // pred_fallthru
        _
      // Predicated region
      $region21: #{tpu_custom_call.1} parent=11 // pred_check
        %p190 = pneg %p101
      $region22: #{tpu_custom_call.1} parent=11 // pred_check_branch
        %192 = sbr.rel (%p190) target = $region24
      $region23: #{tpu_custom_call.1} parent=11 // pred_region
        _
      $region24: #{tpu_custom_call.1} parent=11 // pred_fallthru
        _
      // Predicated region
      $region25: #{tpu_custom_call.1} parent=11 // pred_check
        %p193 = pneg %p122
      $region26: #{tpu_custom_call.1} parent=11 // pred_check_branch
        %195 = sbr.rel (%p193) target = $region28
      $region27: #{tpu_custom_call.1} parent=11 // pred_region
        _
      $region28: #{tpu_custom_call.1} parent=11 // pred_fallthru
        _
      // Predicated region
      $region29: #{tpu_custom_call.1} parent=11 // pred_check
        %p196 = pneg %p143
      $region30: #{tpu_custom_call.1} parent=11 // pred_check_branch
        %198 = sbr.rel (%p196) target = $region32
      $region31: #{tpu_custom_call.1} parent=11 // pred_region
        _
      $region32: #{tpu_custom_call.1} parent=11 // pred_fallthru
        _
    $region12: #{tpu_custom_call.1} parent=5 // pred_fallthru
      _
    %p199 = scmp.lt.s32.totalorder %s12, 4
    // Predicated region
    $region33: #{tpu_custom_call.1} parent=5 // pred_check
      %p200 = pneg %p199
    $region34: #{tpu_custom_call.1} parent=5 // pred_check_branch
      %202 = sbr.rel (%p200) target = $region36
    $region35: #{tpu_custom_call.1} parent=5 // pred_region
      // Predicated region
      $region37: #{tpu_custom_call.1} parent=35 // pred_check
        %p203 = pneg %p32
      $region38: #{tpu_custom_call.1} parent=35 // pred_check_branch
        %205 = sbr.rel (%p203) target = $region40
      $region39: #{tpu_custom_call.1} parent=35 // pred_region
        %s206 = smul.u32 16, %s12
        %p207 = scmp.lt.s32.totalorder %s206, 63
        %s208 = scalar_select %p207, %s206, 63
        %s209 = smul.addr %s208, 8
        %s210 = scalar_lea.vmem %s0, %s209
        %s211 = smul.u32 16, %s12
      $region40: #{tpu_custom_call.1} parent=35 // pred_fallthru
        _
    $region36: #{tpu_custom_call.1} parent=5 // pred_fallthru
      _
    %p212 = scmp.le.s32.totalorder 1, %s12
    %p213 = scmp.lt.s32.totalorder %s12, 5
    %p214 = pnand %p212, %p213
    %p215 = pneg %p214
    // Predicated region
    $region41: #{tpu_custom_call.1} parent=5 // pred_check
      _
    $region42: #{tpu_custom_call.1} parent=5 // pred_check_branch
      %217 = sbr.rel (%p214) target = $region44
    $region43: #{tpu_custom_call.1} parent=5 // pred_region
      %s218 = ssub.s32 %s12, 1
      %s219 = smul.u32 16, %s17
      %p220 = scmp.lt.s32.totalorder %s219, 63
      %s221 = scalar_select %p220, %s219, 63
      %s222 = smul.addr %s221, 8
      %s223 = scalar_lea.vmem %s0, %s222
      %p224 = pneg %p38
      %p225 = pneg %p35
      %p226 = pneg %p59
      %p227 = pneg %p56
      %p228 = pneg %p80
      %p229 = pneg %p77
      %p230 = pneg %p101
      %p231 = pneg %p98
      %p232 = pneg %p122
      %p233 = pneg %p119
      %p234 = pneg %p143
      %p235 = pneg %p140
      %p236 = pneg %p169
      %p237 = pneg %p166
      %s238 = smul.u32 16, %s17
      %p239 = scmp.lt.s32.totalorder %s238, 63
      %s240 = scalar_select %p239, %s238, 63
      %s241 = smul.addr %s240, 8
      %s242 = scalar_lea.vmem %s6, %s241
      %s243 = smul.u32 16, %s17
      %p244 = scmp.lt.s32.totalorder %s243, 63
      %s245 = scalar_select %p244, %s243, 63
      %s246 = smul.addr %s245, 8
      %s247 = scalar_lea.vmem %s0, %s246
      %s248 = smul.u32 16, %s17
      %s249 = smul.u32 16, %s17
      %p250 = scmp.lt.s32.totalorder %s249, 63
      %s251 = scalar_select %p250, %s249, 63
      %s252 = smul.addr %s251, 8
      %s253 = scalar_lea.vmem %s6, %s252
      %s254 = smul.u32 16, %s17
      %v255 = vld [vmem:[%s247] sm:$0xff]
      %v256 = vld [vmem:[%s247 + $0x8] sm:$0xff]
      %v257 = vld [vmem:[%s247 + $0x10] sm:$0xff]
      %v258 = vld [vmem:[%s247 + $0x18] sm:$0xff]
      %v259 = vld [vmem:[%s247 + $0x20] sm:$0xff]
      %v260 = vld [vmem:[%s247 + $0x28] sm:$0xff]
      %v261 = vld [vmem:[%s247 + $0x30] sm:$0xff]
      %v262 = vld [vmem:[%s247 + $0x38] sm:$0xff]
      %v263 = vld [vmem:[%s247 + $0x40] sm:$0xff]
      %v264 = vld [vmem:[%s247 + $0x48] sm:$0xff]
      %v265 = vld [vmem:[%s247 + $0x50] sm:$0xff]
      %v266 = vld [vmem:[%s247 + $0x58] sm:$0xff]
      %v267 = vld [vmem:[%s247 + $0x60] sm:$0xff]
      %v268 = vld [vmem:[%s247 + $0x68] sm:$0xff]
      %v269 = vld [vmem:[%s247 + $0x70] sm:$0xff]
      %v270 = vld [vmem:[%s247 + $0x78] sm:$0xff]
      %v271 = vld [vmem:[%s1] sm:$0xff]
      %v272 = vld [vmem:[%s1 + $0x8] sm:$0xff]
      %v273 = vld [vmem:[%s1 + $0x10] sm:$0xff]
      %v274 = vld [vmem:[%s1 + $0x18] sm:$0xff]
      %v275 = vld [vmem:[%s1 + $0x20] sm:$0xff]
      %v276 = vld [vmem:[%s1 + $0x28] sm:$0xff]
      %v277 = vld [vmem:[%s1 + $0x30] sm:$0xff]
      %v278 = vld [vmem:[%s1 + $0x38] sm:$0xff]
      %vm279 = vcmask 261120
      %v281 = vsel %vm279, %v255, 0
      %v284 = vsel %vm279, %v256, 0
      %v287 = vsel %vm279, %v257, 0
      %v290 = vsel %vm279, %v258, 0
      %v293 = vsel %vm279, %v259, 0
      %v296 = vsel %vm279, %v260, 0
      %v299 = vsel %vm279, %v261, 0
      %v302 = vsel %vm279, %v262, 0
      %v305 = vsel %vm279, %v263, 0
      %v308 = vsel %vm279, %v264, 0
      %v311 = vsel %vm279, %v265, 0
      %v314 = vsel %vm279, %v266, 0
      %v317 = vsel %vm279, %v267, 0
      %v320 = vsel %vm279, %v268, 0
      %v323 = vsel %vm279, %v269, 0
      %v326 = vsel %vm279, %v270, 0
      %328 = vmatprep.subr.mxu0 %v272
      %329 = vmatpush1.msra.mxu0 %v271
      %330 = vmatprep.subr.mxu0 %v274
      %331 = vmatpush1.msra.mxu0 %v273
      %332 = vmatprep.subr.mxu0 %v276
      %333 = vmatpush1.msra.mxu0 %v275
      %334 = vmatprep.subr.mxu0 %v278
      %335 = vmatpush1.msra.mxu0 %v277
      %336 = vmatprep.subr.mxu0 0.0
      %337 = vmatpush1.msra.mxu0 0.0
      %338 = vmatprep.subr.mxu0 0.0
      %339 = vmatpush1.msra.mxu0 0.0
      %340 = vmatprep.subr.mxu0 0.0
      %341 = vmatpush1.msra.mxu0 0.0
      %342 = vmatprep.subr.mxu0 0.0
      %343 = vmatpush1.msra.mxu0 0.0
      %344 = vmatprep.subr.mxu0 0.0
      %345 = vmatpush1.msra.mxu0 0.0
      %346 = vmatprep.subr.mxu0 0.0
      %347 = vmatpush1.msra.mxu0 0.0
      %348 = vmatprep.subr.mxu0 0.0
      %349 = vmatpush1.msra.mxu0 0.0
      %350 = vmatprep.subr.mxu0 0.0
      %351 = vmatpush1.msra.mxu0 0.0
      %352 = vmatprep.subr.mxu0 0.0
      %353 = vmatpush1.msra.mxu0 0.0
      %354 = vmatprep.subr.mxu0 0.0
      %355 = vmatpush1.msra.mxu0 0.0
      %356 = vmatprep.subr.mxu0 0.0
      %357 = vmatpush1.msra.mxu0 0.0
      %358 = vmatprep.subr.mxu0 0.0
      %359 = vmatpush1.msra.mxu0 0.0
      %360 = vmatprep.subr.mxu0 0.0
      %361 = vmatpush1.msra.mxu0 0.0
      %362 = vmatprep.subr.mxu0 0.0
      %363 = vmatpush1.msra.mxu0 0.0
      %364 = vmatprep.subr.mxu0 0.0
      %365 = vmatpush1.msra.mxu0 0.0
      %366 = vmatprep.subr.mxu0 0.0
      %367 = vmatpush1.msra.mxu0 0.0
      %368 = vmatprep.subr.mxu0 0.0
      %369 = vmatpush1.msra.mxu0 0.0
      %370 = vmatprep.subr.mxu0 0.0
      %371 = vmatpush1.msra.mxu0 0.0
      %372 = vmatprep.subr.mxu0 0.0
      %373 = vmatpush1.msra.mxu0 0.0
      %374 = vmatprep.subr.mxu0 0.0
      %375 = vmatpush1.msra.mxu0 0.0
      %376 = vmatprep.subr.mxu0 0.0
      %377 = vmatpush1.msra.mxu0 0.0
      %378 = vmatprep.subr.mxu0 0.0
      %379 = vmatpush1.msra.mxu0 0.0
      %380 = vmatprep.subr.mxu0 0.0
      %381 = vmatpush1.msra.mxu0 0.0
      %382 = vmatprep.subr.mxu0 0.0
      %383 = vmatpush1.msra.mxu0 0.0
      %384 = vmatprep.subr.mxu0 0.0
      %385 = vmatpush1.msra.mxu0 0.0
      %386 = vmatprep.subr.mxu0 0.0
      %387 = vmatpush1.msra.mxu0 0.0
      %388 = vmatprep.subr.mxu0 0.0
      %389 = vmatpush1.msra.mxu0 0.0
      %390 = vmatprep.subr.mxu0 0.0
      %391 = vmatpush1.msra.mxu0 0.0
      %392 = vmatprep.mubr.f32.mxu0 0.0
      %393 = vmatmul.mubr.f32.gmra.mrb[0].mxu0 %v281
      %v394 = vpop.f32.mrb[0].mxu0
      %v395 = vadd.f32 0.0, %v394
      %v396 = vpop.f32.mrb[0].mxu0
      %v397 = vadd.f32 0.0, %v396
      %398 = vmatprep.mubr.f32.mxu0 0.0
      %399 = vmatmul.mubr.f32.gmra.mrb[0].mxu0 %v284
      %v400 = vpop.f32.mrb[0].mxu0
      %v401 = vadd.f32 0.0, %v400
      %v402 = vpop.f32.mrb[0].mxu0
      %v403 = vadd.f32 0.0, %v402
      %404 = vmatprep.mubr.f32.mxu0 0.0
      %405 = vmatmul.mubr.f32.gmra.mrb[0].mxu0 %v287
      %v406 = vpop.f32.mrb[0].mxu0
      %v407 = vadd.f32 0.0, %v406
      %v408 = vpop.f32.mrb[0].mxu0
      %v409 = vadd.f32 0.0, %v408
      %410 = vmatprep.mubr.f32.mxu0 0.0
      %411 = vmatmul.mubr.f32.gmra.mrb[0].mxu0 %v290
      %v412 = vpop.f32.mrb[0].mxu0
      %v413 = vadd.f32 0.0, %v412
      %v414 = vpop.f32.mrb[0].mxu0
      %v415 = vadd.f32 0.0, %v414
      %416 = vmatprep.mubr.f32.mxu0 0.0
      %417 = vmatmul.mubr.f32.gmra.mrb[0].mxu0 %v293
      %v418 = vpop.f32.mrb[0].mxu0
      %v419 = vadd.f32 0.0, %v418
      %v420 = vpop.f32.mrb[0].mxu0
      %v421 = vadd.f32 0.0, %v420
      %422 = vmatprep.mubr.f32.mxu0 0.0
      %423 = vmatmul.mubr.f32.gmra.mrb[0].mxu0 %v296
      %v424 = vpop.f32.mrb[0].mxu0
      %v425 = vadd.f32 0.0, %v424
      %v426 = vpop.f32.mrb[0].mxu0
      %v427 = vadd.f32 0.0, %v426
      %428 = vmatprep.mubr.f32.mxu0 0.0
      %429 = vmatmul.mubr.f32.gmra.mrb[0].mxu0 %v299
      %v430 = vpop.f32.mrb[0].mxu0
      %v431 = vadd.f32 0.0, %v430
      %v432 = vpop.f32.mrb[0].mxu0
      %v433 = vadd.f32 0.0, %v432
      %434 = vmatprep.mubr.f32.mxu0 0.0
      %435 = vmatmul.mubr.f32.gmra.mrb[0].mxu0 %v302
      %v436 = vpop.f32.mrb[0].mxu0
      %v437 = vadd.f32 0.0, %v436
      %v438 = vpop.f32.mrb[0].mxu0
      %v439 = vadd.f32 0.0, %v438
      %440 = vmatprep.mubr.f32.mxu0 0.0
      %441 = vmatmul.mubr.f32.gmra.mrb[0].mxu0 %v305
      %v442 = vpop.f32.mrb[0].mxu0
      %v443 = vadd.f32 0.0, %v442
      %v444 = vpop.f32.mrb[0].mxu0
      %v445 = vadd.f32 0.0, %v444
      %446 = vmatprep.mubr.f32.mxu0 0.0
      %447 = vmatmul.mubr.f32.gmra.mrb[0].mxu0 %v308
      %v448 = vpop.f32.mrb[0].mxu0
      %v449 = vadd.f32 0.0, %v448
      %v450 = vpop.f32.mrb[0].mxu0
      %v451 = vadd.f32 0.0, %v450
      %452 = vmatprep.mubr.f32.mxu0 0.0
      %453 = vmatmul.mubr.f32.gmra.mrb[0].mxu0 %v311
      %v454 = vpop.f32.mrb[0].mxu0
      %v455 = vadd.f32 0.0, %v454
      %v456 = vpop.f32.mrb[0].mxu0
      %v457 = vadd.f32 0.0, %v456
      %458 = vmatprep.mubr.f32.mxu0 0.0
      %459 = vmatmul.mubr.f32.gmra.mrb[0].mxu0 %v314
      %v460 = vpop.f32.mrb[0].mxu0
      %v461 = vadd.f32 0.0, %v460
      %v462 = vpop.f32.mrb[0].mxu0
      %v463 = vadd.f32 0.0, %v462
      %464 = vmatprep.mubr.f32.mxu0 0.0
      %465 = vmatmul.mubr.f32.gmra.mrb[0].mxu0 %v317
      %v466 = vpop.f32.mrb[0].mxu0
      %v467 = vadd.f32 0.0, %v466
      %v468 = vpop.f32.mrb[0].mxu0
      %v469 = vadd.f32 0.0, %v468
      %470 = vmatprep.mubr.f32.mxu0 0.0
      %471 = vmatmul.mubr.f32.gmra.mrb[0].mxu0 %v320
      %v472 = vpop.f32.mrb[0].mxu0
      %v473 = vadd.f32 0.0, %v472
      %v474 = vpop.f32.mrb[0].mxu0
      %v475 = vadd.f32 0.0, %v474
      %476 = vmatprep.mubr.f32.mxu0 0.0
      %477 = vmatmul.mubr.f32.gmra.mrb[0].mxu0 %v323
      %v478 = vpop.f32.mrb[0].mxu0
      %v479 = vadd.f32 0.0, %v478
      %v480 = vpop.f32.mrb[0].mxu0
      %v481 = vadd.f32 0.0, %v480
      %482 = vmatprep.mubr.f32.mxu0 0.0
      %483 = vmatmul.mubr.f32.gmra.mrb[0].mxu0 %v326
      %v484 = vpop.f32.mrb[0].mxu0
      %v485 = vadd.f32 0.0, %v484
      %v486 = vpop.f32.mrb[0].mxu0
      %v487 = vadd.f32 0.0, %v486
      %488 = vdwg.mxu0
      %v489 = vmul.f32 %v395, 0.14433756
      %v490 = vmul.f32 %v401, 0.14433756
      %v491 = vmul.f32 %v407, 0.14433756
      %v492 = vmul.f32 %v413, 0.14433756
      %v493 = vmul.f32 %v419, 0.14433756
      %v494 = vmul.f32 %v425, 0.14433756
      %v495 = vmul.f32 %v431, 0.14433756
      %v496 = vmul.f32 %v437, 0.14433756
      %v497 = vmul.f32 %v443, 0.14433756
      %v498 = vmul.f32 %v449, 0.14433756
      %v499 = vmul.f32 %v455, 0.14433756
      %v500 = vmul.f32 %v461, 0.14433756
      %v501 = vmul.f32 %v467, 0.14433756
      %v502 = vmul.f32 %v473, 0.14433756
      %v503 = vmul.f32 %v479, 0.14433756
      %v504 = vmul.f32 %v485, 0.14433756
      %513 = vrot.lane.b32.xlu0 %v395, 64
      %v514 = vpop.permute.xlu0 %513
      %515 = vrot.lane.b32.xlu0 %v401, 64
      %v516 = vpop.permute.xlu0 %515
      %517 = vrot.lane.b32.xlu0 %v407, 64
      %v518 = vpop.permute.xlu0 %517
      %519 = vrot.lane.b32.xlu0 %v413, 64
      %v520 = vpop.permute.xlu0 %519
      %521 = vrot.lane.b32.xlu0 %v419, 64
      %v522 = vpop.permute.xlu0 %521
      %523 = vrot.lane.b32.xlu0 %v425, 64
      %v524 = vpop.permute.xlu0 %523
      %525 = vrot.lane.b32.xlu0 %v431, 64
      %v526 = vpop.permute.xlu0 %525
      %527 = vrot.lane.b32.xlu0 %v437, 64
      %v528 = vpop.permute.xlu0 %527
      %vm529 = vcmask 130048
      %v531 = vsel %vm529, %v489, 0
      %v534 = vsel %vm529, %v490, 0
      %v537 = vsel %vm529, %v491, 0
      %v540 = vsel %vm529, %v492, 0
      %v543 = vsel %vm529, %v493, 0
      %v546 = vsel %vm529, %v494, 0
      %v549 = vsel %vm529, %v495, 0
      %v552 = vsel %vm529, %v496, 0
      %v554 = vsel %vm529, %v514, 0
      %v556 = vsel %vm529, %v516, 0
      %v558 = vsel %vm529, %v518, 0
      %v560 = vsel %vm529, %v520, 0
      %v562 = vsel %vm529, %v522, 0
      %v564 = vsel %vm529, %v524, 0
      %v566 = vsel %vm529, %v526, 0
      %v568 = vsel %vm529, %v528, 0
      %570 = vmatprep.subr.mxu0 0.0
      %571 = vmatpush1.xpose.msra.mxu0 %v554
      %572 = vmatprep.subr.mxu0 0.0
      %573 = vmatpush1.xpose.msra.mxu0 %v556
      %574 = vmatprep.subr.mxu0 0.0
      %575 = vmatpush1.xpose.msra.mxu0 %v558
      %576 = vmatprep.subr.mxu0 0.0
      %577 = vmatpush1.xpose.msra.mxu0 %v560
      %578 = vmatprep.subr.mxu0 0.0
      %579 = vmatpush1.xpose.msra.mxu0 %v562
      %580 = vmatprep.subr.mxu0 0.0
      %581 = vmatpush1.xpose.msra.mxu0 %v564
      %582 = vmatprep.subr.mxu0 0.0
      %583 = vmatpush1.xpose.msra.mxu0 %v566
      %584 = vmatprep.subr.mxu0 0.0
      %585 = vmatpush1.xpose.msra.mxu0 %v568
      %586 = vmatprep.subr.mxu0 0.0
      %587 = vmatpush1.xpose.msra.mxu0 0.0
      %588 = vmatprep.subr.mxu0 0.0
      %589 = vmatpush1.xpose.msra.mxu0 0.0
      %590 = vmatprep.subr.mxu0 0.0
      %591 = vmatpush1.xpose.msra.mxu0 0.0
      %592 = vmatprep.subr.mxu0 0.0
      %593 = vmatpush1.xpose.msra.mxu0 0.0
      %594 = vmatprep.subr.mxu0 0.0
      %595 = vmatpush1.xpose.msra.mxu0 0.0
      %596 = vmatprep.subr.mxu0 0.0
      %597 = vmatpush1.xpose.msra.mxu0 0.0
      %598 = vmatprep.subr.mxu0 0.0
      %599 = vmatpush1.xpose.msra.mxu0 0.0
      %600 = vmatprep.subr.mxu0 0.0
      %601 = vmatpush1.xpose.msra.mxu0 0.0
      %602 = vmatprep.subr.mxu0 0.0
      %603 = vmatpush1.xpose.msra.mxu0 0.0
      %604 = vmatprep.subr.mxu0 0.0
      %605 = vmatpush1.xpose.msra.mxu0 0.0
      %606 = vmatprep.subr.mxu0 0.0
      %607 = vmatpush1.xpose.msra.mxu0 0.0
      %608 = vmatprep.subr.mxu0 0.0
      %609 = vmatpush1.xpose.msra.mxu0 0.0
      %610 = vmatprep.subr.mxu0 0.0
      %611 = vmatpush1.xpose.msra.mxu0 0.0
      %612 = vmatprep.subr.mxu0 0.0
      %613 = vmatpush1.xpose.msra.mxu0 0.0
      %614 = vmatprep.subr.mxu0 0.0
      %615 = vmatpush1.xpose.msra.mxu0 0.0
      %616 = vmatprep.subr.mxu0 0.0
      %617 = vmatpush1.xpose.msra.mxu0 0.0
      %618 = vmatprep.subr.mxu0 0.0
      %619 = vmatpush1.xpose.msra.mxu0 0.0
      %620 = vmatprep.subr.mxu0 0.0
      %621 = vmatpush1.xpose.msra.mxu0 0.0
      %622 = vmatprep.subr.mxu0 0.0
      %623 = vmatpush1.xpose.msra.mxu0 0.0
      %624 = vmatprep.subr.mxu0 0.0
      %625 = vmatpush1.xpose.msra.mxu0 0.0
      %626 = vmatprep.subr.mxu0 0.0
      %627 = vmatpush1.xpose.msra.mxu0 0.0
      %628 = vmatprep.subr.mxu0 0.0
      %629 = vmatpush1.xpose.msra.mxu0 0.0
      %630 = vmatprep.subr.mxu0 0.0
      %631 = vmatpush1.xpose.msra.mxu0 0.0
      %632 = vmatprep.subr.mxu0 0.0
      %633 = vmatpush1.xpose.msra.mxu0 0.0
      %634 = vmatprep.mubr.f32.mxu0 0.0
      %635 = vmatmul.mubr.f32.gmra.mrb[0].mxu0 %v531
      %v636 = vpop.f32.mrb[0].mxu0
      %v637 = vadd.f32 0.0, %v636
      %v638 = vpop.f32.mrb[0].mxu0
      %639 = vmatprep.mubr.f32.mxu0 0.0
      %640 = vmatmul.mubr.f32.gmra.mrb[0].mxu0 %v534
      %v641 = vpop.f32.mrb[0].mxu0
      %v642 = vadd.f32 0.0, %v641
      %v643 = vpop.f32.mrb[0].mxu0
      %644 = vmatprep.mubr.f32.mxu0 0.0
      %645 = vmatmul.mubr.f32.gmra.mrb[0].mxu0 %v537
      %v646 = vpop.f32.mrb[0].mxu0
      %v647 = vadd.f32 0.0, %v646
      %v648 = vpop.f32.mrb[0].mxu0
      %649 = vmatprep.mubr.f32.mxu0 0.0
      %650 = vmatmul.mubr.f32.gmra.mrb[0].mxu0 %v540
      %v651 = vpop.f32.mrb[0].mxu0
      %v652 = vadd.f32 0.0, %v651
      %v653 = vpop.f32.mrb[0].mxu0
      %654 = vmatprep.mubr.f32.mxu0 0.0
      %655 = vmatmul.mubr.f32.gmra.mrb[0].mxu0 %v543
      %v656 = vpop.f32.mrb[0].mxu0
      %v657 = vadd.f32 0.0, %v656
      %v658 = vpop.f32.mrb[0].mxu0
      %659 = vmatprep.mubr.f32.mxu0 0.0
      %660 = vmatmul.mubr.f32.gmra.mrb[0].mxu0 %v546
      %v661 = vpop.f32.mrb[0].mxu0
      %v662 = vadd.f32 0.0, %v661
      %v663 = vpop.f32.mrb[0].mxu0
      %664 = vmatprep.mubr.f32.mxu0 0.0
      %665 = vmatmul.mubr.f32.gmra.mrb[0].mxu0 %v549
      %v666 = vpop.f32.mrb[0].mxu0
      %v667 = vadd.f32 0.0, %v666
      %v668 = vpop.f32.mrb[0].mxu0
      %669 = vmatprep.mubr.f32.mxu0 0.0
      %670 = vmatmul.mubr.f32.gmra.mrb[0].mxu0 %v552
      %v671 = vpop.f32.mrb[0].mxu0
      %v672 = vadd.f32 0.0, %v671
      %v673 = vpop.f32.mrb[0].mxu0
      %674 = vdwg.mxu0
      %vm675 = vcmask 523264
      %v676 = vsel %vm675, %v637, -inf
      %677 = vmax.xlane.f32.xlu0 %v676
      %v678 = vpop.xlane.xlu0 %677
      %v679 = vsel %vm675, %v642, -inf
      %680 = vmax.xlane.f32.xlu0 %v679
      %v681 = vpop.xlane.xlu0 %680
      %v682 = vsel %vm675, %v647, -inf
      %683 = vmax.xlane.f32.xlu0 %v682
      %v684 = vpop.xlane.xlu0 %683
      %v685 = vsel %vm675, %v652, -inf
      %686 = vmax.xlane.f32.xlu0 %v685
      %v687 = vpop.xlane.xlu0 %686
      %v688 = vsel %vm675, %v657, -inf
      %689 = vmax.xlane.f32.xlu0 %v688
      %v690 = vpop.xlane.xlu0 %689
      %v691 = vsel %vm675, %v662, -inf
      %692 = vmax.xlane.f32.xlu0 %v691
      %v693 = vpop.xlane.xlu0 %692
      %v694 = vsel %vm675, %v667, -inf
      %695 = vmax.xlane.f32.xlu0 %v694
      %v696 = vpop.xlane.xlu0 %695
      %v697 = vsel %vm675, %v672, -inf
      %698 = vmax.xlane.f32.xlu0 %v697
      %v699 = vpop.xlane.xlu0 %698
      %v700 = vsub.f32 %v637, %v678
      %v701 = vsub.f32 %v642, %v681
      %v702 = vsub.f32 %v647, %v684
      %v703 = vsub.f32 %v652, %v687
      %v704 = vsub.f32 %v657, %v690
      %v705 = vsub.f32 %v662, %v693
      %v706 = vsub.f32 %v667, %v696
      %v707 = vsub.f32 %v672, %v699
      %v708 = vmul.f32 %v700, 1.442695
      %v709 = vpow.pop %v708
      %v710 = vmul.f32 %v701, 1.442695
      %v711 = vpow.pop %v710
      %v712 = vmul.f32 %v702, 1.442695
      %v713 = vpow.pop %v712
      %v714 = vmul.f32 %v703, 1.442695
      %v715 = vpow.pop %v714
      %v716 = vmul.f32 %v704, 1.442695
      %v717 = vpow.pop %v716
      %v718 = vmul.f32 %v705, 1.442695
      %v719 = vpow.pop %v718
      %v720 = vmul.f32 %v706, 1.442695
      %v721 = vpow.pop %v720
      %v722 = vmul.f32 %v707, 1.442695
      %v723 = vpow.pop %v722
      %v724 = vsel %vm675, %v709, 0.0
      %725 = vadd.xlane.f32.xlu0 %v724
      %v726 = vpop.xlane.xlu0 %725
      %v727 = vsel %vm675, %v711, 0.0
      %728 = vadd.xlane.f32.xlu0 %v727
      %v729 = vpop.xlane.xlu0 %728
      %v730 = vsel %vm675, %v713, 0.0
      %731 = vadd.xlane.f32.xlu0 %v730
      %v732 = vpop.xlane.xlu0 %731
      %v733 = vsel %vm675, %v715, 0.0
      %734 = vadd.xlane.f32.xlu0 %v733
      %v735 = vpop.xlane.xlu0 %734
      %v736 = vsel %vm675, %v717, 0.0
      %737 = vadd.xlane.f32.xlu0 %v736
      %v738 = vpop.xlane.xlu0 %737
      %v739 = vsel %vm675, %v719, 0.0
      %740 = vadd.xlane.f32.xlu0 %v739
      %v741 = vpop.xlane.xlu0 %740
      %v742 = vsel %vm675, %v721, 0.0
      %743 = vadd.xlane.f32.xlu0 %v742
      %v744 = vpop.xlane.xlu0 %743
      %v745 = vsel %vm675, %v723, 0.0
      %746 = vadd.xlane.f32.xlu0 %v745
      %v747 = vpop.xlane.xlu0 %746
      %v748 = vrcp.pop %v726
      %v749 = vrcp.pop %v729
      %v750 = vrcp.pop %v732
      %v751 = vrcp.pop %v735
      %v752 = vrcp.pop %v738
      %v753 = vrcp.pop %v741
      %v754 = vrcp.pop %v744
      %v755 = vrcp.pop %v747
      %v756 = vmul.f32 %v709, %v748
      %v757 = vmul.f32 %v711, %v749
      %v758 = vmul.f32 %v713, %v750
      %v759 = vmul.f32 %v715, %v751
      %v760 = vmul.f32 %v717, %v752
      %v761 = vmul.f32 %v719, %v753
      %v762 = vmul.f32 %v721, %v754
      %v763 = vmul.f32 %v723, %v755
      %v765 = vsel %vm675, %v756, 0
      %v768 = vsel %vm675, %v757, 0
      %v771 = vsel %vm675, %v758, 0
      %v774 = vsel %vm675, %v759, 0
      %v777 = vsel %vm675, %v760, 0
      %v780 = vsel %vm675, %v761, 0
      %v783 = vsel %vm675, %v762, 0
      %v786 = vsel %vm675, %v763, 0
      %788 = vmatprep.subr.mxu0 0.0
      %789 = vmatpush1.msra.mxu0 %v397
      %790 = vmatprep.subr.mxu0 0.0
      %791 = vmatpush1.msra.mxu0 %v403
      %792 = vmatprep.subr.mxu0 0.0
      %793 = vmatpush1.msra.mxu0 %v409
      %794 = vmatprep.subr.mxu0 0.0
      %795 = vmatpush1.msra.mxu0 %v415
      %796 = vmatprep.subr.mxu0 0.0
      %797 = vmatpush1.msra.mxu0 %v421
      %798 = vmatprep.subr.mxu0 0.0
      %799 = vmatpush1.msra.mxu0 %v427
      %800 = vmatprep.subr.mxu0 0.0
      %801 = vmatpush1.msra.mxu0 %v433
      %802 = vmatprep.subr.mxu0 0.0
      %803 = vmatpush1.msra.mxu0 %v439
      %804 = vmatprep.subr.mxu0 0.0
      %805 = vmatpush1.msra.mxu0 0.0
      %806 = vmatprep.subr.mxu0 0.0
      %807 = vmatpush1.msra.mxu0 0.0
      %808 = vmatprep.subr.mxu0 0.0
      %809 = vmatpush1.msra.mxu0 0.0
      %810 = vmatprep.subr.mxu0 0.0
      %811 = vmatpush1.msra.mxu0 0.0
      %812 = vmatprep.subr.mxu0 0.0
      %813 = vmatpush1.msra.mxu0 0.0
      %814 = vmatprep.subr.mxu0 0.0
      %815 = vmatpush1.msra.mxu0 0.0
      %816 = vmatprep.subr.mxu0 0.0
      %817 = vmatpush1.msra.mxu0 0.0
      %818 = vmatprep.subr.mxu0 0.0
      %819 = vmatpush1.msra.mxu0 0.0
      %820 = vmatprep.subr.mxu0 0.0
      %821 = vmatpush1.msra.mxu0 0.0
      %822 = vmatprep.subr.mxu0 0.0
      %823 = vmatpush1.msra.mxu0 0.0
      %824 = vmatprep.subr.mxu0 0.0
      %825 = vmatpush1.msra.mxu0 0.0
      %826 = vmatprep.subr.mxu0 0.0
      %827 = vmatpush1.msra.mxu0 0.0
      %828 = vmatprep.subr.mxu0 0.0
      %829 = vmatpush1.msra.mxu0 0.0
      %830 = vmatprep.subr.mxu0 0.0
      %831 = vmatpush1.msra.mxu0 0.0
      %832 = vmatprep.subr.mxu0 0.0
      %833 = vmatpush1.msra.mxu0 0.0
      %834 = vmatprep.subr.mxu0 0.0
      %835 = vmatpush1.msra.mxu0 0.0
      %836 = vmatprep.subr.mxu0 0.0
      %837 = vmatpush1.msra.mxu0 0.0
      %838 = vmatprep.subr.mxu0 0.0
      %839 = vmatpush1.msra.mxu0 0.0
      %840 = vmatprep.subr.mxu0 0.0
      %841 = vmatpush1.msra.mxu0 0.0
      %842 = vmatprep.subr.mxu0 0.0
      %843 = vmatpush1.msra.mxu0 0.0
      %844 = vmatprep.subr.mxu0 0.0
      %845 = vmatpush1.msra.mxu0 0.0
      %846 = vmatprep.subr.mxu0 0.0
      %847 = vmatpush1.msra.mxu0 0.0
      %848 = vmatprep.subr.mxu0 0.0
      %849 = vmatpush1.msra.mxu0 0.0
      %850 = vmatprep.subr.mxu0 0.0
      %851 = vmatpush1.msra.mxu0 0.0
      %852 = vmatprep.mubr.f32.mxu0 0.0
      %853 = vmatmul.mubr.f32.gmra.mrb[0].mxu0 %v765
      %v854 = vpop.f32.mrb[0].mxu0
      %v855 = vadd.f32 0.0, %v854
      %v856 = vpop.f32.mrb[0].mxu0
      %857 = vmatprep.mubr.f32.mxu0 0.0
      %858 = vmatmul.mubr.f32.gmra.mrb[0].mxu0 %v768
      %v859 = vpop.f32.mrb[0].mxu0
      %v860 = vadd.f32 0.0, %v859
      %v861 = vpop.f32.mrb[0].mxu0
      %862 = vmatprep.mubr.f32.mxu0 0.0
      %863 = vmatmul.mubr.f32.gmra.mrb[0].mxu0 %v771
      %v864 = vpop.f32.mrb[0].mxu0
      %v865 = vadd.f32 0.0, %v864
      %v866 = vpop.f32.mrb[0].mxu0
      %867 = vmatprep.mubr.f32.mxu0 0.0
      %868 = vmatmul.mubr.f32.gmra.mrb[0].mxu0 %v774
      %v869 = vpop.f32.mrb[0].mxu0
      %v870 = vadd.f32 0.0, %v869
      %v871 = vpop.f32.mrb[0].mxu0
      %872 = vmatprep.mubr.f32.mxu0 0.0
      %873 = vmatmul.mubr.f32.gmra.mrb[0].mxu0 %v777
      %v874 = vpop.f32.mrb[0].mxu0
      %v875 = vadd.f32 0.0, %v874
      %v876 = vpop.f32.mrb[0].mxu0
      %877 = vmatprep.mubr.f32.mxu0 0.0
      %878 = vmatmul.mubr.f32.gmra.mrb[0].mxu0 %v780
      %v879 = vpop.f32.mrb[0].mxu0
      %v880 = vadd.f32 0.0, %v879
      %v881 = vpop.f32.mrb[0].mxu0
      %882 = vmatprep.mubr.f32.mxu0 0.0
      %883 = vmatmul.mubr.f32.gmra.mrb[0].mxu0 %v783
      %v884 = vpop.f32.mrb[0].mxu0
      %v885 = vadd.f32 0.0, %v884
      %v886 = vpop.f32.mrb[0].mxu0
      %887 = vmatprep.mubr.f32.mxu0 0.0
      %888 = vmatmul.mubr.f32.gmra.mrb[0].mxu0 %v786
      %v889 = vpop.f32.mrb[0].mxu0
      %v890 = vadd.f32 0.0, %v889
      %v891 = vpop.f32.mrb[0].mxu0
      %892 = vdwg.mxu0
      %893 = vrot.lane.b32.xlu0 %v489, 112
      %v894 = vpop.permute.xlu0 %893
      %895 = vrot.lane.b32.xlu0 %v490, 112
      %v896 = vpop.permute.xlu0 %895
      %897 = vrot.lane.b32.xlu0 %v491, 112
      %v898 = vpop.permute.xlu0 %897
      %899 = vrot.lane.b32.xlu0 %v492, 112
      %v900 = vpop.permute.xlu0 %899
      %901 = vrot.lane.b32.xlu0 %v493, 112
      %v902 = vpop.permute.xlu0 %901
      %903 = vrot.lane.b32.xlu0 %v494, 112
      %v904 = vpop.permute.xlu0 %903
      %905 = vrot.lane.b32.xlu0 %v495, 112
      %v906 = vpop.permute.xlu0 %905
      %907 = vrot.lane.b32.xlu0 %v496, 112
      %v908 = vpop.permute.xlu0 %907
      %909 = vrot.lane.b32.xlu0 %v395, 48
      %v910 = vpop.permute.xlu0 %909
      %911 = vrot.lane.b32.xlu0 %v401, 48
      %v912 = vpop.permute.xlu0 %911
      %913 = vrot.lane.b32.xlu0 %v407, 48
      %v914 = vpop.permute.xlu0 %913
      %915 = vrot.lane.b32.xlu0 %v413, 48
      %v916 = vpop.permute.xlu0 %915
      %917 = vrot.lane.b32.xlu0 %v419, 48
      %v918 = vpop.permute.xlu0 %917
      %919 = vrot.lane.b32.xlu0 %v425, 48
      %v920 = vpop.permute.xlu0 %919
      %921 = vrot.lane.b32.xlu0 %v431, 48
      %v922 = vpop.permute.xlu0 %921
      %923 = vrot.lane.b32.xlu0 %v437, 48
      %v924 = vpop.permute.xlu0 %923
      %v925 = vsel %vm529, %v894, 0
      %v927 = vsel %vm529, %v896, 0
      %v929 = vsel %vm529, %v898, 0
      %v931 = vsel %vm529, %v900, 0
      %v933 = vsel %vm529, %v902, 0
      %v935 = vsel %vm529, %v904, 0
      %v937 = vsel %vm529, %v906, 0
      %v939 = vsel %vm529, %v908, 0
      %v941 = vsel %vm529, %v910, 0
      %v943 = vsel %vm529, %v912, 0
      %v945 = vsel %vm529, %v914, 0
      %v947 = vsel %vm529, %v916, 0
      %v949 = vsel %vm529, %v918, 0
      %v951 = vsel %vm529, %v920, 0
      %v953 = vsel %vm529, %v922, 0
      %v955 = vsel %vm529, %v924, 0
      %957 = vmatprep.subr.mxu0 0.0
      %958 = vmatpush1.xpose.msra.mxu0 %v941
      %959 = vmatprep.subr.mxu0 0.0
      %960 = vmatpush1.xpose.msra.mxu0 %v943
      %961 = vmatprep.subr.mxu0 0.0
      %962 = vmatpush1.xpose.msra.mxu0 %v945
      %963 = vmatprep.subr.mxu0 0.0
      %964 = vmatpush1.xpose.msra.mxu0 %v947
      %965 = vmatprep.subr.mxu0 0.0
      %966 = vmatpush1.xpose.msra.mxu0 %v949
      %967 = vmatprep.subr.mxu0 0.0
      %968 = vmatpush1.xpose.msra.mxu0 %v951
      %969 = vmatprep.subr.mxu0 0.0
      %970 = vmatpush1.xpose.msra.mxu0 %v953
      %971 = vmatprep.subr.mxu0 0.0
      %972 = vmatpush1.xpose.msra.mxu0 %v955
      %973 = vmatprep.subr.mxu0 0.0
      %974 = vmatpush1.xpose.msra.mxu0 0.0
      %975 = vmatprep.subr.mxu0 0.0
      %976 = vmatpush1.xpose.msra.mxu0 0.0
      %977 = vmatprep.subr.mxu0 0.0
      %978 = vmatpush1.xpose.msra.mxu0 0.0
      %979 = vmatprep.subr.mxu0 0.0
      %980 = vmatpush1.xpose.msra.mxu0 0.0
      %981 = vmatprep.subr.mxu0 0.0
      %982 = vmatpush1.xpose.msra.mxu0 0.0
      %983 = vmatprep.subr.mxu0 0.0
      %984 = vmatpush1.xpose.msra.mxu0 0.0
      %985 = vmatprep.subr.mxu0 0.0
      %986 = vmatpush1.xpose.msra.mxu0 0.0
      %987 = vmatprep.subr.mxu0 0.0
      %988 = vmatpush1.xpose.msra.mxu0 0.0
      %989 = vmatprep.subr.mxu0 0.0
      %990 = vmatpush1.xpose.msra.mxu0 0.0
      %991 = vmatprep.subr.mxu0 0.0
      %992 = vmatpush1.xpose.msra.mxu0 0.0
      %993 = vmatprep.subr.mxu0 0.0
      %994 = vmatpush1.xpose.msra.mxu0 0.0
      %995 = vmatprep.subr.mxu0 0.0
      %996 = vmatpush1.xpose.msra.mxu0 0.0
      %997 = vmatprep.subr.mxu0 0.0
      %998 = vmatpush1.xpose.msra.mxu0 0.0
      %999 = vmatprep.subr.mxu0 0.0
      %1000 = vmatpush1.xpose.msra.mxu0 0.0
      %1001 = vmatprep.subr.mxu0 0.0
      %1002 = vmatpush1.xpose.msra.mxu0 0.0
      %1003 = vmatprep.subr.mxu0 0.0
      %1004 = vmatpush1.xpose.msra.mxu0 0.0
      %1005 = vmatprep.subr.mxu0 0.0
      %1006 = vmatpush1.xpose.msra.mxu0 0.0
      %1007 = vmatprep.subr.mxu0 0.0
      %1008 = vmatpush1.xpose.msra.mxu0 0.0
      %1009 = vmatprep.subr.mxu0 0.0
      %1010 = vmatpush1.xpose.msra.mxu0 0.0
      %1011 = vmatprep.subr.mxu0 0.0
      %1012 = vmatpush1.xpose.msra.mxu0 0.0
      %1013 = vmatprep.subr.mxu0 0.0
      %1014 = vmatpush1.xpose.msra.mxu0 0.0
      %1015 = vmatprep.subr.mxu0 0.0
      %1016 = vmatpush1.xpose.msra.mxu0 0.0
      %1017 = vmatprep.subr.mxu0 0.0
      %1018 = vmatpush1.xpose.msra.mxu0 0.0
      %1019 = vmatprep.subr.mxu0 0.0
      %1020 = vmatpush1.xpose.msra.mxu0 0.0
      %1021 = vmatprep.mubr.f32.mxu0 0.0
      %1022 = vmatmul.mubr.f32.gmra.mrb[0].mxu0 %v925
      %v1023 = vpop.f32.mrb[0].mxu0
      %v1024 = vadd.f32 0.0, %v1023
      %v1025 = vpop.f32.mrb[0].mxu0
      %1026 = vmatprep.mubr.f32.mxu0 0.0
      %1027 = vmatmul.mubr.f32.gmra.mrb[0].mxu0 %v927
      %v1028 = vpop.f32.mrb[0].mxu0
      %v1029 = vadd.f32 0.0, %v1028
      %v1030 = vpop.f32.mrb[0].mxu0
      %1031 = vmatprep.mubr.f32.mxu0 0.0
      %1032 = vmatmul.mubr.f32.gmra.mrb[0].mxu0 %v929
      %v1033 = vpop.f32.mrb[0].mxu0
      %v1034 = vadd.f32 0.0, %v1033
      %v1035 = vpop.f32.mrb[0].mxu0
      %1036 = vmatprep.mubr.f32.mxu0 0.0
      %1037 = vmatmul.mubr.f32.gmra.mrb[0].mxu0 %v931
      %v1038 = vpop.f32.mrb[0].mxu0
      %v1039 = vadd.f32 0.0, %v1038
      %v1040 = vpop.f32.mrb[0].mxu0
      %1041 = vmatprep.mubr.f32.mxu0 0.0
      %1042 = vmatmul.mubr.f32.gmra.mrb[0].mxu0 %v933
      %v1043 = vpop.f32.mrb[0].mxu0
      %v1044 = vadd.f32 0.0, %v1043
      %v1045 = vpop.f32.mrb[0].mxu0
      %1046 = vmatprep.mubr.f32.mxu0 0.0
      %1047 = vmatmul.mubr.f32.gmra.mrb[0].mxu0 %v935
      %v1048 = vpop.f32.mrb[0].mxu0
      %v1049 = vadd.f32 0.0, %v1048
      %v1050 = vpop.f32.mrb[0].mxu0
      %1051 = vmatprep.mubr.f32.mxu0 0.0
      %1052 = vmatmul.mubr.f32.gmra.mrb[0].mxu0 %v937
      %v1053 = vpop.f32.mrb[0].mxu0
      %v1054 = vadd.f32 0.0, %v1053
      %v1055 = vpop.f32.mrb[0].mxu0
      %1056 = vmatprep.mubr.f32.mxu0 0.0
      %1057 = vmatmul.mubr.f32.gmra.mrb[0].mxu0 %v939
      %v1058 = vpop.f32.mrb[0].mxu0
      %v1059 = vadd.f32 0.0, %v1058
      %v1060 = vpop.f32.mrb[0].mxu0
      %1061 = vdwg.mxu0
      %v1062 = vsel %vm675, %v1024, -inf
      %1063 = vmax.xlane.f32.xlu0 %v1062
      %v1064 = vpop.xlane.xlu0 %1063
      %v1065 = vsel %vm675, %v1029, -inf
      %1066 = vmax.xlane.f32.xlu0 %v1065
      %v1067 = vpop.xlane.xlu0 %1066
      %v1068 = vsel %vm675, %v1034, -inf
      %1069 = vmax.xlane.f32.xlu0 %v1068
      %v1070 = vpop.xlane.xlu0 %1069
      %v1071 = vsel %vm675, %v1039, -inf
      %1072 = vmax.xlane.f32.xlu0 %v1071
      %v1073 = vpop.xlane.xlu0 %1072
      %v1074 = vsel %vm675, %v1044, -inf
      %1075 = vmax.xlane.f32.xlu0 %v1074
      %v1076 = vpop.xlane.xlu0 %1075
      %v1077 = vsel %vm675, %v1049, -inf
      %1078 = vmax.xlane.f32.xlu0 %v1077
      %v1079 = vpop.xlane.xlu0 %1078
      %v1080 = vsel %vm675, %v1054, -inf
      %1081 = vmax.xlane.f32.xlu0 %v1080
      %v1082 = vpop.xlane.xlu0 %1081
      %v1083 = vsel %vm675, %v1059, -inf
      %1084 = vmax.xlane.f32.xlu0 %v1083
      %v1085 = vpop.xlane.xlu0 %1084
      %v1086 = vsub.f32 %v1024, %v1064
      %v1087 = vsub.f32 %v1029, %v1067
      %v1088 = vsub.f32 %v1034, %v1070
      %v1089 = vsub.f32 %v1039, %v1073
      %v1090 = vsub.f32 %v1044, %v1076
      %v1091 = vsub.f32 %v1049, %v1079
      %v1092 = vsub.f32 %v1054, %v1082
      %v1093 = vsub.f32 %v1059, %v1085
      %v1094 = vmul.f32 %v1086, 1.442695
      %v1095 = vpow.pop %v1094
      %v1096 = vmul.f32 %v1087, 1.442695
      %v1097 = vpow.pop %v1096
      %v1098 = vmul.f32 %v1088, 1.442695
      %v1099 = vpow.pop %v1098
      %v1100 = vmul.f32 %v1089, 1.442695
      %v1101 = vpow.pop %v1100
      %v1102 = vmul.f32 %v1090, 1.442695
      %v1103 = vpow.pop %v1102
      %v1104 = vmul.f32 %v1091, 1.442695
      %v1105 = vpow.pop %v1104
      %v1106 = vmul.f32 %v1092, 1.442695
      %v1107 = vpow.pop %v1106
      %v1108 = vmul.f32 %v1093, 1.442695
      %v1109 = vpow.pop %v1108
      %v1110 = vsel %vm675, %v1095, 0.0
      %1111 = vadd.xlane.f32.xlu0 %v1110
      %v1112 = vpop.xlane.xlu0 %1111
      %v1113 = vsel %vm675, %v1097, 0.0
      %1114 = vadd.xlane.f32.xlu0 %v1113
      %v1115 = vpop.xlane.xlu0 %1114
      %v1116 = vsel %vm675, %v1099, 0.0
      %1117 = vadd.xlane.f32.xlu0 %v1116
      %v1118 = vpop.xlane.xlu0 %1117
      %v1119 = vsel %vm675, %v1101, 0.0
      %1120 = vadd.xlane.f32.xlu0 %v1119
      %v1121 = vpop.xlane.xlu0 %1120
      %v1122 = vsel %vm675, %v1103, 0.0
      %1123 = vadd.xlane.f32.xlu0 %v1122
      %v1124 = vpop.xlane.xlu0 %1123
      %v1125 = vsel %vm675, %v1105, 0.0
      %1126 = vadd.xlane.f32.xlu0 %v1125
      %v1127 = vpop.xlane.xlu0 %1126
      %v1128 = vsel %vm675, %v1107, 0.0
      %1129 = vadd.xlane.f32.xlu0 %v1128
      %v1130 = vpop.xlane.xlu0 %1129
      %v1131 = vsel %vm675, %v1109, 0.0
      %1132 = vadd.xlane.f32.xlu0 %v1131
      %v1133 = vpop.xlane.xlu0 %1132
      %v1134 = vrcp.pop %v1112
      %v1135 = vrcp.pop %v1115
      %v1136 = vrcp.pop %v1118
      %v1137 = vrcp.pop %v1121
      %v1138 = vrcp.pop %v1124
      %v1139 = vrcp.pop %v1127
      %v1140 = vrcp.pop %v1130
      %v1141 = vrcp.pop %v1133
      %v1142 = vmul.f32 %v1095, %v1134
      %v1143 = vmul.f32 %v1097, %v1135
      %v1144 = vmul.f32 %v1099, %v1136
      %v1145 = vmul.f32 %v1101, %v1137
      %v1146 = vmul.f32 %v1103, %v1138
      %v1147 = vmul.f32 %v1105, %v1139
      %v1148 = vmul.f32 %v1107, %v1140
      %v1149 = vmul.f32 %v1109, %v1141
      %1158 = vrot.lane.b32.xlu0 %v397, 112
      %v1159 = vpop.permute.xlu0 %1158
      %1160 = vrot.lane.b32.xlu0 %v403, 112
      %v1161 = vpop.permute.xlu0 %1160
      %1162 = vrot.lane.b32.xlu0 %v409, 112
      %v1163 = vpop.permute.xlu0 %1162
      %1164 = vrot.lane.b32.xlu0 %v415, 112
      %v1165 = vpop.permute.xlu0 %1164
      %1166 = vrot.lane.b32.xlu0 %v421, 112
      %v1167 = vpop.permute.xlu0 %1166
      %1168 = vrot.lane.b32.xlu0 %v427, 112
      %v1169 = vpop.permute.xlu0 %1168
      %1170 = vrot.lane.b32.xlu0 %v433, 112
      %v1171 = vpop.permute.xlu0 %1170
      %1172 = vrot.lane.b32.xlu0 %v439, 112
      %v1173 = vpop.permute.xlu0 %1172
      %v1183 = vsel %vm675, %v1142, 0
      %v1186 = vsel %vm675, %v1143, 0
      %v1189 = vsel %vm675, %v1144, 0
      %v1192 = vsel %vm675, %v1145, 0
      %v1195 = vsel %vm675, %v1146, 0
      %v1198 = vsel %vm675, %v1147, 0
      %v1201 = vsel %vm675, %v1148, 0
      %v1204 = vsel %vm675, %v1149, 0
      %1206 = vmatprep.subr.mxu0 0.0
      %1207 = vmatpush1.msra.mxu0 %v1159
      %1208 = vmatprep.subr.mxu0 0.0
      %1209 = vmatpush1.msra.mxu0 %v1161
      %1210 = vmatprep.subr.mxu0 0.0
      %1211 = vmatpush1.msra.mxu0 %v1163
      %1212 = vmatprep.subr.mxu0 0.0
      %1213 = vmatpush1.msra.mxu0 %v1165
      %1214 = vmatprep.subr.mxu0 0.0
      %1215 = vmatpush1.msra.mxu0 %v1167
      %1216 = vmatprep.subr.mxu0 0.0
      %1217 = vmatpush1.msra.mxu0 %v1169
      %1218 = vmatprep.subr.mxu0 0.0
      %1219 = vmatpush1.msra.mxu0 %v1171
      %1220 = vmatprep.subr.mxu0 0.0
      %1221 = vmatpush1.msra.mxu0 %v1173
      %1222 = vmatprep.subr.mxu0 0.0
      %1223 = vmatpush1.msra.mxu0 0.0
      %1224 = vmatprep.subr.mxu0 0.0
      %1225 = vmatpush1.msra.mxu0 0.0
      %1226 = vmatprep.subr.mxu0 0.0
      %1227 = vmatpush1.msra.mxu0 0.0
      %1228 = vmatprep.subr.mxu0 0.0
      %1229 = vmatpush1.msra.mxu0 0.0
      %1230 = vmatprep.subr.mxu0 0.0
      %1231 = vmatpush1.msra.mxu0 0.0
      %1232 = vmatprep.subr.mxu0 0.0
      %1233 = vmatpush1.msra.mxu0 0.0
      %1234 = vmatprep.subr.mxu0 0.0
      %1235 = vmatpush1.msra.mxu0 0.0
      %1236 = vmatprep.subr.mxu0 0.0
      %1237 = vmatpush1.msra.mxu0 0.0
      %1238 = vmatprep.subr.mxu0 0.0
      %1239 = vmatpush1.msra.mxu0 0.0
      %1240 = vmatprep.subr.mxu0 0.0
      %1241 = vmatpush1.msra.mxu0 0.0
      %1242 = vmatprep.subr.mxu0 0.0
      %1243 = vmatpush1.msra.mxu0 0.0
      %1244 = vmatprep.subr.mxu0 0.0
      %1245 = vmatpush1.msra.mxu0 0.0
      %1246 = vmatprep.subr.mxu0 0.0
      %1247 = vmatpush1.msra.mxu0 0.0
      %1248 = vmatprep.subr.mxu0 0.0
      %1249 = vmatpush1.msra.mxu0 0.0
      %1250 = vmatprep.subr.mxu0 0.0
      %1251 = vmatpush1.msra.mxu0 0.0
      %1252 = vmatprep.subr.mxu0 0.0
      %1253 = vmatpush1.msra.mxu0 0.0
      %1254 = vmatprep.subr.mxu0 0.0
      %1255 = vmatpush1.msra.mxu0 0.0
      %1256 = vmatprep.subr.mxu0 0.0
      %1257 = vmatpush1.msra.mxu0 0.0
      %1258 = vmatprep.subr.mxu0 0.0
      %1259 = vmatpush1.msra.mxu0 0.0
      %1260 = vmatprep.subr.mxu0 0.0
      %1261 = vmatpush1.msra.mxu0 0.0
      %1262 = vmatprep.subr.mxu0 0.0
      %1263 = vmatpush1.msra.mxu0 0.0
      %1264 = vmatprep.subr.mxu0 0.0
      %1265 = vmatpush1.msra.mxu0 0.0
      %1266 = vmatprep.subr.mxu0 0.0
      %1267 = vmatpush1.msra.mxu0 0.0
      %1268 = vmatprep.subr.mxu0 0.0
      %1269 = vmatpush1.msra.mxu0 0.0
      %1270 = vmatprep.mubr.f32.mxu0 0.0
      %1271 = vmatmul.mubr.f32.gmra.mrb[0].mxu0 %v1183
      %v1272 = vpop.f32.mrb[0].mxu0
      %v1273 = vadd.f32 0.0, %v1272
      %v1274 = vpop.f32.mrb[0].mxu0
      %1275 = vmatprep.mubr.f32.mxu0 0.0
      %1276 = vmatmul.mubr.f32.gmra.mrb[0].mxu0 %v1186
      %v1277 = vpop.f32.mrb[0].mxu0
      %v1278 = vadd.f32 0.0, %v1277
      %v1279 = vpop.f32.mrb[0].mxu0
      %1280 = vmatprep.mubr.f32.mxu0 0.0
      %1281 = vmatmul.mubr.f32.gmra.mrb[0].mxu0 %v1189
      %v1282 = vpop.f32.mrb[0].mxu0
      %v1283 = vadd.f32 0.0, %v1282
      %v1284 = vpop.f32.mrb[0].mxu0
      %1285 = vmatprep.mubr.f32.mxu0 0.0
      %1286 = vmatmul.mubr.f32.gmra.mrb[0].mxu0 %v1192
      %v1287 = vpop.f32.mrb[0].mxu0
      %v1288 = vadd.f32 0.0, %v1287
      %v1289 = vpop.f32.mrb[0].mxu0
      %1290 = vmatprep.mubr.f32.mxu0 0.0
      %1291 = vmatmul.mubr.f32.gmra.mrb[0].mxu0 %v1195
      %v1292 = vpop.f32.mrb[0].mxu0
      %v1293 = vadd.f32 0.0, %v1292
      %v1294 = vpop.f32.mrb[0].mxu0
      %1295 = vmatprep.mubr.f32.mxu0 0.0
      %1296 = vmatmul.mubr.f32.gmra.mrb[0].mxu0 %v1198
      %v1297 = vpop.f32.mrb[0].mxu0
      %v1298 = vadd.f32 0.0, %v1297
      %v1299 = vpop.f32.mrb[0].mxu0
      %1300 = vmatprep.mubr.f32.mxu0 0.0
      %1301 = vmatmul.mubr.f32.gmra.mrb[0].mxu0 %v1201
      %v1302 = vpop.f32.mrb[0].mxu0
      %v1303 = vadd.f32 0.0, %v1302
      %v1304 = vpop.f32.mrb[0].mxu0
      %1305 = vmatprep.mubr.f32.mxu0 0.0
      %1306 = vmatmul.mubr.f32.gmra.mrb[0].mxu0 %v1204
      %v1307 = vpop.f32.mrb[0].mxu0
      %v1308 = vadd.f32 0.0, %v1307
      %v1309 = vpop.f32.mrb[0].mxu0
      %1310 = vdwg.mxu0
      %1311 = vrot.lane.b32.xlu0 %v489, 96
      %v1312 = vpop.permute.xlu0 %1311
      %1313 = vrot.lane.b32.xlu0 %v490, 96
      %v1314 = vpop.permute.xlu0 %1313
      %1315 = vrot.lane.b32.xlu0 %v491, 96
      %v1316 = vpop.permute.xlu0 %1315
      %1317 = vrot.lane.b32.xlu0 %v492, 96
      %v1318 = vpop.permute.xlu0 %1317
      %1319 = vrot.lane.b32.xlu0 %v493, 96
      %v1320 = vpop.permute.xlu0 %1319
      %1321 = vrot.lane.b32.xlu0 %v494, 96
      %v1322 = vpop.permute.xlu0 %1321
      %1323 = vrot.lane.b32.xlu0 %v495, 96
      %v1324 = vpop.permute.xlu0 %1323
      %1325 = vrot.lane.b32.xlu0 %v496, 96
      %v1326 = vpop.permute.xlu0 %1325
      %1327 = vrot.lane.b32.xlu0 %v395, 32
      %v1328 = vpop.permute.xlu0 %1327
      %1329 = vrot.lane.b32.xlu0 %v401, 32
      %v1330 = vpop.permute.xlu0 %1329
      %1331 = vrot.lane.b32.xlu0 %v407, 32
      %v1332 = vpop.permute.xlu0 %1331
      %1333 = vrot.lane.b32.xlu0 %v413, 32
      %v1334 = vpop.permute.xlu0 %1333
      %1335 = vrot.lane.b32.xlu0 %v419, 32
      %v1336 = vpop.permute.xlu0 %1335
      %1337 = vrot.lane.b32.xlu0 %v425, 32
      %v1338 = vpop.permute.xlu0 %1337
      %1339 = vrot.lane.b32.xlu0 %v431, 32
      %v1340 = vpop.permute.xlu0 %1339
      %1341 = vrot.lane.b32.xlu0 %v437, 32
      %v1342 = vpop.permute.xlu0 %1341
      %v1343 = vsel %vm529, %v1312, 0
      %v1345 = vsel %vm529, %v1314, 0
      %v1347 = vsel %vm529, %v1316, 0
      %v1349 = vsel %vm529, %v1318, 0
      %v1351 = vsel %vm529, %v1320, 0
      %v1353 = vsel %vm529, %v1322, 0
      %v1355 = vsel %vm529, %v1324, 0
      %v1357 = vsel %vm529, %v1326, 0
      %v1359 = vsel %vm529, %v1328, 0
      %v1361 = vsel %vm529, %v1330, 0
      %v1363 = vsel %vm529, %v1332, 0
      %v1365 = vsel %vm529, %v1334, 0
      %v1367 = vsel %vm529, %v1336, 0
      %v1369 = vsel %vm529, %v1338, 0
      %v1371 = vsel %vm529, %v1340, 0
      %v1373 = vsel %vm529, %v1342, 0
      %1375 = vmatprep.subr.mxu0 0.0
      %1376 = vmatpush1.xpose.msra.mxu0 %v1359
      %1377 = vmatprep.subr.mxu0 0.0
      %1378 = vmatpush1.xpose.msra.mxu0 %v1361
      %1379 = vmatprep.subr.mxu0 0.0
      %1380 = vmatpush1.xpose.msra.mxu0 %v1363
      %1381 = vmatprep.subr.mxu0 0.0
      %1382 = vmatpush1.xpose.msra.mxu0 %v1365
      %1383 = vmatprep.subr.mxu0 0.0
      %1384 = vmatpush1.xpose.msra.mxu0 %v1367
      %1385 = vmatprep.subr.mxu0 0.0
      %1386 = vmatpush1.xpose.msra.mxu0 %v1369
      %1387 = vmatprep.subr.mxu0 0.0
      %1388 = vmatpush1.xpose.msra.mxu0 %v1371
      %1389 = vmatprep.subr.mxu0 0.0
      %1390 = vmatpush1.xpose.msra.mxu0 %v1373
      %1391 = vmatprep.subr.mxu0 0.0
      %1392 = vmatpush1.xpose.msra.mxu0 0.0
      %1393 = vmatprep.subr.mxu0 0.0
      %1394 = vmatpush1.xpose.msra.mxu0 0.0
      %1395 = vmatprep.subr.mxu0 0.0
      %1396 = vmatpush1.xpose.msra.mxu0 0.0
      %1397 = vmatprep.subr.mxu0 0.0
      %1398 = vmatpush1.xpose.msra.mxu0 0.0
      %1399 = vmatprep.subr.mxu0 0.0
      %1400 = vmatpush1.xpose.msra.mxu0 0.0
      %1401 = vmatprep.subr.mxu0 0.0
      %1402 = vmatpush1.xpose.msra.mxu0 0.0
      %1403 = vmatprep.subr.mxu0 0.0
      %1404 = vmatpush1.xpose.msra.mxu0 0.0
      %1405 = vmatprep.subr.mxu0 0.0
      %1406 = vmatpush1.xpose.msra.mxu0 0.0
      %1407 = vmatprep.subr.mxu0 0.0
      %1408 = vmatpush1.xpose.msra.mxu0 0.0
      %1409 = vmatprep.subr.mxu0 0.0
      %1410 = vmatpush1.xpose.msra.mxu0 0.0
      %1411 = vmatprep.subr.mxu0 0.0
      %1412 = vmatpush1.xpose.msra.mxu0 0.0
      %1413 = vmatprep.subr.mxu0 0.0
      %1414 = vmatpush1.xpose.msra.mxu0 0.0
      %1415 = vmatprep.subr.mxu0 0.0
      %1416 = vmatpush1.xpose.msra.mxu0 0.0
      %1417 = vmatprep.subr.mxu0 0.0
      %1418 = vmatpush1.xpose.msra.mxu0 0.0
      %1419 = vmatprep.subr.mxu0 0.0
      %1420 = vmatpush1.xpose.msra.mxu0 0.0
      %1421 = vmatprep.subr.mxu0 0.0
      %1422 = vmatpush1.xpose.msra.mxu0 0.0
      %1423 = vmatprep.subr.mxu0 0.0
      %1424 = vmatpush1.xpose.msra.mxu0 0.0
      %1425 = vmatprep.subr.mxu0 0.0
      %1426 = vmatpush1.xpose.msra.mxu0 0.0
      %1427 = vmatprep.subr.mxu0 0.0
      %1428 = vmatpush1.xpose.msra.mxu0 0.0
      %1429 = vmatprep.subr.mxu0 0.0
      %1430 = vmatpush1.xpose.msra.mxu0 0.0
      %1431 = vmatprep.subr.mxu0 0.0
      %1432 = vmatpush1.xpose.msra.mxu0 0.0
      %1433 = vmatprep.subr.mxu0 0.0
      %1434 = vmatpush1.xpose.msra.mxu0 0.0
      %1435 = vmatprep.subr.mxu0 0.0
      %1436 = vmatpush1.xpose.msra.mxu0 0.0
      %1437 = vmatprep.subr.mxu0 0.0
      %1438 = vmatpush1.xpose.msra.mxu0 0.0
      %1439 = vmatprep.mubr.f32.mxu0 0.0
      %1440 = vmatmul.mubr.f32.gmra.mrb[0].mxu0 %v1343
      %v1441 = vpop.f32.mrb[0].mxu0
      %v1442 = vadd.f32 0.0, %v1441
      %v1443 = vpop.f32.mrb[0].mxu0
      %1444 = vmatprep.mubr.f32.mxu0 0.0
      %1445 = vmatmul.mubr.f32.gmra.mrb[0].mxu0 %v1345
      %v1446 = vpop.f32.mrb[0].mxu0
      %v1447 = vadd.f32 0.0, %v1446
      %v1448 = vpop.f32.mrb[0].mxu0
      %1449 = vmatprep.mubr.f32.mxu0 0.0
      %1450 = vmatmul.mubr.f32.gmra.mrb[0].mxu0 %v1347
      %v1451 = vpop.f32.mrb[0].mxu0
      %v1452 = vadd.f32 0.0, %v1451
      %v1453 = vpop.f32.mrb[0].mxu0
      %1454 = vmatprep.mubr.f32.mxu0 0.0
      %1455 = vmatmul.mubr.f32.gmra.mrb[0].mxu0 %v1349
      %v1456 = vpop.f32.mrb[0].mxu0
      %v1457 = vadd.f32 0.0, %v1456
      %v1458 = vpop.f32.mrb[0].mxu0
      %1459 = vmatprep.mubr.f32.mxu0 0.0
      %1460 = vmatmul.mubr.f32.gmra.mrb[0].mxu0 %v1351
      %v1461 = vpop.f32.mrb[0].mxu0
      %v1462 = vadd.f32 0.0, %v1461
      %v1463 = vpop.f32.mrb[0].mxu0
      %1464 = vmatprep.mubr.f32.mxu0 0.0
      %1465 = vmatmul.mubr.f32.gmra.mrb[0].mxu0 %v1353
      %v1466 = vpop.f32.mrb[0].mxu0
      %v1467 = vadd.f32 0.0, %v1466
      %v1468 = vpop.f32.mrb[0].mxu0
      %1469 = vmatprep.mubr.f32.mxu0 0.0
      %1470 = vmatmul.mubr.f32.gmra.mrb[0].mxu0 %v1355
      %v1471 = vpop.f32.mrb[0].mxu0
      %v1472 = vadd.f32 0.0, %v1471
      %v1473 = vpop.f32.mrb[0].mxu0
      %1474 = vmatprep.mubr.f32.mxu0 0.0
      %1475 = vmatmul.mubr.f32.gmra.mrb[0].mxu0 %v1357
      %v1476 = vpop.f32.mrb[0].mxu0
      %v1477 = vadd.f32 0.0, %v1476
      %v1478 = vpop.f32.mrb[0].mxu0
      %1479 = vdwg.mxu0
      %v1480 = vsel %vm675, %v1442, -inf
      %1481 = vmax.xlane.f32.xlu0 %v1480
      %v1482 = vpop.xlane.xlu0 %1481
      %v1483 = vsel %vm675, %v1447, -inf
      %1484 = vmax.xlane.f32.xlu0 %v1483
      %v1485 = vpop.xlane.xlu0 %1484
      %v1486 = vsel %vm675, %v1452, -inf
      %1487 = vmax.xlane.f32.xlu0 %v1486
      %v1488 = vpop.xlane.xlu0 %1487
      %v1489 = vsel %vm675, %v1457, -inf
      %1490 = vmax.xlane.f32.xlu0 %v1489
      %v1491 = vpop.xlane.xlu0 %1490
      %v1492 = vsel %vm675, %v1462, -inf
      %1493 = vmax.xlane.f32.xlu0 %v1492
      %v1494 = vpop.xlane.xlu0 %1493
      %v1495 = vsel %vm675, %v1467, -inf
      %1496 = vmax.xlane.f32.xlu0 %v1495
      %v1497 = vpop.xlane.xlu0 %1496
      %v1498 = vsel %vm675, %v1472, -inf
      %1499 = vmax.xlane.f32.xlu0 %v1498
      %v1500 = vpop.xlane.xlu0 %1499
      %v1501 = vsel %vm675, %v1477, -inf
      %1502 = vmax.xlane.f32.xlu0 %v1501
      %v1503 = vpop.xlane.xlu0 %1502
      %v1504 = vsub.f32 %v1442, %v1482
      %v1505 = vsub.f32 %v1447, %v1485
      %v1506 = vsub.f32 %v1452, %v1488
      %v1507 = vsub.f32 %v1457, %v1491
      %v1508 = vsub.f32 %v1462, %v1494
      %v1509 = vsub.f32 %v1467, %v1497
      %v1510 = vsub.f32 %v1472, %v1500
      %v1511 = vsub.f32 %v1477, %v1503
      %v1512 = vmul.f32 %v1504, 1.442695
      %v1513 = vpow.pop %v1512
      %v1514 = vmul.f32 %v1505, 1.442695
      %v1515 = vpow.pop %v1514
      %v1516 = vmul.f32 %v1506, 1.442695
      %v1517 = vpow.pop %v1516
      %v1518 = vmul.f32 %v1507, 1.442695
      %v1519 = vpow.pop %v1518
      %v1520 = vmul.f32 %v1508, 1.442695
      %v1521 = vpow.pop %v1520
      %v1522 = vmul.f32 %v1509, 1.442695
      %v1523 = vpow.pop %v1522
      %v1524 = vmul.f32 %v1510, 1.442695
      %v1525 = vpow.pop %v1524
      %v1526 = vmul.f32 %v1511, 1.442695
      %v1527 = vpow.pop %v1526
      %v1528 = vsel %vm675, %v1513, 0.0
      %1529 = vadd.xlane.f32.xlu0 %v1528
      %v1530 = vpop.xlane.xlu0 %1529
      %v1531 = vsel %vm675, %v1515, 0.0
      %1532 = vadd.xlane.f32.xlu0 %v1531
      %v1533 = vpop.xlane.xlu0 %1532
      %v1534 = vsel %vm675, %v1517, 0.0
      %1535 = vadd.xlane.f32.xlu0 %v1534
      %v1536 = vpop.xlane.xlu0 %1535
      %v1537 = vsel %vm675, %v1519, 0.0
      %1538 = vadd.xlane.f32.xlu0 %v1537
      %v1539 = vpop.xlane.xlu0 %1538
      %v1540 = vsel %vm675, %v1521, 0.0
      %1541 = vadd.xlane.f32.xlu0 %v1540
      %v1542 = vpop.xlane.xlu0 %1541
      %v1543 = vsel %vm675, %v1523, 0.0
      %1544 = vadd.xlane.f32.xlu0 %v1543
      %v1545 = vpop.xlane.xlu0 %1544
      %v1546 = vsel %vm675, %v1525, 0.0
      %1547 = vadd.xlane.f32.xlu0 %v1546
      %v1548 = vpop.xlane.xlu0 %1547
      %v1549 = vsel %vm675, %v1527, 0.0
      %1550 = vadd.xlane.f32.xlu0 %v1549
      %v1551 = vpop.xlane.xlu0 %1550
      %v1552 = vrcp.pop %v1530
      %v1553 = vrcp.pop %v1533
      %v1554 = vrcp.pop %v1536
      %v1555 = vrcp.pop %v1539
      %v1556 = vrcp.pop %v1542
      %v1557 = vrcp.pop %v1545
      %v1558 = vrcp.pop %v1548
      %v1559 = vrcp.pop %v1551
      %v1560 = vmul.f32 %v1513, %v1552
      %v1561 = vmul.f32 %v1515, %v1553
      %v1562 = vmul.f32 %v1517, %v1554
      %v1563 = vmul.f32 %v1519, %v1555
      %v1564 = vmul.f32 %v1521, %v1556
      %v1565 = vmul.f32 %v1523, %v1557
      %v1566 = vmul.f32 %v1525, %v1558
      %v1567 = vmul.f32 %v1527, %v1559
      %1568 = vrot.lane.b32.xlu0 %v397, 96
      %v1569 = vpop.permute.xlu0 %1568
      %1570 = vrot.lane.b32.xlu0 %v403, 96
      %v1571 = vpop.permute.xlu0 %1570
      %1572 = vrot.lane.b32.xlu0 %v409, 96
      %v1573 = vpop.permute.xlu0 %1572
      %1574 = vrot.lane.b32.xlu0 %v415, 96
      %v1575 = vpop.permute.xlu0 %1574
      %1576 = vrot.lane.b32.xlu0 %v421, 96
      %v1577 = vpop.permute.xlu0 %1576
      %1578 = vrot.lane.b32.xlu0 %v427, 96
      %v1579 = vpop.permute.xlu0 %1578
      %1580 = vrot.lane.b32.xlu0 %v433, 96
      %v1581 = vpop.permute.xlu0 %1580
      %1582 = vrot.lane.b32.xlu0 %v439, 96
      %v1583 = vpop.permute.xlu0 %1582
      %v1593 = vsel %vm675, %v1560, 0
      %v1596 = vsel %vm675, %v1561, 0
      %v1599 = vsel %vm675, %v1562, 0
      %v1602 = vsel %vm675, %v1563, 0
      %v1605 = vsel %vm675, %v1564, 0
      %v1608 = vsel %vm675, %v1565, 0
      %v1611 = vsel %vm675, %v1566, 0
      %v1614 = vsel %vm675, %v1567, 0
      %1616 = vmatprep.subr.mxu0 0.0
      %1617 = vmatpush1.msra.mxu0 %v1569
      %1618 = vmatprep.subr.mxu0 0.0
      %1619 = vmatpush1.msra.mxu0 %v1571
      %1620 = vmatprep.subr.mxu0 0.0
      %1621 = vmatpush1.msra.mxu0 %v1573
      %1622 = vmatprep.subr.mxu0 0.0
      %1623 = vmatpush1.msra.mxu0 %v1575
      %1624 = vmatprep.subr.mxu0 0.0
      %1625 = vmatpush1.msra.mxu0 %v1577
      %1626 = vmatprep.subr.mxu0 0.0
      %1627 = vmatpush1.msra.mxu0 %v1579
      %1628 = vmatprep.subr.mxu0 0.0
      %1629 = vmatpush1.msra.mxu0 %v1581
      %1630 = vmatprep.subr.mxu0 0.0
      %1631 = vmatpush1.msra.mxu0 %v1583
      %1632 = vmatprep.subr.mxu0 0.0
      %1633 = vmatpush1.msra.mxu0 0.0
      %1634 = vmatprep.subr.mxu0 0.0
      %1635 = vmatpush1.msra.mxu0 0.0
      %1636 = vmatprep.subr.mxu0 0.0
      %1637 = vmatpush1.msra.mxu0 0.0
      %1638 = vmatprep.subr.mxu0 0.0
      %1639 = vmatpush1.msra.mxu0 0.0
      %1640 = vmatprep.subr.mxu0 0.0
      %1641 = vmatpush1.msra.mxu0 0.0
      %1642 = vmatprep.subr.mxu0 0.0
      %1643 = vmatpush1.msra.mxu0 0.0
      %1644 = vmatprep.subr.mxu0 0.0
      %1645 = vmatpush1.msra.mxu0 0.0
      %1646 = vmatprep.subr.mxu0 0.0
      %1647 = vmatpush1.msra.mxu0 0.0
      %1648 = vmatprep.subr.mxu0 0.0
      %1649 = vmatpush1.msra.mxu0 0.0
      %1650 = vmatprep.subr.mxu0 0.0
      %1651 = vmatpush1.msra.mxu0 0.0
      %1652 = vmatprep.subr.mxu0 0.0
      %1653 = vmatpush1.msra.mxu0 0.0
      %1654 = vmatprep.subr.mxu0 0.0
      %1655 = vmatpush1.msra.mxu0 0.0
      %1656 = vmatprep.subr.mxu0 0.0
      %1657 = vmatpush1.msra.mxu0 0.0
      %1658 = vmatprep.subr.mxu0 0.0
      %1659 = vmatpush1.msra.mxu0 0.0
      %1660 = vmatprep.subr.mxu0 0.0
      %1661 = vmatpush1.msra.mxu0 0.0
      %1662 = vmatprep.subr.mxu0 0.0
      %1663 = vmatpush1.msra.mxu0 0.0
      %1664 = vmatprep.subr.mxu0 0.0
      %1665 = vmatpush1.msra.mxu0 0.0
      %1666 = vmatprep.subr.mxu0 0.0
      %1667 = vmatpush1.msra.mxu0 0.0
      %1668 = vmatprep.subr.mxu0 0.0
      %1669 = vmatpush1.msra.mxu0 0.0
      %1670 = vmatprep.subr.mxu0 0.0
      %1671 = vmatpush1.msra.mxu0 0.0
      %1672 = vmatprep.subr.mxu0 0.0
      %1673 = vmatpush1.msra.mxu0 0.0
      %1674 = vmatprep.subr.mxu0 0.0
      %1675 = vmatpush1.msra.mxu0 0.0
      %1676 = vmatprep.subr.mxu0 0.0
      %1677 = vmatpush1.msra.mxu0 0.0
      %1678 = vmatprep.subr.mxu0 0.0
      %1679 = vmatpush1.msra.mxu0 0.0
      %1680 = vmatprep.mubr.f32.mxu0 0.0
      %1681 = vmatmul.mubr.f32.gmra.mrb[0].mxu0 %v1593
      %v1682 = vpop.f32.mrb[0].mxu0
      %v1683 = vadd.f32 0.0, %v1682
      %v1684 = vpop.f32.mrb[0].mxu0
      %1685 = vmatprep.mubr.f32.mxu0 0.0
      %1686 = vmatmul.mubr.f32.gmra.mrb[0].mxu0 %v1596
      %v1687 = vpop.f32.mrb[0].mxu0
      %v1688 = vadd.f32 0.0, %v1687
      %v1689 = vpop.f32.mrb[0].mxu0
      %1690 = vmatprep.mubr.f32.mxu0 0.0
      %1691 = vmatmul.mubr.f32.gmra.mrb[0].mxu0 %v1599
      %v1692 = vpop.f32.mrb[0].mxu0
      %v1693 = vadd.f32 0.0, %v1692
      %v1694 = vpop.f32.mrb[0].mxu0
      %1695 = vmatprep.mubr.f32.mxu0 0.0
      %1696 = vmatmul.mubr.f32.gmra.mrb[0].mxu0 %v1602
      %v1697 = vpop.f32.mrb[0].mxu0
      %v1698 = vadd.f32 0.0, %v1697
      %v1699 = vpop.f32.mrb[0].mxu0
      %1700 = vmatprep.mubr.f32.mxu0 0.0
      %1701 = vmatmul.mubr.f32.gmra.mrb[0].mxu0 %v1605
      %v1702 = vpop.f32.mrb[0].mxu0
      %v1703 = vadd.f32 0.0, %v1702
      %v1704 = vpop.f32.mrb[0].mxu0
      %1705 = vmatprep.mubr.f32.mxu0 0.0
      %1706 = vmatmul.mubr.f32.gmra.mrb[0].mxu0 %v1608
      %v1707 = vpop.f32.mrb[0].mxu0
      %v1708 = vadd.f32 0.0, %v1707
      %v1709 = vpop.f32.mrb[0].mxu0
      %1710 = vmatprep.mubr.f32.mxu0 0.0
      %1711 = vmatmul.mubr.f32.gmra.mrb[0].mxu0 %v1611
      %v1712 = vpop.f32.mrb[0].mxu0
      %v1713 = vadd.f32 0.0, %v1712
      %v1714 = vpop.f32.mrb[0].mxu0
      %1715 = vmatprep.mubr.f32.mxu0 0.0
      %1716 = vmatmul.mubr.f32.gmra.mrb[0].mxu0 %v1614
      %v1717 = vpop.f32.mrb[0].mxu0
      %v1718 = vadd.f32 0.0, %v1717
      %v1719 = vpop.f32.mrb[0].mxu0
      %1720 = vdwg.mxu0
      %1721 = vrot.lane.b32.xlu0 %v489, 80
      %v1722 = vpop.permute.xlu0 %1721
      %1723 = vrot.lane.b32.xlu0 %v490, 80
      %v1724 = vpop.permute.xlu0 %1723
      %1725 = vrot.lane.b32.xlu0 %v491, 80
      %v1726 = vpop.permute.xlu0 %1725
      %1727 = vrot.lane.b32.xlu0 %v492, 80
      %v1728 = vpop.permute.xlu0 %1727
      %1729 = vrot.lane.b32.xlu0 %v493, 80
      %v1730 = vpop.permute.xlu0 %1729
      %1731 = vrot.lane.b32.xlu0 %v494, 80
      %v1732 = vpop.permute.xlu0 %1731
      %1733 = vrot.lane.b32.xlu0 %v495, 80
      %v1734 = vpop.permute.xlu0 %1733
      %1735 = vrot.lane.b32.xlu0 %v496, 80
      %v1736 = vpop.permute.xlu0 %1735
      %1737 = vrot.lane.b32.xlu0 %v395, 16
      %v1738 = vpop.permute.xlu0 %1737
      %1739 = vrot.lane.b32.xlu0 %v401, 16
      %v1740 = vpop.permute.xlu0 %1739
      %1741 = vrot.lane.b32.xlu0 %v407, 16
      %v1742 = vpop.permute.xlu0 %1741
      %1743 = vrot.lane.b32.xlu0 %v413, 16
      %v1744 = vpop.permute.xlu0 %1743
      %1745 = vrot.lane.b32.xlu0 %v419, 16
      %v1746 = vpop.permute.xlu0 %1745
      %1747 = vrot.lane.b32.xlu0 %v425, 16
      %v1748 = vpop.permute.xlu0 %1747
      %1749 = vrot.lane.b32.xlu0 %v431, 16
      %v1750 = vpop.permute.xlu0 %1749
      %1751 = vrot.lane.b32.xlu0 %v437, 16
      %v1752 = vpop.permute.xlu0 %1751
      %v1753 = vsel %vm529, %v1722, 0
      %v1755 = vsel %vm529, %v1724, 0
      %v1757 = vsel %vm529, %v1726, 0
      %v1759 = vsel %vm529, %v1728, 0
      %v1761 = vsel %vm529, %v1730, 0
      %v1763 = vsel %vm529, %v1732, 0
      %v1765 = vsel %vm529, %v1734, 0
      %v1767 = vsel %vm529, %v1736, 0
      %v1769 = vsel %vm529, %v1738, 0
      %v1771 = vsel %vm529, %v1740, 0
      %v1773 = vsel %vm529, %v1742, 0
      %v1775 = vsel %vm529, %v1744, 0
      %v1777 = vsel %vm529, %v1746, 0
      %v1779 = vsel %vm529, %v1748, 0
      %v1781 = vsel %vm529, %v1750, 0
      %v1783 = vsel %vm529, %v1752, 0
      %1785 = vmatprep.subr.mxu0 0.0
      %1786 = vmatpush1.xpose.msra.mxu0 %v1769
      %1787 = vmatprep.subr.mxu0 0.0
      %1788 = vmatpush1.xpose.msra.mxu0 %v1771
      %1789 = vmatprep.subr.mxu0 0.0
      %1790 = vmatpush1.xpose.msra.mxu0 %v1773
      %1791 = vmatprep.subr.mxu0 0.0
      %1792 = vmatpush1.xpose.msra.mxu0 %v1775
      %1793 = vmatprep.subr.mxu0 0.0
      %1794 = vmatpush1.xpose.msra.mxu0 %v1777
      %1795 = vmatprep.subr.mxu0 0.0
      %1796 = vmatpush1.xpose.msra.mxu0 %v1779
      %1797 = vmatprep.subr.mxu0 0.0
      %1798 = vmatpush1.xpose.msra.mxu0 %v1781
      %1799 = vmatprep.subr.mxu0 0.0
      %1800 = vmatpush1.xpose.msra.mxu0 %v1783
      %1801 = vmatprep.subr.mxu0 0.0
      %1802 = vmatpush1.xpose.msra.mxu0 0.0
      %1803 = vmatprep.subr.mxu0 0.0
      %1804 = vmatpush1.xpose.msra.mxu0 0.0
      %1805 = vmatprep.subr.mxu0 0.0
      %1806 = vmatpush1.xpose.msra.mxu0 0.0
      %1807 = vmatprep.subr.mxu0 0.0
      %1808 = vmatpush1.xpose.msra.mxu0 0.0
      %1809 = vmatprep.subr.mxu0 0.0
      %1810 = vmatpush1.xpose.msra.mxu0 0.0
      %1811 = vmatprep.subr.mxu0 0.0
      %1812 = vmatpush1.xpose.msra.mxu0 0.0
      %1813 = vmatprep.subr.mxu0 0.0
      %1814 = vmatpush1.xpose.msra.mxu0 0.0
      %1815 = vmatprep.subr.mxu0 0.0
      %1816 = vmatpush1.xpose.msra.mxu0 0.0
      %1817 = vmatprep.subr.mxu0 0.0
      %1818 = vmatpush1.xpose.msra.mxu0 0.0
      %1819 = vmatprep.subr.mxu0 0.0
      %1820 = vmatpush1.xpose.msra.mxu0 0.0
      %1821 = vmatprep.subr.mxu0 0.0
      %1822 = vmatpush1.xpose.msra.mxu0 0.0
      %1823 = vmatprep.subr.mxu0 0.0
      %1824 = vmatpush1.xpose.msra.mxu0 0.0
      %1825 = vmatprep.subr.mxu0 0.0
      %1826 = vmatpush1.xpose.msra.mxu0 0.0
      %1827 = vmatprep.subr.mxu0 0.0
      %1828 = vmatpush1.xpose.msra.mxu0 0.0
      %1829 = vmatprep.subr.mxu0 0.0
      %1830 = vmatpush1.xpose.msra.mxu0 0.0
      %1831 = vmatprep.subr.mxu0 0.0
      %1832 = vmatpush1.xpose.msra.mxu0 0.0
      %1833 = vmatprep.subr.mxu0 0.0
      %1834 = vmatpush1.xpose.msra.mxu0 0.0
      %1835 = vmatprep.subr.mxu0 0.0
      %1836 = vmatpush1.xpose.msra.mxu0 0.0
      %1837 = vmatprep.subr.mxu0 0.0
      %1838 = vmatpush1.xpose.msra.mxu0 0.0
      %1839 = vmatprep.subr.mxu0 0.0
      %1840 = vmatpush1.xpose.msra.mxu0 0.0
      %1841 = vmatprep.subr.mxu0 0.0
      %1842 = vmatpush1.xpose.msra.mxu0 0.0
      %1843 = vmatprep.subr.mxu0 0.0
      %1844 = vmatpush1.xpose.msra.mxu0 0.0
      %1845 = vmatprep.subr.mxu0 0.0
      %1846 = vmatpush1.xpose.msra.mxu0 0.0
      %1847 = vmatprep.subr.mxu0 0.0
      %1848 = vmatpush1.xpose.msra.mxu0 0.0
      %1849 = vmatprep.mubr.f32.mxu0 0.0
      %1850 = vmatmul.mubr.f32.gmra.mrb[0].mxu0 %v1753
      %v1851 = vpop.f32.mrb[0].mxu0
      %v1852 = vadd.f32 0.0, %v1851
      %v1853 = vpop.f32.mrb[0].mxu0
      %1854 = vmatprep.mubr.f32.mxu0 0.0
      %1855 = vmatmul.mubr.f32.gmra.mrb[0].mxu0 %v1755
      %v1856 = vpop.f32.mrb[0].mxu0
      %v1857 = vadd.f32 0.0, %v1856
      %v1858 = vpop.f32.mrb[0].mxu0
      %1859 = vmatprep.mubr.f32.mxu0 0.0
      %1860 = vmatmul.mubr.f32.gmra.mrb[0].mxu0 %v1757
      %v1861 = vpop.f32.mrb[0].mxu0
      %v1862 = vadd.f32 0.0, %v1861
      %v1863 = vpop.f32.mrb[0].mxu0
      %1864 = vmatprep.mubr.f32.mxu0 0.0
      %1865 = vmatmul.mubr.f32.gmra.mrb[0].mxu0 %v1759
      %v1866 = vpop.f32.mrb[0].mxu0
      %v1867 = vadd.f32 0.0, %v1866
      %v1868 = vpop.f32.mrb[0].mxu0
      %1869 = vmatprep.mubr.f32.mxu0 0.0
      %1870 = vmatmul.mubr.f32.gmra.mrb[0].mxu0 %v1761
      %v1871 = vpop.f32.mrb[0].mxu0
      %v1872 = vadd.f32 0.0, %v1871
      %v1873 = vpop.f32.mrb[0].mxu0
      %1874 = vmatprep.mubr.f32.mxu0 0.0
      %1875 = vmatmul.mubr.f32.gmra.mrb[0].mxu0 %v1763
      %v1876 = vpop.f32.mrb[0].mxu0
      %v1877 = vadd.f32 0.0, %v1876
      %v1878 = vpop.f32.mrb[0].mxu0
      %1879 = vmatprep.mubr.f32.mxu0 0.0
      %1880 = vmatmul.mubr.f32.gmra.mrb[0].mxu0 %v1765
      %v1881 = vpop.f32.mrb[0].mxu0
      %v1882 = vadd.f32 0.0, %v1881
      %v1883 = vpop.f32.mrb[0].mxu0
      %1884 = vmatprep.mubr.f32.mxu0 0.0
      %1885 = vmatmul.mubr.f32.gmra.mrb[0].mxu0 %v1767
      %v1886 = vpop.f32.mrb[0].mxu0
      %v1887 = vadd.f32 0.0, %v1886
      %v1888 = vpop.f32.mrb[0].mxu0
      %1889 = vdwg.mxu0
      %v1890 = vsel %vm675, %v1852, -inf
      %1891 = vmax.xlane.f32.xlu0 %v1890
      %v1892 = vpop.xlane.xlu0 %1891
      %v1893 = vsel %vm675, %v1857, -inf
      %1894 = vmax.xlane.f32.xlu0 %v1893
      %v1895 = vpop.xlane.xlu0 %1894
      %v1896 = vsel %vm675, %v1862, -inf
      %1897 = vmax.xlane.f32.xlu0 %v1896
      %v1898 = vpop.xlane.xlu0 %1897
      %v1899 = vsel %vm675, %v1867, -inf
      %1900 = vmax.xlane.f32.xlu0 %v1899
      %v1901 = vpop.xlane.xlu0 %1900
      %v1902 = vsel %vm675, %v1872, -inf
      %1903 = vmax.xlane.f32.xlu0 %v1902
      %v1904 = vpop.xlane.xlu0 %1903
      %v1905 = vsel %vm675, %v1877, -inf
      %1906 = vmax.xlane.f32.xlu0 %v1905
      %v1907 = vpop.xlane.xlu0 %1906
      %v1908 = vsel %vm675, %v1882, -inf
      %1909 = vmax.xlane.f32.xlu0 %v1908
      %v1910 = vpop.xlane.xlu0 %1909
      %v1911 = vsel %vm675, %v1887, -inf
      %1912 = vmax.xlane.f32.xlu0 %v1911
      %v1913 = vpop.xlane.xlu0 %1912
      %v1914 = vsub.f32 %v1852, %v1892
      %v1915 = vsub.f32 %v1857, %v1895
      %v1916 = vsub.f32 %v1862, %v1898
      %v1917 = vsub.f32 %v1867, %v1901
      %v1918 = vsub.f32 %v1872, %v1904
      %v1919 = vsub.f32 %v1877, %v1907
      %v1920 = vsub.f32 %v1882, %v1910
      %v1921 = vsub.f32 %v1887, %v1913
      %v1922 = vmul.f32 %v1914, 1.442695
      %v1923 = vpow.pop %v1922
      %v1924 = vmul.f32 %v1915, 1.442695
      %v1925 = vpow.pop %v1924
      %v1926 = vmul.f32 %v1916, 1.442695
      %v1927 = vpow.pop %v1926
      %v1928 = vmul.f32 %v1917, 1.442695
      %v1929 = vpow.pop %v1928
      %v1930 = vmul.f32 %v1918, 1.442695
      %v1931 = vpow.pop %v1930
      %v1932 = vmul.f32 %v1919, 1.442695
      %v1933 = vpow.pop %v1932
      %v1934 = vmul.f32 %v1920, 1.442695
      %v1935 = vpow.pop %v1934
      %v1936 = vmul.f32 %v1921, 1.442695
      %v1937 = vpow.pop %v1936
      %v1938 = vsel %vm675, %v1923, 0.0
      %1939 = vadd.xlane.f32.xlu0 %v1938
      %v1940 = vpop.xlane.xlu0 %1939
      %v1941 = vsel %vm675, %v1925, 0.0
      %1942 = vadd.xlane.f32.xlu0 %v1941
      %v1943 = vpop.xlane.xlu0 %1942
      %v1944 = vsel %vm675, %v1927, 0.0
      %1945 = vadd.xlane.f32.xlu0 %v1944
      %v1946 = vpop.xlane.xlu0 %1945
      %v1947 = vsel %vm675, %v1929, 0.0
      %1948 = vadd.xlane.f32.xlu0 %v1947
      %v1949 = vpop.xlane.xlu0 %1948
      %v1950 = vsel %vm675, %v1931, 0.0
      %1951 = vadd.xlane.f32.xlu0 %v1950
      %v1952 = vpop.xlane.xlu0 %1951
      %v1953 = vsel %vm675, %v1933, 0.0
      %1954 = vadd.xlane.f32.xlu0 %v1953
      %v1955 = vpop.xlane.xlu0 %1954
      %v1956 = vsel %vm675, %v1935, 0.0
      %1957 = vadd.xlane.f32.xlu0 %v1956
      %v1958 = vpop.xlane.xlu0 %1957
      %v1959 = vsel %vm675, %v1937, 0.0
      %1960 = vadd.xlane.f32.xlu0 %v1959
      %v1961 = vpop.xlane.xlu0 %1960
      %v1962 = vrcp.pop %v1940
      %v1963 = vrcp.pop %v1943
      %v1964 = vrcp.pop %v1946
      %v1965 = vrcp.pop %v1949
      %v1966 = vrcp.pop %v1952
      %v1967 = vrcp.pop %v1955
      %v1968 = vrcp.pop %v1958
      %v1969 = vrcp.pop %v1961
      %v1970 = vmul.f32 %v1923, %v1962
      %v1971 = vmul.f32 %v1925, %v1963
      %v1972 = vmul.f32 %v1927, %v1964
      %v1973 = vmul.f32 %v1929, %v1965
      %v1974 = vmul.f32 %v1931, %v1966
      %v1975 = vmul.f32 %v1933, %v1967
      %v1976 = vmul.f32 %v1935, %v1968
      %v1977 = vmul.f32 %v1937, %v1969
      %1978 = vrot.lane.b32.xlu0 %v397, 80
      %v1979 = vpop.permute.xlu0 %1978
      %1980 = vrot.lane.b32.xlu0 %v403, 80
      %v1981 = vpop.permute.xlu0 %1980
      %1982 = vrot.lane.b32.xlu0 %v409, 80
      %v1983 = vpop.permute.xlu0 %1982
      %1984 = vrot.lane.b32.xlu0 %v415, 80
      %v1985 = vpop.permute.xlu0 %1984
      %1986 = vrot.lane.b32.xlu0 %v421, 80
      %v1987 = vpop.permute.xlu0 %1986
      %1988 = vrot.lane.b32.xlu0 %v427, 80
      %v1989 = vpop.permute.xlu0 %1988
      %1990 = vrot.lane.b32.xlu0 %v433, 80
      %v1991 = vpop.permute.xlu0 %1990
      %1992 = vrot.lane.b32.xlu0 %v439, 80
      %v1993 = vpop.permute.xlu0 %1992
      %v2003 = vsel %vm675, %v1970, 0
      %v2006 = vsel %vm675, %v1971, 0
      %v2009 = vsel %vm675, %v1972, 0
      %v2012 = vsel %vm675, %v1973, 0
      %v2015 = vsel %vm675, %v1974, 0
      %v2018 = vsel %vm675, %v1975, 0
      %v2021 = vsel %vm675, %v1976, 0
      %v2024 = vsel %vm675, %v1977, 0
      %2026 = vmatprep.subr.mxu0 0.0
      %2027 = vmatpush1.msra.mxu0 %v1979
      %2028 = vmatprep.subr.mxu0 0.0
      %2029 = vmatpush1.msra.mxu0 %v1981
      %2030 = vmatprep.subr.mxu0 0.0
      %2031 = vmatpush1.msra.mxu0 %v1983
      %2032 = vmatprep.subr.mxu0 0.0
      %2033 = vmatpush1.msra.mxu0 %v1985
      %2034 = vmatprep.subr.mxu0 0.0
      %2035 = vmatpush1.msra.mxu0 %v1987
      %2036 = vmatprep.subr.mxu0 0.0
      %2037 = vmatpush1.msra.mxu0 %v1989
      %2038 = vmatprep.subr.mxu0 0.0
      %2039 = vmatpush1.msra.mxu0 %v1991
      %2040 = vmatprep.subr.mxu0 0.0
      %2041 = vmatpush1.msra.mxu0 %v1993
      %2042 = vmatprep.subr.mxu0 0.0
      %2043 = vmatpush1.msra.mxu0 0.0
      %2044 = vmatprep.subr.mxu0 0.0
      %2045 = vmatpush1.msra.mxu0 0.0
      %2046 = vmatprep.subr.mxu0 0.0
      %2047 = vmatpush1.msra.mxu0 0.0
      %2048 = vmatprep.subr.mxu0 0.0
      %2049 = vmatpush1.msra.mxu0 0.0
      %2050 = vmatprep.subr.mxu0 0.0
      %2051 = vmatpush1.msra.mxu0 0.0
      %2052 = vmatprep.subr.mxu0 0.0
      %2053 = vmatpush1.msra.mxu0 0.0
      %2054 = vmatprep.subr.mxu0 0.0
      %2055 = vmatpush1.msra.mxu0 0.0
      %2056 = vmatprep.subr.mxu0 0.0
      %2057 = vmatpush1.msra.mxu0 0.0
      %2058 = vmatprep.subr.mxu0 0.0
      %2059 = vmatpush1.msra.mxu0 0.0
      %2060 = vmatprep.subr.mxu0 0.0
      %2061 = vmatpush1.msra.mxu0 0.0
      %2062 = vmatprep.subr.mxu0 0.0
      %2063 = vmatpush1.msra.mxu0 0.0
      %2064 = vmatprep.subr.mxu0 0.0
      %2065 = vmatpush1.msra.mxu0 0.0
      %2066 = vmatprep.subr.mxu0 0.0
      %2067 = vmatpush1.msra.mxu0 0.0
      %2068 = vmatprep.subr.mxu0 0.0
      %2069 = vmatpush1.msra.mxu0 0.0
      %2070 = vmatprep.subr.mxu0 0.0
      %2071 = vmatpush1.msra.mxu0 0.0
      %2072 = vmatprep.subr.mxu0 0.0
      %2073 = vmatpush1.msra.mxu0 0.0
      %2074 = vmatprep.subr.mxu0 0.0
      %2075 = vmatpush1.msra.mxu0 0.0
      %2076 = vmatprep.subr.mxu0 0.0
      %2077 = vmatpush1.msra.mxu0 0.0
      %2078 = vmatprep.subr.mxu0 0.0
      %2079 = vmatpush1.msra.mxu0 0.0
      %2080 = vmatprep.subr.mxu0 0.0
      %2081 = vmatpush1.msra.mxu0 0.0
      %2082 = vmatprep.subr.mxu0 0.0
      %2083 = vmatpush1.msra.mxu0 0.0
      %2084 = vmatprep.subr.mxu0 0.0
      %2085 = vmatpush1.msra.mxu0 0.0
      %2086 = vmatprep.subr.mxu0 0.0
      %2087 = vmatpush1.msra.mxu0 0.0
      %2088 = vmatprep.subr.mxu0 0.0
      %2089 = vmatpush1.msra.mxu0 0.0
      %2090 = vmatprep.mubr.f32.mxu0 0.0
      %2091 = vmatmul.mubr.f32.gmra.mrb[0].mxu0 %v2003
      %v2092 = vpop.f32.mrb[0].mxu0
      %v2093 = vadd.f32 0.0, %v2092
      %v2094 = vpop.f32.mrb[0].mxu0
      %2095 = vmatprep.mubr.f32.mxu0 0.0
      %2096 = vmatmul.mubr.f32.gmra.mrb[0].mxu0 %v2006
      %v2097 = vpop.f32.mrb[0].mxu0
      %v2098 = vadd.f32 0.0, %v2097
      %v2099 = vpop.f32.mrb[0].mxu0
      %2100 = vmatprep.mubr.f32.mxu0 0.0
      %2101 = vmatmul.mubr.f32.gmra.mrb[0].mxu0 %v2009
      %v2102 = vpop.f32.mrb[0].mxu0
      %v2103 = vadd.f32 0.0, %v2102
      %v2104 = vpop.f32.mrb[0].mxu0
      %2105 = vmatprep.mubr.f32.mxu0 0.0
      %2106 = vmatmul.mubr.f32.gmra.mrb[0].mxu0 %v2012
      %v2107 = vpop.f32.mrb[0].mxu0
      %v2108 = vadd.f32 0.0, %v2107
      %v2109 = vpop.f32.mrb[0].mxu0
      %2110 = vmatprep.mubr.f32.mxu0 0.0
      %2111 = vmatmul.mubr.f32.gmra.mrb[0].mxu0 %v2015
      %v2112 = vpop.f32.mrb[0].mxu0
      %v2113 = vadd.f32 0.0, %v2112
      %v2114 = vpop.f32.mrb[0].mxu0
      %2115 = vmatprep.mubr.f32.mxu0 0.0
      %2116 = vmatmul.mubr.f32.gmra.mrb[0].mxu0 %v2018
      %v2117 = vpop.f32.mrb[0].mxu0
      %v2118 = vadd.f32 0.0, %v2117
      %v2119 = vpop.f32.mrb[0].mxu0
      %2120 = vmatprep.mubr.f32.mxu0 0.0
      %2121 = vmatmul.mubr.f32.gmra.mrb[0].mxu0 %v2021
      %v2122 = vpop.f32.mrb[0].mxu0
      %v2123 = vadd.f32 0.0, %v2122
      %v2124 = vpop.f32.mrb[0].mxu0
      %2125 = vmatprep.mubr.f32.mxu0 0.0
      %2126 = vmatmul.mubr.f32.gmra.mrb[0].mxu0 %v2024
      %v2127 = vpop.f32.mrb[0].mxu0
      %v2128 = vadd.f32 0.0, %v2127
      %v2129 = vpop.f32.mrb[0].mxu0
      %2130 = vdwg.mxu0
      %2139 = vrot.lane.b32.xlu0 %v1273, 16
      %v2140 = vpop.permute.xlu0 %2139
      %2141 = vrot.lane.b32.xlu0 %v1278, 16
      %v2142 = vpop.permute.xlu0 %2141
      %2143 = vrot.lane.b32.xlu0 %v1283, 16
      %v2144 = vpop.permute.xlu0 %2143
      %2145 = vrot.lane.b32.xlu0 %v1288, 16
      %v2146 = vpop.permute.xlu0 %2145
      %2147 = vrot.lane.b32.xlu0 %v1293, 16
      %v2148 = vpop.permute.xlu0 %2147
      %2149 = vrot.lane.b32.xlu0 %v1298, 16
      %v2150 = vpop.permute.xlu0 %2149
      %2151 = vrot.lane.b32.xlu0 %v1303, 16
      %v2152 = vpop.permute.xlu0 %2151
      %2153 = vrot.lane.b32.xlu0 %v1308, 16
      %v2154 = vpop.permute.xlu0 %2153
      %2171 = vrot.lane.b32.xlu0 %v1683, 32
      %v2172 = vpop.permute.xlu0 %2171
      %2173 = vrot.lane.b32.xlu0 %v1688, 32
      %v2174 = vpop.permute.xlu0 %2173
      %2175 = vrot.lane.b32.xlu0 %v1693, 32
      %v2176 = vpop.permute.xlu0 %2175
      %2177 = vrot.lane.b32.xlu0 %v1698, 32
      %v2178 = vpop.permute.xlu0 %2177
      %2179 = vrot.lane.b32.xlu0 %v1703, 32
      %v2180 = vpop.permute.xlu0 %2179
      %2181 = vrot.lane.b32.xlu0 %v1708, 32
      %v2182 = vpop.permute.xlu0 %2181
      %2183 = vrot.lane.b32.xlu0 %v1713, 32
      %v2184 = vpop.permute.xlu0 %2183
      %2185 = vrot.lane.b32.xlu0 %v1718, 32
      %v2186 = vpop.permute.xlu0 %2185
      %2203 = vrot.lane.b32.xlu0 %v2093, 48
      %v2204 = vpop.permute.xlu0 %2203
      %2205 = vrot.lane.b32.xlu0 %v2098, 48
      %v2206 = vpop.permute.xlu0 %2205
      %2207 = vrot.lane.b32.xlu0 %v2103, 48
      %v2208 = vpop.permute.xlu0 %2207
      %2209 = vrot.lane.b32.xlu0 %v2108, 48
      %v2210 = vpop.permute.xlu0 %2209
      %2211 = vrot.lane.b32.xlu0 %v2113, 48
      %v2212 = vpop.permute.xlu0 %2211
      %2213 = vrot.lane.b32.xlu0 %v2118, 48
      %v2214 = vpop.permute.xlu0 %2213
      %2215 = vrot.lane.b32.xlu0 %v2123, 48
      %v2216 = vpop.permute.xlu0 %2215
      %2217 = vrot.lane.b32.xlu0 %v2128, 48
      %v2218 = vpop.permute.xlu0 %2217
      %v2227 = vsel %vm529, %v855, %v2140
      %v2228 = vsel %vm529, %v860, %v2142
      %v2229 = vsel %vm529, %v865, %v2144
      %v2230 = vsel %vm529, %v870, %v2146
      %v2231 = vsel %vm529, %v875, %v2148
      %v2232 = vsel %vm529, %v880, %v2150
      %v2233 = vsel %vm529, %v885, %v2152
      %v2234 = vsel %vm529, %v890, %v2154
      %v2235 = vsel %vm279, %v2227, %v2172
      %v2236 = vsel %vm279, %v2228, %v2174
      %v2237 = vsel %vm279, %v2229, %v2176
      %v2238 = vsel %vm279, %v2230, %v2178
      %v2239 = vsel %vm279, %v2231, %v2180
      %v2240 = vsel %vm279, %v2232, %v2182
      %v2241 = vsel %vm279, %v2233, %v2184
      %v2242 = vsel %vm279, %v2234, %v2186
      %vm2243 = vcmask 392192
      %v2244 = vsel %vm2243, %v2235, %v2204
      %v2245 = vsel %vm2243, %v2236, %v2206
      %v2246 = vsel %vm2243, %v2237, %v2208
      %v2247 = vsel %vm2243, %v2238, %v2210
      %v2248 = vsel %vm2243, %v2239, %v2212
      %v2249 = vsel %vm2243, %v2240, %v2214
      %v2250 = vsel %vm2243, %v2241, %v2216
      %v2251 = vsel %vm2243, %v2242, %v2218
      %2260 = vrot.lane.b32.xlu0 %v443, 64
      %v2261 = vpop.permute.xlu0 %2260
      %2262 = vrot.lane.b32.xlu0 %v449, 64
      %v2263 = vpop.permute.xlu0 %2262
      %2264 = vrot.lane.b32.xlu0 %v455, 64
      %v2265 = vpop.permute.xlu0 %2264
      %2266 = vrot.lane.b32.xlu0 %v461, 64
      %v2267 = vpop.permute.xlu0 %2266
      %2268 = vrot.lane.b32.xlu0 %v467, 64
      %v2269 = vpop.permute.xlu0 %2268
      %2270 = vrot.lane.b32.xlu0 %v473, 64
      %v2271 = vpop.permute.xlu0 %2270
      %2272 = vrot.lane.b32.xlu0 %v479, 64
      %v2273 = vpop.permute.xlu0 %2272
      %2274 = vrot.lane.b32.xlu0 %v485, 64
      %v2275 = vpop.permute.xlu0 %2274
      %v2277 = vsel %vm529, %v497, 0
      %v2280 = vsel %vm529, %v498, 0
      %v2283 = vsel %vm529, %v499, 0
      %v2286 = vsel %vm529, %v500, 0
      %v2289 = vsel %vm529, %v501, 0
      %v2292 = vsel %vm529, %v502, 0
      %v2295 = vsel %vm529, %v503, 0
      %v2298 = vsel %vm529, %v504, 0
      %v2300 = vsel %vm529, %v2261, 0
      %v2302 = vsel %vm529, %v2263, 0
      %v2304 = vsel %vm529, %v2265, 0
      %v2306 = vsel %vm529, %v2267, 0
      %v2308 = vsel %vm529, %v2269, 0
      %v2310 = vsel %vm529, %v2271, 0
      %v2312 = vsel %vm529, %v2273, 0
      %v2314 = vsel %vm529, %v2275, 0
      %2316 = vmatprep.subr.mxu0 0.0
      %2317 = vmatpush1.xpose.msra.mxu0 %v2300
      %2318 = vmatprep.subr.mxu0 0.0
      %2319 = vmatpush1.xpose.msra.mxu0 %v2302
      %2320 = vmatprep.subr.mxu0 0.0
      %2321 = vmatpush1.xpose.msra.mxu0 %v2304
      %2322 = vmatprep.subr.mxu0 0.0
      %2323 = vmatpush1.xpose.msra.mxu0 %v2306
      %2324 = vmatprep.subr.mxu0 0.0
      %2325 = vmatpush1.xpose.msra.mxu0 %v2308
      %2326 = vmatprep.subr.mxu0 0.0
      %2327 = vmatpush1.xpose.msra.mxu0 %v2310
      %2328 = vmatprep.subr.mxu0 0.0
      %2329 = vmatpush1.xpose.msra.mxu0 %v2312
      %2330 = vmatprep.subr.mxu0 0.0
      %2331 = vmatpush1.xpose.msra.mxu0 %v2314
      %2332 = vmatprep.subr.mxu0 0.0
      %2333 = vmatpush1.xpose.msra.mxu0 0.0
      %2334 = vmatprep.subr.mxu0 0.0
      %2335 = vmatpush1.xpose.msra.mxu0 0.0
      %2336 = vmatprep.subr.mxu0 0.0
      %2337 = vmatpush1.xpose.msra.mxu0 0.0
      %2338 = vmatprep.subr.mxu0 0.0
      %2339 = vmatpush1.xpose.msra.mxu0 0.0
      %2340 = vmatprep.subr.mxu0 0.0
      %2341 = vmatpush1.xpose.msra.mxu0 0.0
      %2342 = vmatprep.subr.mxu0 0.0
      %2343 = vmatpush1.xpose.msra.mxu0 0.0
      %2344 = vmatprep.subr.mxu0 0.0
      %2345 = vmatpush1.xpose.msra.mxu0 0.0
      %2346 = vmatprep.subr.mxu0 0.0
      %2347 = vmatpush1.xpose.msra.mxu0 0.0
      %2348 = vmatprep.subr.mxu0 0.0
      %2349 = vmatpush1.xpose.msra.mxu0 0.0
      %2350 = vmatprep.subr.mxu0 0.0
      %2351 = vmatpush1.xpose.msra.mxu0 0.0
      %2352 = vmatprep.subr.mxu0 0.0
      %2353 = vmatpush1.xpose.msra.mxu0 0.0
      %2354 = vmatprep.subr.mxu0 0.0
      %2355 = vmatpush1.xpose.msra.mxu0 0.0
      %2356 = vmatprep.subr.mxu0 0.0
      %2357 = vmatpush1.xpose.msra.mxu0 0.0
      %2358 = vmatprep.subr.mxu0 0.0
      %2359 = vmatpush1.xpose.msra.mxu0 0.0
      %2360 = vmatprep.subr.mxu0 0.0
      %2361 = vmatpush1.xpose.msra.mxu0 0.0
      %2362 = vmatprep.subr.mxu0 0.0
      %2363 = vmatpush1.xpose.msra.mxu0 0.0
      %2364 = vmatprep.subr.mxu0 0.0
      %2365 = vmatpush1.xpose.msra.mxu0 0.0
      %2366 = vmatprep.subr.mxu0 0.0
      %2367 = vmatpush1.xpose.msra.mxu0 0.0
      %2368 = vmatprep.subr.mxu0 0.0
      %2369 = vmatpush1.xpose.msra.mxu0 0.0
      %2370 = vmatprep.subr.mxu0 0.0
      %2371 = vmatpush1.xpose.msra.mxu0 0.0
      %2372 = vmatprep.subr.mxu0 0.0
      %2373 = vmatpush1.xpose.msra.mxu0 0.0
      %2374 = vmatprep.subr.mxu0 0.0
      %2375 = vmatpush1.xpose.msra.mxu0 0.0
      %2376 = vmatprep.subr.mxu0 0.0
      %2377 = vmatpush1.xpose.msra.mxu0 0.0
      %2378 = vmatprep.subr.mxu0 0.0
      %2379 = vmatpush1.xpose.msra.mxu0 0.0
      %2380 = vmatprep.mubr.f32.mxu0 0.0
      %2381 = vmatmul.mubr.f32.gmra.mrb[0].mxu0 %v2277
      %v2382 = vpop.f32.mrb[0].mxu0
      %v2383 = vadd.f32 0.0, %v2382
      %v2384 = vpop.f32.mrb[0].mxu0
      %2385 = vmatprep.mubr.f32.mxu0 0.0
      %2386 = vmatmul.mubr.f32.gmra.mrb[0].mxu0 %v2280
      %v2387 = vpop.f32.mrb[0].mxu0
      %v2388 = vadd.f32 0.0, %v2387
      %v2389 = vpop.f32.mrb[0].mxu0
      %2390 = vmatprep.mubr.f32.mxu0 0.0
      %2391 = vmatmul.mubr.f32.gmra.mrb[0].mxu0 %v2283
      %v2392 = vpop.f32.mrb[0].mxu0
      %v2393 = vadd.f32 0.0, %v2392
      %v2394 = vpop.f32.mrb[0].mxu0
      %2395 = vmatprep.mubr.f32.mxu0 0.0
      %2396 = vmatmul.mubr.f32.gmra.mrb[0].mxu0 %v2286
      %v2397 = vpop.f32.mrb[0].mxu0
      %v2398 = vadd.f32 0.0, %v2397
      %v2399 = vpop.f32.mrb[0].mxu0
      %2400 = vmatprep.mubr.f32.mxu0 0.0
      %2401 = vmatmul.mubr.f32.gmra.mrb[0].mxu0 %v2289
      %v2402 = vpop.f32.mrb[0].mxu0
      %v2403 = vadd.f32 0.0, %v2402
      %v2404 = vpop.f32.mrb[0].mxu0
      %2405 = vmatprep.mubr.f32.mxu0 0.0
      %2406 = vmatmul.mubr.f32.gmra.mrb[0].mxu0 %v2292
      %v2407 = vpop.f32.mrb[0].mxu0
      %v2408 = vadd.f32 0.0, %v2407
      %v2409 = vpop.f32.mrb[0].mxu0
      %2410 = vmatprep.mubr.f32.mxu0 0.0
      %2411 = vmatmul.mubr.f32.gmra.mrb[0].mxu0 %v2295
      %v2412 = vpop.f32.mrb[0].mxu0
      %v2413 = vadd.f32 0.0, %v2412
      %v2414 = vpop.f32.mrb[0].mxu0
      %2415 = vmatprep.mubr.f32.mxu0 0.0
      %2416 = vmatmul.mubr.f32.gmra.mrb[0].mxu0 %v2298
      %v2417 = vpop.f32.mrb[0].mxu0
      %v2418 = vadd.f32 0.0, %v2417
      %v2419 = vpop.f32.mrb[0].mxu0
      %2420 = vdwg.mxu0
      %v2421 = vsel %vm675, %v2383, -inf
      %2422 = vmax.xlane.f32.xlu0 %v2421
      %v2423 = vpop.xlane.xlu0 %2422
      %v2424 = vsel %vm675, %v2388, -inf
      %2425 = vmax.xlane.f32.xlu0 %v2424
      %v2426 = vpop.xlane.xlu0 %2425
      %v2427 = vsel %vm675, %v2393, -inf
      %2428 = vmax.xlane.f32.xlu0 %v2427
      %v2429 = vpop.xlane.xlu0 %2428
      %v2430 = vsel %vm675, %v2398, -inf
      %2431 = vmax.xlane.f32.xlu0 %v2430
      %v2432 = vpop.xlane.xlu0 %2431
      %v2433 = vsel %vm675, %v2403, -inf
      %2434 = vmax.xlane.f32.xlu0 %v2433
      %v2435 = vpop.xlane.xlu0 %2434
      %v2436 = vsel %vm675, %v2408, -inf
      %2437 = vmax.xlane.f32.xlu0 %v2436
      %v2438 = vpop.xlane.xlu0 %2437
      %v2439 = vsel %vm675, %v2413, -inf
      %2440 = vmax.xlane.f32.xlu0 %v2439
      %v2441 = vpop.xlane.xlu0 %2440
      %v2442 = vsel %vm675, %v2418, -inf
      %2443 = vmax.xlane.f32.xlu0 %v2442
      %v2444 = vpop.xlane.xlu0 %2443
      %v2445 = vsub.f32 %v2383, %v2423
      %v2446 = vsub.f32 %v2388, %v2426
      %v2447 = vsub.f32 %v2393, %v2429
      %v2448 = vsub.f32 %v2398, %v2432
      %v2449 = vsub.f32 %v2403, %v2435
      %v2450 = vsub.f32 %v2408, %v2438
      %v2451 = vsub.f32 %v2413, %v2441
      %v2452 = vsub.f32 %v2418, %v2444
      %v2453 = vmul.f32 %v2445, 1.442695
      %v2454 = vpow.pop %v2453
      %v2455 = vmul.f32 %v2446, 1.442695
      %v2456 = vpow.pop %v2455
      %v2457 = vmul.f32 %v2447, 1.442695
      %v2458 = vpow.pop %v2457
      %v2459 = vmul.f32 %v2448, 1.442695
      %v2460 = vpow.pop %v2459
      %v2461 = vmul.f32 %v2449, 1.442695
      %v2462 = vpow.pop %v2461
      %v2463 = vmul.f32 %v2450, 1.442695
      %v2464 = vpow.pop %v2463
      %v2465 = vmul.f32 %v2451, 1.442695
      %v2466 = vpow.pop %v2465
      %v2467 = vmul.f32 %v2452, 1.442695
      %v2468 = vpow.pop %v2467
      %v2469 = vsel %vm675, %v2454, 0.0
      %2470 = vadd.xlane.f32.xlu0 %v2469
      %v2471 = vpop.xlane.xlu0 %2470
      %v2472 = vsel %vm675, %v2456, 0.0
      %2473 = vadd.xlane.f32.xlu0 %v2472
      %v2474 = vpop.xlane.xlu0 %2473
      %v2475 = vsel %vm675, %v2458, 0.0
      %2476 = vadd.xlane.f32.xlu0 %v2475
      %v2477 = vpop.xlane.xlu0 %2476
      %v2478 = vsel %vm675, %v2460, 0.0
      %2479 = vadd.xlane.f32.xlu0 %v2478
      %v2480 = vpop.xlane.xlu0 %2479
      %v2481 = vsel %vm675, %v2462, 0.0
      %2482 = vadd.xlane.f32.xlu0 %v2481
      %v2483 = vpop.xlane.xlu0 %2482
      %v2484 = vsel %vm675, %v2464, 0.0
      %2485 = vadd.xlane.f32.xlu0 %v2484
      %v2486 = vpop.xlane.xlu0 %2485
      %v2487 = vsel %vm675, %v2466, 0.0
      %2488 = vadd.xlane.f32.xlu0 %v2487
      %v2489 = vpop.xlane.xlu0 %2488
      %v2490 = vsel %vm675, %v2468, 0.0
      %2491 = vadd.xlane.f32.xlu0 %v2490
      %v2492 = vpop.xlane.xlu0 %2491
      %v2493 = vrcp.pop %v2471
      %v2494 = vrcp.pop %v2474
      %v2495 = vrcp.pop %v2477
      %v2496 = vrcp.pop %v2480
      %v2497 = vrcp.pop %v2483
      %v2498 = vrcp.pop %v2486
      %v2499 = vrcp.pop %v2489
      %v2500 = vrcp.pop %v2492
      %v2501 = vmul.f32 %v2454, %v2493
      %v2502 = vmul.f32 %v2456, %v2494
      %v2503 = vmul.f32 %v2458, %v2495
      %v2504 = vmul.f32 %v2460, %v2496
      %v2505 = vmul.f32 %v2462, %v2497
      %v2506 = vmul.f32 %v2464, %v2498
      %v2507 = vmul.f32 %v2466, %v2499
      %v2508 = vmul.f32 %v2468, %v2500
      %v2510 = vsel %vm675, %v2501, 0
      %v2513 = vsel %vm675, %v2502, 0
      %v2516 = vsel %vm675, %v2503, 0
      %v2519 = vsel %vm675, %v2504, 0
      %v2522 = vsel %vm675, %v2505, 0
      %v2525 = vsel %vm675, %v2506, 0
      %v2528 = vsel %vm675, %v2507, 0
      %v2531 = vsel %vm675, %v2508, 0
      %2533 = vmatprep.subr.mxu0 0.0
      %2534 = vmatpush1.msra.mxu0 %v445
      %2535 = vmatprep.subr.mxu0 0.0
      %2536 = vmatpush1.msra.mxu0 %v451
      %2537 = vmatprep.subr.mxu0 0.0
      %2538 = vmatpush1.msra.mxu0 %v457
      %2539 = vmatprep.subr.mxu0 0.0
      %2540 = vmatpush1.msra.mxu0 %v463
      %2541 = vmatprep.subr.mxu0 0.0
      %2542 = vmatpush1.msra.mxu0 %v469
      %2543 = vmatprep.subr.mxu0 0.0
      %2544 = vmatpush1.msra.mxu0 %v475
      %2545 = vmatprep.subr.mxu0 0.0
      %2546 = vmatpush1.msra.mxu0 %v481
      %2547 = vmatprep.subr.mxu0 0.0
      %2548 = vmatpush1.msra.mxu0 %v487
      %2549 = vmatprep.subr.mxu0 0.0
      %2550 = vmatpush1.msra.mxu0 0.0
      %2551 = vmatprep.subr.mxu0 0.0
      %2552 = vmatpush1.msra.mxu0 0.0
      %2553 = vmatprep.subr.mxu0 0.0
      %2554 = vmatpush1.msra.mxu0 0.0
      %2555 = vmatprep.subr.mxu0 0.0
      %2556 = vmatpush1.msra.mxu0 0.0
      %2557 = vmatprep.subr.mxu0 0.0
      %2558 = vmatpush1.msra.mxu0 0.0
      %2559 = vmatprep.subr.mxu0 0.0
      %2560 = vmatpush1.msra.mxu0 0.0
      %2561 = vmatprep.subr.mxu0 0.0
      %2562 = vmatpush1.msra.mxu0 0.0
      %2563 = vmatprep.subr.mxu0 0.0
      %2564 = vmatpush1.msra.mxu0 0.0
      %2565 = vmatprep.subr.mxu0 0.0
      %2566 = vmatpush1.msra.mxu0 0.0
      %2567 = vmatprep.subr.mxu0 0.0
      %2568 = vmatpush1.msra.mxu0 0.0
      %2569 = vmatprep.subr.mxu0 0.0
      %2570 = vmatpush1.msra.mxu0 0.0
      %2571 = vmatprep.subr.mxu0 0.0
      %2572 = vmatpush1.msra.mxu0 0.0
      %2573 = vmatprep.subr.mxu0 0.0
      %2574 = vmatpush1.msra.mxu0 0.0
      %2575 = vmatprep.subr.mxu0 0.0
      %2576 = vmatpush1.msra.mxu0 0.0
      %2577 = vmatprep.subr.mxu0 0.0
      %2578 = vmatpush1.msra.mxu0 0.0
      %2579 = vmatprep.subr.mxu0 0.0
      %2580 = vmatpush1.msra.mxu0 0.0
      %2581 = vmatprep.subr.mxu0 0.0
      %2582 = vmatpush1.msra.mxu0 0.0
      %2583 = vmatprep.subr.mxu0 0.0
      %2584 = vmatpush1.msra.mxu0 0.0
      %2585 = vmatprep.subr.mxu0 0.0
      %2586 = vmatpush1.msra.mxu0 0.0
      %2587 = vmatprep.subr.mxu0 0.0
      %2588 = vmatpush1.msra.mxu0 0.0
      %2589 = vmatprep.subr.mxu0 0.0
      %2590 = vmatpush1.msra.mxu0 0.0
      %2591 = vmatprep.subr.mxu0 0.0
      %2592 = vmatpush1.msra.mxu0 0.0
      %2593 = vmatprep.subr.mxu0 0.0
      %2594 = vmatpush1.msra.mxu0 0.0
      %2595 = vmatprep.subr.mxu0 0.0
      %2596 = vmatpush1.msra.mxu0 0.0
      %2597 = vmatprep.mubr.f32.mxu0 0.0
      %2598 = vmatmul.mubr.f32.gmra.mrb[0].mxu0 %v2510
      %v2599 = vpop.f32.mrb[0].mxu0
      %v2600 = vadd.f32 0.0, %v2599
      %v2601 = vpop.f32.mrb[0].mxu0
      %2602 = vmatprep.mubr.f32.mxu0 0.0
      %2603 = vmatmul.mubr.f32.gmra.mrb[0].mxu0 %v2513
      %v2604 = vpop.f32.mrb[0].mxu0
      %v2605 = vadd.f32 0.0, %v2604
      %v2606 = vpop.f32.mrb[0].mxu0
      %2607 = vmatprep.mubr.f32.mxu0 0.0
      %2608 = vmatmul.mubr.f32.gmra.mrb[0].mxu0 %v2516
      %v2609 = vpop.f32.mrb[0].mxu0
      %v2610 = vadd.f32 0.0, %v2609
      %v2611 = vpop.f32.mrb[0].mxu0
      %2612 = vmatprep.mubr.f32.mxu0 0.0
      %2613 = vmatmul.mubr.f32.gmra.mrb[0].mxu0 %v2519
      %v2614 = vpop.f32.mrb[0].mxu0
      %v2615 = vadd.f32 0.0, %v2614
      %v2616 = vpop.f32.mrb[0].mxu0
      %2617 = vmatprep.mubr.f32.mxu0 0.0
      %2618 = vmatmul.mubr.f32.gmra.mrb[0].mxu0 %v2522
      %v2619 = vpop.f32.mrb[0].mxu0
      %v2620 = vadd.f32 0.0, %v2619
      %v2621 = vpop.f32.mrb[0].mxu0
      %2622 = vmatprep.mubr.f32.mxu0 0.0
      %2623 = vmatmul.mubr.f32.gmra.mrb[0].mxu0 %v2525
      %v2624 = vpop.f32.mrb[0].mxu0
      %v2625 = vadd.f32 0.0, %v2624
      %v2626 = vpop.f32.mrb[0].mxu0
      %2627 = vmatprep.mubr.f32.mxu0 0.0
      %2628 = vmatmul.mubr.f32.gmra.mrb[0].mxu0 %v2528
      %v2629 = vpop.f32.mrb[0].mxu0
      %v2630 = vadd.f32 0.0, %v2629
      %v2631 = vpop.f32.mrb[0].mxu0
      %2632 = vmatprep.mubr.f32.mxu0 0.0
      %2633 = vmatmul.mubr.f32.gmra.mrb[0].mxu0 %v2531
      %v2634 = vpop.f32.mrb[0].mxu0
      %v2635 = vadd.f32 0.0, %v2634
      %v2636 = vpop.f32.mrb[0].mxu0
      %2637 = vdwg.mxu0
      %2638 = vrot.lane.b32.xlu0 %v497, 112
      %v2639 = vpop.permute.xlu0 %2638
      %2640 = vrot.lane.b32.xlu0 %v498, 112
      %v2641 = vpop.permute.xlu0 %2640
      %2642 = vrot.lane.b32.xlu0 %v499, 112
      %v2643 = vpop.permute.xlu0 %2642
      %2644 = vrot.lane.b32.xlu0 %v500, 112
      %v2645 = vpop.permute.xlu0 %2644
      %2646 = vrot.lane.b32.xlu0 %v501, 112
      %v2647 = vpop.permute.xlu0 %2646
      %2648 = vrot.lane.b32.xlu0 %v502, 112
      %v2649 = vpop.permute.xlu0 %2648
      %2650 = vrot.lane.b32.xlu0 %v503, 112
      %v2651 = vpop.permute.xlu0 %2650
      %2652 = vrot.lane.b32.xlu0 %v504, 112
      %v2653 = vpop.permute.xlu0 %2652
      %2654 = vrot.lane.b32.xlu0 %v443, 48
      %v2655 = vpop.permute.xlu0 %2654
      %2656 = vrot.lane.b32.xlu0 %v449, 48
      %v2657 = vpop.permute.xlu0 %2656
      %2658 = vrot.lane.b32.xlu0 %v455, 48
      %v2659 = vpop.permute.xlu0 %2658
      %2660 = vrot.lane.b32.xlu0 %v461, 48
      %v2661 = vpop.permute.xlu0 %2660
      %2662 = vrot.lane.b32.xlu0 %v467, 48
      %v2663 = vpop.permute.xlu0 %2662
      %2664 = vrot.lane.b32.xlu0 %v473, 48
      %v2665 = vpop.permute.xlu0 %2664
      %2666 = vrot.lane.b32.xlu0 %v479, 48
      %v2667 = vpop.permute.xlu0 %2666
      %2668 = vrot.lane.b32.xlu0 %v485, 48
      %v2669 = vpop.permute.xlu0 %2668
      %v2670 = vsel %vm529, %v2639, 0
      %v2672 = vsel %vm529, %v2641, 0
      %v2674 = vsel %vm529, %v2643, 0
      %v2676 = vsel %vm529, %v2645, 0
      %v2678 = vsel %vm529, %v2647, 0
      %v2680 = vsel %vm529, %v2649, 0
      %v2682 = vsel %vm529, %v2651, 0
      %v2684 = vsel %vm529, %v2653, 0
      %v2686 = vsel %vm529, %v2655, 0
      %v2688 = vsel %vm529, %v2657, 0
      %v2690 = vsel %vm529, %v2659, 0
      %v2692 = vsel %vm529, %v2661, 0
      %v2694 = vsel %vm529, %v2663, 0
      %v2696 = vsel %vm529, %v2665, 0
      %v2698 = vsel %vm529, %v2667, 0
      %v2700 = vsel %vm529, %v2669, 0
      %2702 = vmatprep.subr.mxu0 0.0
      %2703 = vmatpush1.xpose.msra.mxu0 %v2686
      %2704 = vmatprep.subr.mxu0 0.0
      %2705 = vmatpush1.xpose.msra.mxu0 %v2688
      %2706 = vmatprep.subr.mxu0 0.0
      %2707 = vmatpush1.xpose.msra.mxu0 %v2690
      %2708 = vmatprep.subr.mxu0 0.0
      %2709 = vmatpush1.xpose.msra.mxu0 %v2692
      %2710 = vmatprep.subr.mxu0 0.0
      %2711 = vmatpush1.xpose.msra.mxu0 %v2694
      %2712 = vmatprep.subr.mxu0 0.0
      %2713 = vmatpush1.xpose.msra.mxu0 %v2696
      %2714 = vmatprep.subr.mxu0 0.0
      %2715 = vmatpush1.xpose.msra.mxu0 %v2698
      %2716 = vmatprep.subr.mxu0 0.0
      %2717 = vmatpush1.xpose.msra.mxu0 %v2700
      %2718 = vmatprep.subr.mxu0 0.0
      %2719 = vmatpush1.xpose.msra.mxu0 0.0
      %2720 = vmatprep.subr.mxu0 0.0
      %2721 = vmatpush1.xpose.msra.mxu0 0.0
      %2722 = vmatprep.subr.mxu0 0.0
      %2723 = vmatpush1.xpose.msra.mxu0 0.0
      %2724 = vmatprep.subr.mxu0 0.0
      %2725 = vmatpush1.xpose.msra.mxu0 0.0
      %2726 = vmatprep.subr.mxu0 0.0
      %2727 = vmatpush1.xpose.msra.mxu0 0.0
      %2728 = vmatprep.subr.mxu0 0.0
      %2729 = vmatpush1.xpose.msra.mxu0 0.0
      %2730 = vmatprep.subr.mxu0 0.0
      %2731 = vmatpush1.xpose.msra.mxu0 0.0
      %2732 = vmatprep.subr.mxu0 0.0
      %2733 = vmatpush1.xpose.msra.mxu0 0.0
      %2734 = vmatprep.subr.mxu0 0.0
      %2735 = vmatpush1.xpose.msra.mxu0 0.0
      %2736 = vmatprep.subr.mxu0 0.0
      %2737 = vmatpush1.xpose.msra.mxu0 0.0
      %2738 = vmatprep.subr.mxu0 0.0
      %2739 = vmatpush1.xpose.msra.mxu0 0.0
      %2740 = vmatprep.subr.mxu0 0.0
      %2741 = vmatpush1.xpose.msra.mxu0 0.0
      %2742 = vmatprep.subr.mxu0 0.0
      %2743 = vmatpush1.xpose.msra.mxu0 0.0
      %2744 = vmatprep.subr.mxu0 0.0
      %2745 = vmatpush1.xpose.msra.mxu0 0.0
      %2746 = vmatprep.subr.mxu0 0.0
      %2747 = vmatpush1.xpose.msra.mxu0 0.0
      %2748 = vmatprep.subr.mxu0 0.0
      %2749 = vmatpush1.xpose.msra.mxu0 0.0
      %2750 = vmatprep.subr.mxu0 0.0
      %2751 = vmatpush1.xpose.msra.mxu0 0.0
      %2752 = vmatprep.subr.mxu0 0.0
      %2753 = vmatpush1.xpose.msra.mxu0 0.0
      %2754 = vmatprep.subr.mxu0 0.0
      %2755 = vmatpush1.xpose.msra.mxu0 0.0
      %2756 = vmatprep.subr.mxu0 0.0
      %2757 = vmatpush1.xpose.msra.mxu0 0.0
      %2758 = vmatprep.subr.mxu0 0.0
      %2759 = vmatpush1.xpose.msra.mxu0 0.0
      %2760 = vmatprep.subr.mxu0 0.0
      %2761 = vmatpush1.xpose.msra.mxu0 0.0
      %2762 = vmatprep.subr.mxu0 0.0
      %2763 = vmatpush1.xpose.msra.mxu0 0.0
      %2764 = vmatprep.subr.mxu0 0.0
      %2765 = vmatpush1.xpose.msra.mxu0 0.0
      %2766 = vmatprep.mubr.f32.mxu0 0.0
      %2767 = vmatmul.mubr.f32.gmra.mrb[0].mxu0 %v2670
      %v2768 = vpop.f32.mrb[0].mxu0
      %v2769 = vadd.f32 0.0, %v2768
      %v2770 = vpop.f32.mrb[0].mxu0
      %2771 = vmatprep.mubr.f32.mxu0 0.0
      %2772 = vmatmul.mubr.f32.gmra.mrb[0].mxu0 %v2672
      %v2773 = vpop.f32.mrb[0].mxu0
      %v2774 = vadd.f32 0.0, %v2773
      %v2775 = vpop.f32.mrb[0].mxu0
      %2776 = vmatprep.mubr.f32.mxu0 0.0
      %2777 = vmatmul.mubr.f32.gmra.mrb[0].mxu0 %v2674
      %v2778 = vpop.f32.mrb[0].mxu0
      %v2779 = vadd.f32 0.0, %v2778
      %v2780 = vpop.f32.mrb[0].mxu0
      %2781 = vmatprep.mubr.f32.mxu0 0.0
      %2782 = vmatmul.mubr.f32.gmra.mrb[0].mxu0 %v2676
      %v2783 = vpop.f32.mrb[0].mxu0
      %v2784 = vadd.f32 0.0, %v2783
      %v2785 = vpop.f32.mrb[0].mxu0
      %2786 = vmatprep.mubr.f32.mxu0 0.0
      %2787 = vmatmul.mubr.f32.gmra.mrb[0].mxu0 %v2678
      %v2788 = vpop.f32.mrb[0].mxu0
      %v2789 = vadd.f32 0.0, %v2788
      %v2790 = vpop.f32.mrb[0].mxu0
      %2791 = vmatprep.mubr.f32.mxu0 0.0
      %2792 = vmatmul.mubr.f32.gmra.mrb[0].mxu0 %v2680
      %v2793 = vpop.f32.mrb[0].mxu0
      %v2794 = vadd.f32 0.0, %v2793
      %v2795 = vpop.f32.mrb[0].mxu0
      %2796 = vmatprep.mubr.f32.mxu0 0.0
      %2797 = vmatmul.mubr.f32.gmra.mrb[0].mxu0 %v2682
      %v2798 = vpop.f32.mrb[0].mxu0
      %v2799 = vadd.f32 0.0, %v2798
      %v2800 = vpop.f32.mrb[0].mxu0
      %2801 = vmatprep.mubr.f32.mxu0 0.0
      %2802 = vmatmul.mubr.f32.gmra.mrb[0].mxu0 %v2684
      %v2803 = vpop.f32.mrb[0].mxu0
      %v2804 = vadd.f32 0.0, %v2803
      %v2805 = vpop.f32.mrb[0].mxu0
      %2806 = vdwg.mxu0
      %v2807 = vsel %vm675, %v2769, -inf
      %2808 = vmax.xlane.f32.xlu0 %v2807
      %v2809 = vpop.xlane.xlu0 %2808
      %v2810 = vsel %vm675, %v2774, -inf
      %2811 = vmax.xlane.f32.xlu0 %v2810
      %v2812 = vpop.xlane.xlu0 %2811
      %v2813 = vsel %vm675, %v2779, -inf
      %2814 = vmax.xlane.f32.xlu0 %v2813
      %v2815 = vpop.xlane.xlu0 %2814
      %v2816 = vsel %vm675, %v2784, -inf
      %2817 = vmax.xlane.f32.xlu0 %v2816
      %v2818 = vpop.xlane.xlu0 %2817
      %v2819 = vsel %vm675, %v2789, -inf
      %2820 = vmax.xlane.f32.xlu0 %v2819
      %v2821 = vpop.xlane.xlu0 %2820
      %v2822 = vsel %vm675, %v2794, -inf
      %2823 = vmax.xlane.f32.xlu0 %v2822
      %v2824 = vpop.xlane.xlu0 %2823
      %v2825 = vsel %vm675, %v2799, -inf
      %2826 = vmax.xlane.f32.xlu0 %v2825
      %v2827 = vpop.xlane.xlu0 %2826
      %v2828 = vsel %vm675, %v2804, -inf
      %2829 = vmax.xlane.f32.xlu0 %v2828
      %v2830 = vpop.xlane.xlu0 %2829
      %v2831 = vsub.f32 %v2769, %v2809
      %v2832 = vsub.f32 %v2774, %v2812
      %v2833 = vsub.f32 %v2779, %v2815
      %v2834 = vsub.f32 %v2784, %v2818
      %v2835 = vsub.f32 %v2789, %v2821
      %v2836 = vsub.f32 %v2794, %v2824
      %v2837 = vsub.f32 %v2799, %v2827
      %v2838 = vsub.f32 %v2804, %v2830
      %v2839 = vmul.f32 %v2831, 1.442695
      %v2840 = vpow.pop %v2839
      %v2841 = vmul.f32 %v2832, 1.442695
      %v2842 = vpow.pop %v2841
      %v2843 = vmul.f32 %v2833, 1.442695
      %v2844 = vpow.pop %v2843
      %v2845 = vmul.f32 %v2834, 1.442695
      %v2846 = vpow.pop %v2845
      %v2847 = vmul.f32 %v2835, 1.442695
      %v2848 = vpow.pop %v2847
      %v2849 = vmul.f32 %v2836, 1.442695
      %v2850 = vpow.pop %v2849
      %v2851 = vmul.f32 %v2837, 1.442695
      %v2852 = vpow.pop %v2851
      %v2853 = vmul.f32 %v2838, 1.442695
      %v2854 = vpow.pop %v2853
      %v2855 = vsel %vm675, %v2840, 0.0
      %2856 = vadd.xlane.f32.xlu0 %v2855
      %v2857 = vpop.xlane.xlu0 %2856
      %v2858 = vsel %vm675, %v2842, 0.0
      %2859 = vadd.xlane.f32.xlu0 %v2858
      %v2860 = vpop.xlane.xlu0 %2859
      %v2861 = vsel %vm675, %v2844, 0.0
      %2862 = vadd.xlane.f32.xlu0 %v2861
      %v2863 = vpop.xlane.xlu0 %2862
      %v2864 = vsel %vm675, %v2846, 0.0
      %2865 = vadd.xlane.f32.xlu0 %v2864
      %v2866 = vpop.xlane.xlu0 %2865
      %v2867 = vsel %vm675, %v2848, 0.0
      %2868 = vadd.xlane.f32.xlu0 %v2867
      %v2869 = vpop.xlane.xlu0 %2868
      %v2870 = vsel %vm675, %v2850, 0.0
      %2871 = vadd.xlane.f32.xlu0 %v2870
      %v2872 = vpop.xlane.xlu0 %2871
      %v2873 = vsel %vm675, %v2852, 0.0
      %2874 = vadd.xlane.f32.xlu0 %v2873
      %v2875 = vpop.xlane.xlu0 %2874
      %v2876 = vsel %vm675, %v2854, 0.0
      %2877 = vadd.xlane.f32.xlu0 %v2876
      %v2878 = vpop.xlane.xlu0 %2877
      %v2879 = vrcp.pop %v2857
      %v2880 = vrcp.pop %v2860
      %v2881 = vrcp.pop %v2863
      %v2882 = vrcp.pop %v2866
      %v2883 = vrcp.pop %v2869
      %v2884 = vrcp.pop %v2872
      %v2885 = vrcp.pop %v2875
      %v2886 = vrcp.pop %v2878
      %v2887 = vmul.f32 %v2840, %v2879
      %v2888 = vmul.f32 %v2842, %v2880
      %v2889 = vmul.f32 %v2844, %v2881
      %v2890 = vmul.f32 %v2846, %v2882
      %v2891 = vmul.f32 %v2848, %v2883
      %v2892 = vmul.f32 %v2850, %v2884
      %v2893 = vmul.f32 %v2852, %v2885
      %v2894 = vmul.f32 %v2854, %v2886
      %2903 = vrot.lane.b32.xlu0 %v445, 112
      %v2904 = vpop.permute.xlu0 %2903
      %2905 = vrot.lane.b32.xlu0 %v451, 112
      %v2906 = vpop.permute.xlu0 %2905
      %2907 = vrot.lane.b32.xlu0 %v457, 112
      %v2908 = vpop.permute.xlu0 %2907
      %2909 = vrot.lane.b32.xlu0 %v463, 112
      %v2910 = vpop.permute.xlu0 %2909
      %2911 = vrot.lane.b32.xlu0 %v469, 112
      %v2912 = vpop.permute.xlu0 %2911
      %2913 = vrot.lane.b32.xlu0 %v475, 112
      %v2914 = vpop.permute.xlu0 %2913
      %2915 = vrot.lane.b32.xlu0 %v481, 112
      %v2916 = vpop.permute.xlu0 %2915
      %2917 = vrot.lane.b32.xlu0 %v487, 112
      %v2918 = vpop.permute.xlu0 %2917
      %v2928 = vsel %vm675, %v2887, 0
      %v2931 = vsel %vm675, %v2888, 0
      %v2934 = vsel %vm675, %v2889, 0
      %v2937 = vsel %vm675, %v2890, 0
      %v2940 = vsel %vm675, %v2891, 0
      %v2943 = vsel %vm675, %v2892, 0
      %v2946 = vsel %vm675, %v2893, 0
      %v2949 = vsel %vm675, %v2894, 0
      %2951 = vmatprep.subr.mxu0 0.0
      %2952 = vmatpush1.msra.mxu0 %v2904
      %2953 = vmatprep.subr.mxu0 0.0
      %2954 = vmatpush1.msra.mxu0 %v2906
      %2955 = vmatprep.subr.mxu0 0.0
      %2956 = vmatpush1.msra.mxu0 %v2908
      %2957 = vmatprep.subr.mxu0 0.0
      %2958 = vmatpush1.msra.mxu0 %v2910
      %2959 = vmatprep.subr.mxu0 0.0
      %2960 = vmatpush1.msra.mxu0 %v2912
      %2961 = vmatprep.subr.mxu0 0.0
      %2962 = vmatpush1.msra.mxu0 %v2914
      %2963 = vmatprep.subr.mxu0 0.0
      %2964 = vmatpush1.msra.mxu0 %v2916
      %2965 = vmatprep.subr.mxu0 0.0
      %2966 = vmatpush1.msra.mxu0 %v2918
      %2967 = vmatprep.subr.mxu0 0.0
      %2968 = vmatpush1.msra.mxu0 0.0
      %2969 = vmatprep.subr.mxu0 0.0
      %2970 = vmatpush1.msra.mxu0 0.0
      %2971 = vmatprep.subr.mxu0 0.0
      %2972 = vmatpush1.msra.mxu0 0.0
      %2973 = vmatprep.subr.mxu0 0.0
      %2974 = vmatpush1.msra.mxu0 0.0
      %2975 = vmatprep.subr.mxu0 0.0
      %2976 = vmatpush1.msra.mxu0 0.0
      %2977 = vmatprep.subr.mxu0 0.0
      %2978 = vmatpush1.msra.mxu0 0.0
      %2979 = vmatprep.subr.mxu0 0.0
      %2980 = vmatpush1.msra.mxu0 0.0
      %2981 = vmatprep.subr.mxu0 0.0
      %2982 = vmatpush1.msra.mxu0 0.0
      %2983 = vmatprep.subr.mxu0 0.0
      %2984 = vmatpush1.msra.mxu0 0.0
      %2985 = vmatprep.subr.mxu0 0.0
      %2986 = vmatpush1.msra.mxu0 0.0
      %2987 = vmatprep.subr.mxu0 0.0
      %2988 = vmatpush1.msra.mxu0 0.0
      %2989 = vmatprep.subr.mxu0 0.0
      %2990 = vmatpush1.msra.mxu0 0.0
      %2991 = vmatprep.subr.mxu0 0.0
      %2992 = vmatpush1.msra.mxu0 0.0
      %2993 = vmatprep.subr.mxu0 0.0
      %2994 = vmatpush1.msra.mxu0 0.0
      %2995 = vmatprep.subr.mxu0 0.0
      %2996 = vmatpush1.msra.mxu0 0.0
      %2997 = vmatprep.subr.mxu0 0.0
      %2998 = vmatpush1.msra.mxu0 0.0
      %2999 = vmatprep.subr.mxu0 0.0
      %3000 = vmatpush1.msra.mxu0 0.0
      %3001 = vmatprep.subr.mxu0 0.0
      %3002 = vmatpush1.msra.mxu0 0.0
      %3003 = vmatprep.subr.mxu0 0.0
      %3004 = vmatpush1.msra.mxu0 0.0
      %3005 = vmatprep.subr.mxu0 0.0
      %3006 = vmatpush1.msra.mxu0 0.0
      %3007 = vmatprep.subr.mxu0 0.0
      %3008 = vmatpush1.msra.mxu0 0.0
      %3009 = vmatprep.subr.mxu0 0.0
      %3010 = vmatpush1.msra.mxu0 0.0
      %3011 = vmatprep.subr.mxu0 0.0
      %3012 = vmatpush1.msra.mxu0 0.0
      %3013 = vmatprep.subr.mxu0 0.0
      %3014 = vmatpush1.msra.mxu0 0.0
      %3015 = vmatprep.mubr.f32.mxu0 0.0
      %3016 = vmatmul.mubr.f32.gmra.mrb[0].mxu0 %v2928
      %v3017 = vpop.f32.mrb[0].mxu0
      %v3018 = vadd.f32 0.0, %v3017
      %v3019 = vpop.f32.mrb[0].mxu0
      %3020 = vmatprep.mubr.f32.mxu0 0.0
      %3021 = vmatmul.mubr.f32.gmra.mrb[0].mxu0 %v2931
      %v3022 = vpop.f32.mrb[0].mxu0
      %v3023 = vadd.f32 0.0, %v3022
      %v3024 = vpop.f32.mrb[0].mxu0
      %3025 = vmatprep.mubr.f32.mxu0 0.0
      %3026 = vmatmul.mubr.f32.gmra.mrb[0].mxu0 %v2934
      %v3027 = vpop.f32.mrb[0].mxu0
      %v3028 = vadd.f32 0.0, %v3027
      %v3029 = vpop.f32.mrb[0].mxu0
      %3030 = vmatprep.mubr.f32.mxu0 0.0
      %3031 = vmatmul.mubr.f32.gmra.mrb[0].mxu0 %v2937
      %v3032 = vpop.f32.mrb[0].mxu0
      %v3033 = vadd.f32 0.0, %v3032
      %v3034 = vpop.f32.mrb[0].mxu0
      %3035 = vmatprep.mubr.f32.mxu0 0.0
      %3036 = vmatmul.mubr.f32.gmra.mrb[0].mxu0 %v2940
      %v3037 = vpop.f32.mrb[0].mxu0
      %v3038 = vadd.f32 0.0, %v3037
      %v3039 = vpop.f32.mrb[0].mxu0
      %3040 = vmatprep.mubr.f32.mxu0 0.0
      %3041 = vmatmul.mubr.f32.gmra.mrb[0].mxu0 %v2943
      %v3042 = vpop.f32.mrb[0].mxu0
      %v3043 = vadd.f32 0.0, %v3042
      %v3044 = vpop.f32.mrb[0].mxu0
      %3045 = vmatprep.mubr.f32.mxu0 0.0
      %3046 = vmatmul.mubr.f32.gmra.mrb[0].mxu0 %v2946
      %v3047 = vpop.f32.mrb[0].mxu0
      %v3048 = vadd.f32 0.0, %v3047
      %v3049 = vpop.f32.mrb[0].mxu0
      %3050 = vmatprep.mubr.f32.mxu0 0.0
      %3051 = vmatmul.mubr.f32.gmra.mrb[0].mxu0 %v2949
      %v3052 = vpop.f32.mrb[0].mxu0
      %v3053 = vadd.f32 0.0, %v3052
      %v3054 = vpop.f32.mrb[0].mxu0
      %3055 = vdwg.mxu0
      %3056 = vrot.lane.b32.xlu0 %v497, 96
      %v3057 = vpop.permute.xlu0 %3056
      %3058 = vrot.lane.b32.xlu0 %v498, 96
      %v3059 = vpop.permute.xlu0 %3058
      %3060 = vrot.lane.b32.xlu0 %v499, 96
      %v3061 = vpop.permute.xlu0 %3060
      %3062 = vrot.lane.b32.xlu0 %v500, 96
      %v3063 = vpop.permute.xlu0 %3062
      %3064 = vrot.lane.b32.xlu0 %v501, 96
      %v3065 = vpop.permute.xlu0 %3064
      %3066 = vrot.lane.b32.xlu0 %v502, 96
      %v3067 = vpop.permute.xlu0 %3066
      %3068 = vrot.lane.b32.xlu0 %v503, 96
      %v3069 = vpop.permute.xlu0 %3068
      %3070 = vrot.lane.b32.xlu0 %v504, 96
      %v3071 = vpop.permute.xlu0 %3070
      %3072 = vrot.lane.b32.xlu0 %v443, 32
      %v3073 = vpop.permute.xlu0 %3072
      %3074 = vrot.lane.b32.xlu0 %v449, 32
      %v3075 = vpop.permute.xlu0 %3074
      %3076 = vrot.lane.b32.xlu0 %v455, 32
      %v3077 = vpop.permute.xlu0 %3076
      %3078 = vrot.lane.b32.xlu0 %v461, 32
      %v3079 = vpop.permute.xlu0 %3078
      %3080 = vrot.lane.b32.xlu0 %v467, 32
      %v3081 = vpop.permute.xlu0 %3080
      %3082 = vrot.lane.b32.xlu0 %v473, 32
      %v3083 = vpop.permute.xlu0 %3082
      %3084 = vrot.lane.b32.xlu0 %v479, 32
      %v3085 = vpop.permute.xlu0 %3084
      %3086 = vrot.lane.b32.xlu0 %v485, 32
      %v3087 = vpop.permute.xlu0 %3086
      %v3088 = vsel %vm529, %v3057, 0
      %v3090 = vsel %vm529, %v3059, 0
      %v3092 = vsel %vm529, %v3061, 0
      %v3094 = vsel %vm529, %v3063, 0
      %v3096 = vsel %vm529, %v3065, 0
      %v3098 = vsel %vm529, %v3067, 0
      %v3100 = vsel %vm529, %v3069, 0
      %v3102 = vsel %vm529, %v3071, 0
      %v3104 = vsel %vm529, %v3073, 0
      %v3106 = vsel %vm529, %v3075, 0
      %v3108 = vsel %vm529, %v3077, 0
      %v3110 = vsel %vm529, %v3079, 0
      %v3112 = vsel %vm529, %v3081, 0
      %v3114 = vsel %vm529, %v3083, 0
      %v3116 = vsel %vm529, %v3085, 0
      %v3118 = vsel %vm529, %v3087, 0
      %3120 = vmatprep.subr.mxu0 0.0
      %3121 = vmatpush1.xpose.msra.mxu0 %v3104
      %3122 = vmatprep.subr.mxu0 0.0
      %3123 = vmatpush1.xpose.msra.mxu0 %v3106
      %3124 = vmatprep.subr.mxu0 0.0
      %3125 = vmatpush1.xpose.msra.mxu0 %v3108
      %3126 = vmatprep.subr.mxu0 0.0
      %3127 = vmatpush1.xpose.msra.mxu0 %v3110
      %3128 = vmatprep.subr.mxu0 0.0
      %3129 = vmatpush1.xpose.msra.mxu0 %v3112
      %3130 = vmatprep.subr.mxu0 0.0
      %3131 = vmatpush1.xpose.msra.mxu0 %v3114
      %3132 = vmatprep.subr.mxu0 0.0
      %3133 = vmatpush1.xpose.msra.mxu0 %v3116
      %3134 = vmatprep.subr.mxu0 0.0
      %3135 = vmatpush1.xpose.msra.mxu0 %v3118
      %3136 = vmatprep.subr.mxu0 0.0
      %3137 = vmatpush1.xpose.msra.mxu0 0.0
      %3138 = vmatprep.subr.mxu0 0.0
      %3139 = vmatpush1.xpose.msra.mxu0 0.0
      %3140 = vmatprep.subr.mxu0 0.0
      %3141 = vmatpush1.xpose.msra.mxu0 0.0
      %3142 = vmatprep.subr.mxu0 0.0
      %3143 = vmatpush1.xpose.msra.mxu0 0.0
      %3144 = vmatprep.subr.mxu0 0.0
      %3145 = vmatpush1.xpose.msra.mxu0 0.0
      %3146 = vmatprep.subr.mxu0 0.0
      %3147 = vmatpush1.xpose.msra.mxu0 0.0
      %3148 = vmatprep.subr.mxu0 0.0
      %3149 = vmatpush1.xpose.msra.mxu0 0.0
      %3150 = vmatprep.subr.mxu0 0.0
      %3151 = vmatpush1.xpose.msra.mxu0 0.0
      %3152 = vmatprep.subr.mxu0 0.0
      %3153 = vmatpush1.xpose.msra.mxu0 0.0
      %3154 = vmatprep.subr.mxu0 0.0
      %3155 = vmatpush1.xpose.msra.mxu0 0.0
      %3156 = vmatprep.subr.mxu0 0.0
      %3157 = vmatpush1.xpose.msra.mxu0 0.0
      %3158 = vmatprep.subr.mxu0 0.0
      %3159 = vmatpush1.xpose.msra.mxu0 0.0
      %3160 = vmatprep.subr.mxu0 0.0
      %3161 = vmatpush1.xpose.msra.mxu0 0.0
      %3162 = vmatprep.subr.mxu0 0.0
      %3163 = vmatpush1.xpose.msra.mxu0 0.0
      %3164 = vmatprep.subr.mxu0 0.0
      %3165 = vmatpush1.xpose.msra.mxu0 0.0
      %3166 = vmatprep.subr.mxu0 0.0
      %3167 = vmatpush1.xpose.msra.mxu0 0.0
      %3168 = vmatprep.subr.mxu0 0.0
      %3169 = vmatpush1.xpose.msra.mxu0 0.0
      %3170 = vmatprep.subr.mxu0 0.0
      %3171 = vmatpush1.xpose.msra.mxu0 0.0
      %3172 = vmatprep.subr.mxu0 0.0
      %3173 = vmatpush1.xpose.msra.mxu0 0.0
      %3174 = vmatprep.subr.mxu0 0.0
      %3175 = vmatpush1.xpose.msra.mxu0 0.0
      %3176 = vmatprep.subr.mxu0 0.0
      %3177 = vmatpush1.xpose.msra.mxu0 0.0
      %3178 = vmatprep.subr.mxu0 0.0
      %3179 = vmatpush1.xpose.msra.mxu0 0.0
      %3180 = vmatprep.subr.mxu0 0.0
      %3181 = vmatpush1.xpose.msra.mxu0 0.0
      %3182 = vmatprep.subr.mxu0 0.0
      %3183 = vmatpush1.xpose.msra.mxu0 0.0
      %3184 = vmatprep.mubr.f32.mxu0 0.0
      %3185 = vmatmul.mubr.f32.gmra.mrb[0].mxu0 %v3088
      %v3186 = vpop.f32.mrb[0].mxu0
      %v3187 = vadd.f32 0.0, %v3186
      %v3188 = vpop.f32.mrb[0].mxu0
      %3189 = vmatprep.mubr.f32.mxu0 0.0
      %3190 = vmatmul.mubr.f32.gmra.mrb[0].mxu0 %v3090
      %v3191 = vpop.f32.mrb[0].mxu0
      %v3192 = vadd.f32 0.0, %v3191
      %v3193 = vpop.f32.mrb[0].mxu0
      %3194 = vmatprep.mubr.f32.mxu0 0.0
      %3195 = vmatmul.mubr.f32.gmra.mrb[0].mxu0 %v3092
      %v3196 = vpop.f32.mrb[0].mxu0
      %v3197 = vadd.f32 0.0, %v3196
      %v3198 = vpop.f32.mrb[0].mxu0
      %3199 = vmatprep.mubr.f32.mxu0 0.0
      %3200 = vmatmul.mubr.f32.gmra.mrb[0].mxu0 %v3094
      %v3201 = vpop.f32.mrb[0].mxu0
      %v3202 = vadd.f32 0.0, %v3201
      %v3203 = vpop.f32.mrb[0].mxu0
      %3204 = vmatprep.mubr.f32.mxu0 0.0
      %3205 = vmatmul.mubr.f32.gmra.mrb[0].mxu0 %v3096
      %v3206 = vpop.f32.mrb[0].mxu0
      %v3207 = vadd.f32 0.0, %v3206
      %v3208 = vpop.f32.mrb[0].mxu0
      %3209 = vmatprep.mubr.f32.mxu0 0.0
      %3210 = vmatmul.mubr.f32.gmra.mrb[0].mxu0 %v3098
      %v3211 = vpop.f32.mrb[0].mxu0
      %v3212 = vadd.f32 0.0, %v3211
      %v3213 = vpop.f32.mrb[0].mxu0
      %3214 = vmatprep.mubr.f32.mxu0 0.0
      %3215 = vmatmul.mubr.f32.gmra.mrb[0].mxu0 %v3100
      %v3216 = vpop.f32.mrb[0].mxu0
      %v3217 = vadd.f32 0.0, %v3216
      %v3218 = vpop.f32.mrb[0].mxu0
      %3219 = vmatprep.mubr.f32.mxu0 0.0
      %3220 = vmatmul.mubr.f32.gmra.mrb[0].mxu0 %v3102
      %v3221 = vpop.f32.mrb[0].mxu0
      %v3222 = vadd.f32 0.0, %v3221
      %v3223 = vpop.f32.mrb[0].mxu0
      %3224 = vdwg.mxu0
      %v3225 = vsel %vm675, %v3187, -inf
      %3226 = vmax.xlane.f32.xlu0 %v3225
      %v3227 = vpop.xlane.xlu0 %3226
      %v3228 = vsel %vm675, %v3192, -inf
      %3229 = vmax.xlane.f32.xlu0 %v3228
      %v3230 = vpop.xlane.xlu0 %3229
      %v3231 = vsel %vm675, %v3197, -inf
      %3232 = vmax.xlane.f32.xlu0 %v3231
      %v3233 = vpop.xlane.xlu0 %3232
      %v3234 = vsel %vm675, %v3202, -inf
      %3235 = vmax.xlane.f32.xlu0 %v3234
      %v3236 = vpop.xlane.xlu0 %3235
      %v3237 = vsel %vm675, %v3207, -inf
      %3238 = vmax.xlane.f32.xlu0 %v3237
      %v3239 = vpop.xlane.xlu0 %3238
      %v3240 = vsel %vm675, %v3212, -inf
      %3241 = vmax.xlane.f32.xlu0 %v3240
      %v3242 = vpop.xlane.xlu0 %3241
      %v3243 = vsel %vm675, %v3217, -inf
      %3244 = vmax.xlane.f32.xlu0 %v3243
      %v3245 = vpop.xlane.xlu0 %3244
      %v3246 = vsel %vm675, %v3222, -inf
      %3247 = vmax.xlane.f32.xlu0 %v3246
      %v3248 = vpop.xlane.xlu0 %3247
      %v3249 = vsub.f32 %v3187, %v3227
      %v3250 = vsub.f32 %v3192, %v3230
      %v3251 = vsub.f32 %v3197, %v3233
      %v3252 = vsub.f32 %v3202, %v3236
      %v3253 = vsub.f32 %v3207, %v3239
      %v3254 = vsub.f32 %v3212, %v3242
      %v3255 = vsub.f32 %v3217, %v3245
      %v3256 = vsub.f32 %v3222, %v3248
      %v3257 = vmul.f32 %v3249, 1.442695
      %v3258 = vpow.pop %v3257
      %v3259 = vmul.f32 %v3250, 1.442695
      %v3260 = vpow.pop %v3259
      %v3261 = vmul.f32 %v3251, 1.442695
      %v3262 = vpow.pop %v3261
      %v3263 = vmul.f32 %v3252, 1.442695
      %v3264 = vpow.pop %v3263
      %v3265 = vmul.f32 %v3253, 1.442695
      %v3266 = vpow.pop %v3265
      %v3267 = vmul.f32 %v3254, 1.442695
      %v3268 = vpow.pop %v3267
      %v3269 = vmul.f32 %v3255, 1.442695
      %v3270 = vpow.pop %v3269
      %v3271 = vmul.f32 %v3256, 1.442695
      %v3272 = vpow.pop %v3271
      %v3273 = vsel %vm675, %v3258, 0.0
      %3274 = vadd.xlane.f32.xlu0 %v3273
      %v3275 = vpop.xlane.xlu0 %3274
      %v3276 = vsel %vm675, %v3260, 0.0
      %3277 = vadd.xlane.f32.xlu0 %v3276
      %v3278 = vpop.xlane.xlu0 %3277
      %v3279 = vsel %vm675, %v3262, 0.0
      %3280 = vadd.xlane.f32.xlu0 %v3279
      %v3281 = vpop.xlane.xlu0 %3280
      %v3282 = vsel %vm675, %v3264, 0.0
      %3283 = vadd.xlane.f32.xlu0 %v3282
      %v3284 = vpop.xlane.xlu0 %3283
      %v3285 = vsel %vm675, %v3266, 0.0
      %3286 = vadd.xlane.f32.xlu0 %v3285
      %v3287 = vpop.xlane.xlu0 %3286
      %v3288 = vsel %vm675, %v3268, 0.0
      %3289 = vadd.xlane.f32.xlu0 %v3288
      %v3290 = vpop.xlane.xlu0 %3289
      %v3291 = vsel %vm675, %v3270, 0.0
      %3292 = vadd.xlane.f32.xlu0 %v3291
      %v3293 = vpop.xlane.xlu0 %3292
      %v3294 = vsel %vm675, %v3272, 0.0
      %3295 = vadd.xlane.f32.xlu0 %v3294
      %v3296 = vpop.xlane.xlu0 %3295
      %v3297 = vrcp.pop %v3275
      %v3298 = vrcp.pop %v3278
      %v3299 = vrcp.pop %v3281
      %v3300 = vrcp.pop %v3284
      %v3301 = vrcp.pop %v3287
      %v3302 = vrcp.pop %v3290
      %v3303 = vrcp.pop %v3293
      %v3304 = vrcp.pop %v3296
      %v3305 = vmul.f32 %v3258, %v3297
      %v3306 = vmul.f32 %v3260, %v3298
      %v3307 = vmul.f32 %v3262, %v3299
      %v3308 = vmul.f32 %v3264, %v3300
      %v3309 = vmul.f32 %v3266, %v3301
      %v3310 = vmul.f32 %v3268, %v3302
      %v3311 = vmul.f32 %v3270, %v3303
      %v3312 = vmul.f32 %v3272, %v3304
      %3313 = vrot.lane.b32.xlu0 %v445, 96
      %v3314 = vpop.permute.xlu0 %3313
      %3315 = vrot.lane.b32.xlu0 %v451, 96
      %v3316 = vpop.permute.xlu0 %3315
      %3317 = vrot.lane.b32.xlu0 %v457, 96
      %v3318 = vpop.permute.xlu0 %3317
      %3319 = vrot.lane.b32.xlu0 %v463, 96
      %v3320 = vpop.permute.xlu0 %3319
      %3321 = vrot.lane.b32.xlu0 %v469, 96
      %v3322 = vpop.permute.xlu0 %3321
      %3323 = vrot.lane.b32.xlu0 %v475, 96
      %v3324 = vpop.permute.xlu0 %3323
      %3325 = vrot.lane.b32.xlu0 %v481, 96
      %v3326 = vpop.permute.xlu0 %3325
      %3327 = vrot.lane.b32.xlu0 %v487, 96
      %v3328 = vpop.permute.xlu0 %3327
      %v3338 = vsel %vm675, %v3305, 0
      %v3341 = vsel %vm675, %v3306, 0
      %v3344 = vsel %vm675, %v3307, 0
      %v3347 = vsel %vm675, %v3308, 0
      %v3350 = vsel %vm675, %v3309, 0
      %v3353 = vsel %vm675, %v3310, 0
      %v3356 = vsel %vm675, %v3311, 0
      %v3359 = vsel %vm675, %v3312, 0
      %3361 = vmatprep.subr.mxu0 0.0
      %3362 = vmatpush1.msra.mxu0 %v3314
      %3363 = vmatprep.subr.mxu0 0.0
      %3364 = vmatpush1.msra.mxu0 %v3316
      %3365 = vmatprep.subr.mxu0 0.0
      %3366 = vmatpush1.msra.mxu0 %v3318
      %3367 = vmatprep.subr.mxu0 0.0
      %3368 = vmatpush1.msra.mxu0 %v3320
      %3369 = vmatprep.subr.mxu0 0.0
      %3370 = vmatpush1.msra.mxu0 %v3322
      %3371 = vmatprep.subr.mxu0 0.0
      %3372 = vmatpush1.msra.mxu0 %v3324
      %3373 = vmatprep.subr.mxu0 0.0
      %3374 = vmatpush1.msra.mxu0 %v3326
      %3375 = vmatprep.subr.mxu0 0.0
      %3376 = vmatpush1.msra.mxu0 %v3328
      %3377 = vmatprep.subr.mxu0 0.0
      %3378 = vmatpush1.msra.mxu0 0.0
      %3379 = vmatprep.subr.mxu0 0.0
      %3380 = vmatpush1.msra.mxu0 0.0
      %3381 = vmatprep.subr.mxu0 0.0
      %3382 = vmatpush1.msra.mxu0 0.0
      %3383 = vmatprep.subr.mxu0 0.0
      %3384 = vmatpush1.msra.mxu0 0.0
      %3385 = vmatprep.subr.mxu0 0.0
      %3386 = vmatpush1.msra.mxu0 0.0
      %3387 = vmatprep.subr.mxu0 0.0
      %3388 = vmatpush1.msra.mxu0 0.0
      %3389 = vmatprep.subr.mxu0 0.0
      %3390 = vmatpush1.msra.mxu0 0.0
      %3391 = vmatprep.subr.mxu0 0.0
      %3392 = vmatpush1.msra.mxu0 0.0
      %3393 = vmatprep.subr.mxu0 0.0
      %3394 = vmatpush1.msra.mxu0 0.0
      %3395 = vmatprep.subr.mxu0 0.0
      %3396 = vmatpush1.msra.mxu0 0.0
      %3397 = vmatprep.subr.mxu0 0.0
      %3398 = vmatpush1.msra.mxu0 0.0
      %3399 = vmatprep.subr.mxu0 0.0
      %3400 = vmatpush1.msra.mxu0 0.0
      %3401 = vmatprep.subr.mxu0 0.0
      %3402 = vmatpush1.msra.mxu0 0.0
      %3403 = vmatprep.subr.mxu0 0.0
      %3404 = vmatpush1.msra.mxu0 0.0
      %3405 = vmatprep.subr.mxu0 0.0
      %3406 = vmatpush1.msra.mxu0 0.0
      %3407 = vmatprep.subr.mxu0 0.0
      %3408 = vmatpush1.msra.mxu0 0.0
      %3409 = vmatprep.subr.mxu0 0.0
      %3410 = vmatpush1.msra.mxu0 0.0
      %3411 = vmatprep.subr.mxu0 0.0
      %3412 = vmatpush1.msra.mxu0 0.0
      %3413 = vmatprep.subr.mxu0 0.0
      %3414 = vmatpush1.msra.mxu0 0.0
      %3415 = vmatprep.subr.mxu0 0.0
      %3416 = vmatpush1.msra.mxu0 0.0
      %3417 = vmatprep.subr.mxu0 0.0
      %3418 = vmatpush1.msra.mxu0 0.0
      %3419 = vmatprep.subr.mxu0 0.0
      %3420 = vmatpush1.msra.mxu0 0.0
      %3421 = vmatprep.subr.mxu0 0.0
      %3422 = vmatpush1.msra.mxu0 0.0
      %3423 = vmatprep.subr.mxu0 0.0
      %3424 = vmatpush1.msra.mxu0 0.0
      %3425 = vmatprep.mubr.f32.mxu0 0.0
      %3426 = vmatmul.mubr.f32.gmra.mrb[0].mxu0 %v3338
      %v3427 = vpop.f32.mrb[0].mxu0
      %v3428 = vadd.f32 0.0, %v3427
      %v3429 = vpop.f32.mrb[0].mxu0
      %3430 = vmatprep.mubr.f32.mxu0 0.0
      %3431 = vmatmul.mubr.f32.gmra.mrb[0].mxu0 %v3341
      %v3432 = vpop.f32.mrb[0].mxu0
      %v3433 = vadd.f32 0.0, %v3432
      %v3434 = vpop.f32.mrb[0].mxu0
      %3435 = vmatprep.mubr.f32.mxu0 0.0
      %3436 = vmatmul.mubr.f32.gmra.mrb[0].mxu0 %v3344
      %v3437 = vpop.f32.mrb[0].mxu0
      %v3438 = vadd.f32 0.0, %v3437
      %v3439 = vpop.f32.mrb[0].mxu0
      %3440 = vmatprep.mubr.f32.mxu0 0.0
      %3441 = vmatmul.mubr.f32.gmra.mrb[0].mxu0 %v3347
      %v3442 = vpop.f32.mrb[0].mxu0
      %v3443 = vadd.f32 0.0, %v3442
      %v3444 = vpop.f32.mrb[0].mxu0
      %3445 = vmatprep.mubr.f32.mxu0 0.0
      %3446 = vmatmul.mubr.f32.gmra.mrb[0].mxu0 %v3350
      %v3447 = vpop.f32.mrb[0].mxu0
      %v3448 = vadd.f32 0.0, %v3447
      %v3449 = vpop.f32.mrb[0].mxu0
      %3450 = vmatprep.mubr.f32.mxu0 0.0
      %3451 = vmatmul.mubr.f32.gmra.mrb[0].mxu0 %v3353
      %v3452 = vpop.f32.mrb[0].mxu0
      %v3453 = vadd.f32 0.0, %v3452
      %v3454 = vpop.f32.mrb[0].mxu0
      %3455 = vmatprep.mubr.f32.mxu0 0.0
      %3456 = vmatmul.mubr.f32.gmra.mrb[0].mxu0 %v3356
      %v3457 = vpop.f32.mrb[0].mxu0
      %v3458 = vadd.f32 0.0, %v3457
      %v3459 = vpop.f32.mrb[0].mxu0
      %3460 = vmatprep.mubr.f32.mxu0 0.0
      %3461 = vmatmul.mubr.f32.gmra.mrb[0].mxu0 %v3359
      %v3462 = vpop.f32.mrb[0].mxu0
      %v3463 = vadd.f32 0.0, %v3462
      %v3464 = vpop.f32.mrb[0].mxu0
      %3465 = vdwg.mxu0
      %3466 = vrot.lane.b32.xlu0 %v497, 80
      %v3467 = vpop.permute.xlu0 %3466
      %3468 = vrot.lane.b32.xlu0 %v498, 80
      %v3469 = vpop.permute.xlu0 %3468
      %3470 = vrot.lane.b32.xlu0 %v499, 80
      %v3471 = vpop.permute.xlu0 %3470
      %3472 = vrot.lane.b32.xlu0 %v500, 80
      %v3473 = vpop.permute.xlu0 %3472
      %3474 = vrot.lane.b32.xlu0 %v501, 80
      %v3475 = vpop.permute.xlu0 %3474
      %3476 = vrot.lane.b32.xlu0 %v502, 80
      %v3477 = vpop.permute.xlu0 %3476
      %3478 = vrot.lane.b32.xlu0 %v503, 80
      %v3479 = vpop.permute.xlu0 %3478
      %3480 = vrot.lane.b32.xlu0 %v504, 80
      %v3481 = vpop.permute.xlu0 %3480
      %3482 = vrot.lane.b32.xlu0 %v443, 16
      %v3483 = vpop.permute.xlu0 %3482
      %3484 = vrot.lane.b32.xlu0 %v449, 16
      %v3485 = vpop.permute.xlu0 %3484
      %3486 = vrot.lane.b32.xlu0 %v455, 16
      %v3487 = vpop.permute.xlu0 %3486
      %3488 = vrot.lane.b32.xlu0 %v461, 16
      %v3489 = vpop.permute.xlu0 %3488
      %3490 = vrot.lane.b32.xlu0 %v467, 16
      %v3491 = vpop.permute.xlu0 %3490
      %3492 = vrot.lane.b32.xlu0 %v473, 16
      %v3493 = vpop.permute.xlu0 %3492
      %3494 = vrot.lane.b32.xlu0 %v479, 16
      %v3495 = vpop.permute.xlu0 %3494
      %3496 = vrot.lane.b32.xlu0 %v485, 16
      %v3497 = vpop.permute.xlu0 %3496
      %v3498 = vsel %vm529, %v3467, 0
      %v3500 = vsel %vm529, %v3469, 0
      %v3502 = vsel %vm529, %v3471, 0
      %v3504 = vsel %vm529, %v3473, 0
      %v3506 = vsel %vm529, %v3475, 0
      %v3508 = vsel %vm529, %v3477, 0
      %v3510 = vsel %vm529, %v3479, 0
      %v3512 = vsel %vm529, %v3481, 0
      %v3514 = vsel %vm529, %v3483, 0
      %v3516 = vsel %vm529, %v3485, 0
      %v3518 = vsel %vm529, %v3487, 0
      %v3520 = vsel %vm529, %v3489, 0
      %v3522 = vsel %vm529, %v3491, 0
      %v3524 = vsel %vm529, %v3493, 0
      %v3526 = vsel %vm529, %v3495, 0
      %v3528 = vsel %vm529, %v3497, 0
      %3530 = vmatprep.subr.mxu0 0.0
      %3531 = vmatpush1.xpose.msra.mxu0 %v3514
      %3532 = vmatprep.subr.mxu0 0.0
      %3533 = vmatpush1.xpose.msra.mxu0 %v3516
      %3534 = vmatprep.subr.mxu0 0.0
      %3535 = vmatpush1.xpose.msra.mxu0 %v3518
      %3536 = vmatprep.subr.mxu0 0.0
      %3537 = vmatpush1.xpose.msra.mxu0 %v3520
      %3538 = vmatprep.subr.mxu0 0.0
      %3539 = vmatpush1.xpose.msra.mxu0 %v3522
      %3540 = vmatprep.subr.mxu0 0.0
      %3541 = vmatpush1.xpose.msra.mxu0 %v3524
      %3542 = vmatprep.subr.mxu0 0.0
      %3543 = vmatpush1.xpose.msra.mxu0 %v3526
      %3544 = vmatprep.subr.mxu0 0.0
      %3545 = vmatpush1.xpose.msra.mxu0 %v3528
      %3546 = vmatprep.subr.mxu0 0.0
      %3547 = vmatpush1.xpose.msra.mxu0 0.0
      %3548 = vmatprep.subr.mxu0 0.0
      %3549 = vmatpush1.xpose.msra.mxu0 0.0
      %3550 = vmatprep.subr.mxu0 0.0
      %3551 = vmatpush1.xpose.msra.mxu0 0.0
      %3552 = vmatprep.subr.mxu0 0.0
      %3553 = vmatpush1.xpose.msra.mxu0 0.0
      %3554 = vmatprep.subr.mxu0 0.0
      %3555 = vmatpush1.xpose.msra.mxu0 0.0
      %3556 = vmatprep.subr.mxu0 0.0
      %3557 = vmatpush1.xpose.msra.mxu0 0.0
      %3558 = vmatprep.subr.mxu0 0.0
      %3559 = vmatpush1.xpose.msra.mxu0 0.0
      %3560 = vmatprep.subr.mxu0 0.0
      %3561 = vmatpush1.xpose.msra.mxu0 0.0
      %3562 = vmatprep.subr.mxu0 0.0
      %3563 = vmatpush1.xpose.msra.mxu0 0.0
      %3564 = vmatprep.subr.mxu0 0.0
      %3565 = vmatpush1.xpose.msra.mxu0 0.0
      %3566 = vmatprep.subr.mxu0 0.0
      %3567 = vmatpush1.xpose.msra.mxu0 0.0
      %3568 = vmatprep.subr.mxu0 0.0
      %3569 = vmatpush1.xpose.msra.mxu0 0.0
      %3570 = vmatprep.subr.mxu0 0.0
      %3571 = vmatpush1.xpose.msra.mxu0 0.0
      %3572 = vmatprep.subr.mxu0 0.0
      %3573 = vmatpush1.xpose.msra.mxu0 0.0
      %3574 = vmatprep.subr.mxu0 0.0
      %3575 = vmatpush1.xpose.msra.mxu0 0.0
      %3576 = vmatprep.subr.mxu0 0.0
      %3577 = vmatpush1.xpose.msra.mxu0 0.0
      %3578 = vmatprep.subr.mxu0 0.0
      %3579 = vmatpush1.xpose.msra.mxu0 0.0
      %3580 = vmatprep.subr.mxu0 0.0
      %3581 = vmatpush1.xpose.msra.mxu0 0.0
      %3582 = vmatprep.subr.mxu0 0.0
      %3583 = vmatpush1.xpose.msra.mxu0 0.0
      %3584 = vmatprep.subr.mxu0 0.0
      %3585 = vmatpush1.xpose.msra.mxu0 0.0
      %3586 = vmatprep.subr.mxu0 0.0
      %3587 = vmatpush1.xpose.msra.mxu0 0.0
      %3588 = vmatprep.subr.mxu0 0.0
      %3589 = vmatpush1.xpose.msra.mxu0 0.0
      %3590 = vmatprep.subr.mxu0 0.0
      %3591 = vmatpush1.xpose.msra.mxu0 0.0
      %3592 = vmatprep.subr.mxu0 0.0
      %3593 = vmatpush1.xpose.msra.mxu0 0.0
      %3594 = vmatprep.mubr.f32.mxu0 0.0
      %3595 = vmatmul.mubr.f32.gmra.mrb[0].mxu0 %v3498
      %v3596 = vpop.f32.mrb[0].mxu0
      %v3597 = vadd.f32 0.0, %v3596
      %v3598 = vpop.f32.mrb[0].mxu0
      %3599 = vmatprep.mubr.f32.mxu0 0.0
      %3600 = vmatmul.mubr.f32.gmra.mrb[0].mxu0 %v3500
      %v3601 = vpop.f32.mrb[0].mxu0
      %v3602 = vadd.f32 0.0, %v3601
      %v3603 = vpop.f32.mrb[0].mxu0
      %3604 = vmatprep.mubr.f32.mxu0 0.0
      %3605 = vmatmul.mubr.f32.gmra.mrb[0].mxu0 %v3502
      %v3606 = vpop.f32.mrb[0].mxu0
      %v3607 = vadd.f32 0.0, %v3606
      %v3608 = vpop.f32.mrb[0].mxu0
      %3609 = vmatprep.mubr.f32.mxu0 0.0
      %3610 = vmatmul.mubr.f32.gmra.mrb[0].mxu0 %v3504
      %v3611 = vpop.f32.mrb[0].mxu0
      %v3612 = vadd.f32 0.0, %v3611
      %v3613 = vpop.f32.mrb[0].mxu0
      %3614 = vmatprep.mubr.f32.mxu0 0.0
      %3615 = vmatmul.mubr.f32.gmra.mrb[0].mxu0 %v3506
      %v3616 = vpop.f32.mrb[0].mxu0
      %v3617 = vadd.f32 0.0, %v3616
      %v3618 = vpop.f32.mrb[0].mxu0
      %3619 = vmatprep.mubr.f32.mxu0 0.0
      %3620 = vmatmul.mubr.f32.gmra.mrb[0].mxu0 %v3508
      %v3621 = vpop.f32.mrb[0].mxu0
      %v3622 = vadd.f32 0.0, %v3621
      %v3623 = vpop.f32.mrb[0].mxu0
      %3624 = vmatprep.mubr.f32.mxu0 0.0
      %3625 = vmatmul.mubr.f32.gmra.mrb[0].mxu0 %v3510
      %v3626 = vpop.f32.mrb[0].mxu0
      %v3627 = vadd.f32 0.0, %v3626
      %v3628 = vpop.f32.mrb[0].mxu0
      %3629 = vmatprep.mubr.f32.mxu0 0.0
      %3630 = vmatmul.mubr.f32.gmra.mrb[0].mxu0 %v3512
      %v3631 = vpop.f32.mrb[0].mxu0
      %v3632 = vadd.f32 0.0, %v3631
      %v3633 = vpop.f32.mrb[0].mxu0
      %3634 = vdwg.mxu0
      %v3635 = vsel %vm675, %v3597, -inf
      %3636 = vmax.xlane.f32.xlu0 %v3635
      %v3637 = vpop.xlane.xlu0 %3636
      %v3638 = vsel %vm675, %v3602, -inf
      %3639 = vmax.xlane.f32.xlu0 %v3638
      %v3640 = vpop.xlane.xlu0 %3639
      %v3641 = vsel %vm675, %v3607, -inf
      %3642 = vmax.xlane.f32.xlu0 %v3641
      %v3643 = vpop.xlane.xlu0 %3642
      %v3644 = vsel %vm675, %v3612, -inf
      %3645 = vmax.xlane.f32.xlu0 %v3644
      %v3646 = vpop.xlane.xlu0 %3645
      %v3647 = vsel %vm675, %v3617, -inf
      %3648 = vmax.xlane.f32.xlu0 %v3647
      %v3649 = vpop.xlane.xlu0 %3648
      %v3650 = vsel %vm675, %v3622, -inf
      %3651 = vmax.xlane.f32.xlu0 %v3650
      %v3652 = vpop.xlane.xlu0 %3651
      %v3653 = vsel %vm675, %v3627, -inf
      %3654 = vmax.xlane.f32.xlu0 %v3653
      %v3655 = vpop.xlane.xlu0 %3654
      %v3656 = vsel %vm675, %v3632, -inf
      %3657 = vmax.xlane.f32.xlu0 %v3656
      %v3658 = vpop.xlane.xlu0 %3657
      %v3659 = vsub.f32 %v3597, %v3637
      %v3660 = vsub.f32 %v3602, %v3640
      %v3661 = vsub.f32 %v3607, %v3643
      %v3662 = vsub.f32 %v3612, %v3646
      %v3663 = vsub.f32 %v3617, %v3649
      %v3664 = vsub.f32 %v3622, %v3652
      %v3665 = vsub.f32 %v3627, %v3655
      %v3666 = vsub.f32 %v3632, %v3658
      %v3667 = vmul.f32 %v3659, 1.442695
      %v3668 = vpow.pop %v3667
      %v3669 = vmul.f32 %v3660, 1.442695
      %v3670 = vpow.pop %v3669
      %v3671 = vmul.f32 %v3661, 1.442695
      %v3672 = vpow.pop %v3671
      %v3673 = vmul.f32 %v3662, 1.442695
      %v3674 = vpow.pop %v3673
      %v3675 = vmul.f32 %v3663, 1.442695
      %v3676 = vpow.pop %v3675
      %v3677 = vmul.f32 %v3664, 1.442695
      %v3678 = vpow.pop %v3677
      %v3679 = vmul.f32 %v3665, 1.442695
      %v3680 = vpow.pop %v3679
      %v3681 = vmul.f32 %v3666, 1.442695
      %v3682 = vpow.pop %v3681
      %v3683 = vsel %vm675, %v3668, 0.0
      %3684 = vadd.xlane.f32.xlu0 %v3683
      %v3685 = vpop.xlane.xlu0 %3684
      %v3686 = vsel %vm675, %v3670, 0.0
      %3687 = vadd.xlane.f32.xlu0 %v3686
      %v3688 = vpop.xlane.xlu0 %3687
      %v3689 = vsel %vm675, %v3672, 0.0
      %3690 = vadd.xlane.f32.xlu0 %v3689
      %v3691 = vpop.xlane.xlu0 %3690
      %v3692 = vsel %vm675, %v3674, 0.0
      %3693 = vadd.xlane.f32.xlu0 %v3692
      %v3694 = vpop.xlane.xlu0 %3693
      %v3695 = vsel %vm675, %v3676, 0.0
      %3696 = vadd.xlane.f32.xlu0 %v3695
      %v3697 = vpop.xlane.xlu0 %3696
      %v3698 = vsel %vm675, %v3678, 0.0
      %3699 = vadd.xlane.f32.xlu0 %v3698
      %v3700 = vpop.xlane.xlu0 %3699
      %v3701 = vsel %vm675, %v3680, 0.0
      %3702 = vadd.xlane.f32.xlu0 %v3701
      %v3703 = vpop.xlane.xlu0 %3702
      %v3704 = vsel %vm675, %v3682, 0.0
      %3705 = vadd.xlane.f32.xlu0 %v3704
      %v3706 = vpop.xlane.xlu0 %3705
      %v3707 = vrcp.pop %v3685
      %v3708 = vrcp.pop %v3688
      %v3709 = vrcp.pop %v3691
      %v3710 = vrcp.pop %v3694
      %v3711 = vrcp.pop %v3697
      %v3712 = vrcp.pop %v3700
      %v3713 = vrcp.pop %v3703
      %v3714 = vrcp.pop %v3706
      %v3715 = vmul.f32 %v3668, %v3707
      %v3716 = vmul.f32 %v3670, %v3708
      %v3717 = vmul.f32 %v3672, %v3709
      %v3718 = vmul.f32 %v3674, %v3710
      %v3719 = vmul.f32 %v3676, %v3711
      %v3720 = vmul.f32 %v3678, %v3712
      %v3721 = vmul.f32 %v3680, %v3713
      %v3722 = vmul.f32 %v3682, %v3714
      %3723 = vrot.lane.b32.xlu0 %v445, 80
      %v3724 = vpop.permute.xlu0 %3723
      %3725 = vrot.lane.b32.xlu0 %v451, 80
      %v3726 = vpop.permute.xlu0 %3725
      %3727 = vrot.lane.b32.xlu0 %v457, 80
      %v3728 = vpop.permute.xlu0 %3727
      %3729 = vrot.lane.b32.xlu0 %v463, 80
      %v3730 = vpop.permute.xlu0 %3729
      %3731 = vrot.lane.b32.xlu0 %v469, 80
      %v3732 = vpop.permute.xlu0 %3731
      %3733 = vrot.lane.b32.xlu0 %v475, 80
      %v3734 = vpop.permute.xlu0 %3733
      %3735 = vrot.lane.b32.xlu0 %v481, 80
      %v3736 = vpop.permute.xlu0 %3735
      %3737 = vrot.lane.b32.xlu0 %v487, 80
      %v3738 = vpop.permute.xlu0 %3737
      %v3748 = vsel %vm675, %v3715, 0
      %v3751 = vsel %vm675, %v3716, 0
      %v3754 = vsel %vm675, %v3717, 0
      %v3757 = vsel %vm675, %v3718, 0
      %v3760 = vsel %vm675, %v3719, 0
      %v3763 = vsel %vm675, %v3720, 0
      %v3766 = vsel %vm675, %v3721, 0
      %v3769 = vsel %vm675, %v3722, 0
      %3771 = vmatprep.subr.mxu0 0.0
      %3772 = vmatpush1.msra.mxu0 %v3724
      %3773 = vmatprep.subr.mxu0 0.0
      %3774 = vmatpush1.msra.mxu0 %v3726
      %3775 = vmatprep.subr.mxu0 0.0
      %3776 = vmatpush1.msra.mxu0 %v3728
      %3777 = vmatprep.subr.mxu0 0.0
      %3778 = vmatpush1.msra.mxu0 %v3730
      %3779 = vmatprep.subr.mxu0 0.0
      %3780 = vmatpush1.msra.mxu0 %v3732
      %3781 = vmatprep.subr.mxu0 0.0
      %3782 = vmatpush1.msra.mxu0 %v3734
      %3783 = vmatprep.subr.mxu0 0.0
      %3784 = vmatpush1.msra.mxu0 %v3736
      %3785 = vmatprep.subr.mxu0 0.0
      %3786 = vmatpush1.msra.mxu0 %v3738
      %3787 = vmatprep.subr.mxu0 0.0
      %3788 = vmatpush1.msra.mxu0 0.0
      %3789 = vmatprep.subr.mxu0 0.0
      %3790 = vmatpush1.msra.mxu0 0.0
      %3791 = vmatprep.subr.mxu0 0.0
      %3792 = vmatpush1.msra.mxu0 0.0
      %3793 = vmatprep.subr.mxu0 0.0
      %3794 = vmatpush1.msra.mxu0 0.0
      %3795 = vmatprep.subr.mxu0 0.0
      %3796 = vmatpush1.msra.mxu0 0.0
      %3797 = vmatprep.subr.mxu0 0.0
      %3798 = vmatpush1.msra.mxu0 0.0
      %3799 = vmatprep.subr.mxu0 0.0
      %3800 = vmatpush1.msra.mxu0 0.0
      %3801 = vmatprep.subr.mxu0 0.0
      %3802 = vmatpush1.msra.mxu0 0.0
      %3803 = vmatprep.subr.mxu0 0.0
      %3804 = vmatpush1.msra.mxu0 0.0
      %3805 = vmatprep.subr.mxu0 0.0
      %3806 = vmatpush1.msra.mxu0 0.0
      %3807 = vmatprep.subr.mxu0 0.0
      %3808 = vmatpush1.msra.mxu0 0.0
      %3809 = vmatprep.subr.mxu0 0.0
      %3810 = vmatpush1.msra.mxu0 0.0
      %3811 = vmatprep.subr.mxu0 0.0
      %3812 = vmatpush1.msra.mxu0 0.0
      %3813 = vmatprep.subr.mxu0 0.0
      %3814 = vmatpush1.msra.mxu0 0.0
      %3815 = vmatprep.subr.mxu0 0.0
      %3816 = vmatpush1.msra.mxu0 0.0
      %3817 = vmatprep.subr.mxu0 0.0
      %3818 = vmatpush1.msra.mxu0 0.0
      %3819 = vmatprep.subr.mxu0 0.0
      %3820 = vmatpush1.msra.mxu0 0.0
      %3821 = vmatprep.subr.mxu0 0.0
      %3822 = vmatpush1.msra.mxu0 0.0
      %3823 = vmatprep.subr.mxu0 0.0
      %3824 = vmatpush1.msra.mxu0 0.0
      %3825 = vmatprep.subr.mxu0 0.0
      %3826 = vmatpush1.msra.mxu0 0.0
      %3827 = vmatprep.subr.mxu0 0.0
      %3828 = vmatpush1.msra.mxu0 0.0
      %3829 = vmatprep.subr.mxu0 0.0
      %3830 = vmatpush1.msra.mxu0 0.0
      %3831 = vmatprep.subr.mxu0 0.0
      %3832 = vmatpush1.msra.mxu0 0.0
      %3833 = vmatprep.subr.mxu0 0.0
      %3834 = vmatpush1.msra.mxu0 0.0
      %3835 = vmatprep.mubr.f32.mxu0 0.0
      %3836 = vmatmul.mubr.f32.gmra.mrb[0].mxu0 %v3748
      %v3837 = vpop.f32.mrb[0].mxu0
      %v3838 = vadd.f32 0.0, %v3837
      %v3839 = vpop.f32.mrb[0].mxu0
      %3840 = vmatprep.mubr.f32.mxu0 0.0
      %3841 = vmatmul.mubr.f32.gmra.mrb[0].mxu0 %v3751
      %v3842 = vpop.f32.mrb[0].mxu0
      %v3843 = vadd.f32 0.0, %v3842
      %v3844 = vpop.f32.mrb[0].mxu0
      %3845 = vmatprep.mubr.f32.mxu0 0.0
      %3846 = vmatmul.mubr.f32.gmra.mrb[0].mxu0 %v3754
      %v3847 = vpop.f32.mrb[0].mxu0
      %v3848 = vadd.f32 0.0, %v3847
      %v3849 = vpop.f32.mrb[0].mxu0
      %3850 = vmatprep.mubr.f32.mxu0 0.0
      %3851 = vmatmul.mubr.f32.gmra.mrb[0].mxu0 %v3757
      %v3852 = vpop.f32.mrb[0].mxu0
      %v3853 = vadd.f32 0.0, %v3852
      %v3854 = vpop.f32.mrb[0].mxu0
      %3855 = vmatprep.mubr.f32.mxu0 0.0
      %3856 = vmatmul.mubr.f32.gmra.mrb[0].mxu0 %v3760
      %v3857 = vpop.f32.mrb[0].mxu0
      %v3858 = vadd.f32 0.0, %v3857
      %v3859 = vpop.f32.mrb[0].mxu0
      %3860 = vmatprep.mubr.f32.mxu0 0.0
      %3861 = vmatmul.mubr.f32.gmra.mrb[0].mxu0 %v3763
      %v3862 = vpop.f32.mrb[0].mxu0
      %v3863 = vadd.f32 0.0, %v3862
      %v3864 = vpop.f32.mrb[0].mxu0
      %3865 = vmatprep.mubr.f32.mxu0 0.0
      %3866 = vmatmul.mubr.f32.gmra.mrb[0].mxu0 %v3766
      %v3867 = vpop.f32.mrb[0].mxu0
      %v3868 = vadd.f32 0.0, %v3867
      %v3869 = vpop.f32.mrb[0].mxu0
      %3870 = vmatprep.mubr.f32.mxu0 0.0
      %3871 = vmatmul.mubr.f32.gmra.mrb[0].mxu0 %v3769
      %v3872 = vpop.f32.mrb[0].mxu0
      %v3873 = vadd.f32 0.0, %v3872
      %v3874 = vpop.f32.mrb[0].mxu0
      %3875 = vdwg.mxu0
      %3884 = vrot.lane.b32.xlu0 %v3018, 16
      %v3885 = vpop.permute.xlu0 %3884
      %3886 = vrot.lane.b32.xlu0 %v3023, 16
      %v3887 = vpop.permute.xlu0 %3886
      %3888 = vrot.lane.b32.xlu0 %v3028, 16
      %v3889 = vpop.permute.xlu0 %3888
      %3890 = vrot.lane.b32.xlu0 %v3033, 16
      %v3891 = vpop.permute.xlu0 %3890
      %3892 = vrot.lane.b32.xlu0 %v3038, 16
      %v3893 = vpop.permute.xlu0 %3892
      %3894 = vrot.lane.b32.xlu0 %v3043, 16
      %v3895 = vpop.permute.xlu0 %3894
      %3896 = vrot.lane.b32.xlu0 %v3048, 16
      %v3897 = vpop.permute.xlu0 %3896
      %3898 = vrot.lane.b32.xlu0 %v3053, 16
      %v3899 = vpop.permute.xlu0 %3898
      %3916 = vrot.lane.b32.xlu0 %v3428, 32
      %v3917 = vpop.permute.xlu0 %3916
      %3918 = vrot.lane.b32.xlu0 %v3433, 32
      %v3919 = vpop.permute.xlu0 %3918
      %3920 = vrot.lane.b32.xlu0 %v3438, 32
      %v3921 = vpop.permute.xlu0 %3920
      %3922 = vrot.lane.b32.xlu0 %v3443, 32
      %v3923 = vpop.permute.xlu0 %3922
      %3924 = vrot.lane.b32.xlu0 %v3448, 32
      %v3925 = vpop.permute.xlu0 %3924
      %3926 = vrot.lane.b32.xlu0 %v3453, 32
      %v3927 = vpop.permute.xlu0 %3926
      %3928 = vrot.lane.b32.xlu0 %v3458, 32
      %v3929 = vpop.permute.xlu0 %3928
      %3930 = vrot.lane.b32.xlu0 %v3463, 32
      %v3931 = vpop.permute.xlu0 %3930
      %3948 = vrot.lane.b32.xlu0 %v3838, 48
      %v3949 = vpop.permute.xlu0 %3948
      %3950 = vrot.lane.b32.xlu0 %v3843, 48
      %v3951 = vpop.permute.xlu0 %3950
      %3952 = vrot.lane.b32.xlu0 %v3848, 48
      %v3953 = vpop.permute.xlu0 %3952
      %3954 = vrot.lane.b32.xlu0 %v3853, 48
      %v3955 = vpop.permute.xlu0 %3954
      %3956 = vrot.lane.b32.xlu0 %v3858, 48
      %v3957 = vpop.permute.xlu0 %3956
      %3958 = vrot.lane.b32.xlu0 %v3863, 48
      %v3959 = vpop.permute.xlu0 %3958
      %3960 = vrot.lane.b32.xlu0 %v3868, 48
      %v3961 = vpop.permute.xlu0 %3960
      %3962 = vrot.lane.b32.xlu0 %v3873, 48
      %v3963 = vpop.permute.xlu0 %3962
      %v3972 = vsel %vm529, %v2600, %v3885
      %v3973 = vsel %vm529, %v2605, %v3887
      %v3974 = vsel %vm529, %v2610, %v3889
      %v3975 = vsel %vm529, %v2615, %v3891
      %v3976 = vsel %vm529, %v2620, %v3893
      %v3977 = vsel %vm529, %v2625, %v3895
      %v3978 = vsel %vm529, %v2630, %v3897
      %v3979 = vsel %vm529, %v2635, %v3899
      %v3980 = vsel %vm279, %v3972, %v3917
      %v3981 = vsel %vm279, %v3973, %v3919
      %v3982 = vsel %vm279, %v3974, %v3921
      %v3983 = vsel %vm279, %v3975, %v3923
      %v3984 = vsel %vm279, %v3976, %v3925
      %v3985 = vsel %vm279, %v3977, %v3927
      %v3986 = vsel %vm279, %v3978, %v3929
      %v3987 = vsel %vm279, %v3979, %v3931
      %v3988 = vsel %vm2243, %v3980, %v3949
      %v3989 = vsel %vm2243, %v3981, %v3951
      %v3990 = vsel %vm2243, %v3982, %v3953
      %v3991 = vsel %vm2243, %v3983, %v3955
      %v3992 = vsel %vm2243, %v3984, %v3957
      %v3993 = vsel %vm2243, %v3985, %v3959
      %v3994 = vsel %vm2243, %v3986, %v3961
      %v3995 = vsel %vm2243, %v3987, %v3963
      %3996 = vrot.lane.b32.xlu0 %v255, 64
      %v3997 = vpop.permute.xlu0 %3996
      %3998 = vrot.lane.b32.xlu0 %v256, 64
      %v3999 = vpop.permute.xlu0 %3998
      %4000 = vrot.lane.b32.xlu0 %v257, 64
      %v4001 = vpop.permute.xlu0 %4000
      %4002 = vrot.lane.b32.xlu0 %v258, 64
      %v4003 = vpop.permute.xlu0 %4002
      %4004 = vrot.lane.b32.xlu0 %v259, 64
      %v4005 = vpop.permute.xlu0 %4004
      %4006 = vrot.lane.b32.xlu0 %v260, 64
      %v4007 = vpop.permute.xlu0 %4006
      %4008 = vrot.lane.b32.xlu0 %v261, 64
      %v4009 = vpop.permute.xlu0 %4008
      %4010 = vrot.lane.b32.xlu0 %v262, 64
      %v4011 = vpop.permute.xlu0 %4010
      %4012 = vrot.lane.b32.xlu0 %v263, 64
      %v4013 = vpop.permute.xlu0 %4012
      %4014 = vrot.lane.b32.xlu0 %v264, 64
      %v4015 = vpop.permute.xlu0 %4014
      %4016 = vrot.lane.b32.xlu0 %v265, 64
      %v4017 = vpop.permute.xlu0 %4016
      %4018 = vrot.lane.b32.xlu0 %v266, 64
      %v4019 = vpop.permute.xlu0 %4018
      %4020 = vrot.lane.b32.xlu0 %v267, 64
      %v4021 = vpop.permute.xlu0 %4020
      %4022 = vrot.lane.b32.xlu0 %v268, 64
      %v4023 = vpop.permute.xlu0 %4022
      %4024 = vrot.lane.b32.xlu0 %v269, 64
      %v4025 = vpop.permute.xlu0 %4024
      %4026 = vrot.lane.b32.xlu0 %v270, 64
      %v4027 = vpop.permute.xlu0 %4026
      %v4044 = vsel %vm675, %v2244, %v3997
      %v4045 = vsel %vm675, %v2245, %v3999
      %v4046 = vsel %vm675, %v2246, %v4001
      %v4047 = vsel %vm675, %v2247, %v4003
      %v4048 = vsel %vm675, %v2248, %v4005
      %v4049 = vsel %vm675, %v2249, %v4007
      %v4050 = vsel %vm675, %v2250, %v4009
      %v4051 = vsel %vm675, %v2251, %v4011
      %v4052 = vsel %vm675, %v3988, %v4013
      %v4053 = vsel %vm675, %v3989, %v4015
      %v4054 = vsel %vm675, %v3990, %v4017
      %v4055 = vsel %vm675, %v3991, %v4019
      %v4056 = vsel %vm675, %v3992, %v4021
      %v4057 = vsel %vm675, %v3993, %v4023
      %v4058 = vsel %vm675, %v3994, %v4025
      %v4059 = vsel %vm675, %v3995, %v4027
      %v4060 = vld [vmem:[%s2] sm:$0xff]
      %v4061 = vld [vmem:[%s2 + $0x8] sm:$0xff]
      %v4062 = vld [vmem:[%s2 + $0x10] sm:$0xff]
      %v4063 = vld [vmem:[%s2 + $0x18] sm:$0xff]
      %v4064 = vld [vmem:[%s2 + $0x20] sm:$0xff]
      %v4065 = vld [vmem:[%s2 + $0x28] sm:$0xff]
      %v4066 = vld [vmem:[%s2 + $0x30] sm:$0xff]
      %v4067 = vld [vmem:[%s2 + $0x38] sm:$0xff]
      %v4068 = vld [vmem:[%s2 + $0x40] sm:$0xff]
      %v4069 = vld [vmem:[%s2 + $0x48] sm:$0xff]
      %v4070 = vld [vmem:[%s2 + $0x50] sm:$0xff]
      %v4071 = vld [vmem:[%s2 + $0x58] sm:$0xff]
      %v4072 = vld [vmem:[%s3] sm:$0x1]
      %v4074 = vlaneseq
      %v4075 = vshrl.u32 %v4074, 7
      %v4076 = vsub.s32 0, %v4075
      %v4077 = vrot.slane %v4072, %v4076
      %vm4079 = vcmask 785408
      %v4081 = vsel %vm4079, %v4044, 0
      %v4084 = vsel %vm4079, %v4045, 0
      %v4087 = vsel %vm4079, %v4046, 0
      %v4090 = vsel %vm4079, %v4047, 0
      %v4093 = vsel %vm4079, %v4048, 0
      %v4096 = vsel %vm4079, %v4049, 0
      %v4099 = vsel %vm4079, %v4050, 0
      %v4102 = vsel %vm4079, %v4051, 0
      %v4105 = vsel %vm4079, %v4052, 0
      %v4108 = vsel %vm4079, %v4053, 0
      %v4111 = vsel %vm4079, %v4054, 0
      %v4114 = vsel %vm4079, %v4055, 0
      %v4117 = vsel %vm4079, %v4056, 0
      %v4120 = vsel %vm4079, %v4057, 0
      %v4123 = vsel %vm4079, %v4058, 0
      %v4126 = vsel %vm4079, %v4059, 0
      %4128 = vmatprep.subr.mxu0 0.0
      %4129 = vmatpush1.msra.mxu0 %v4060
      %4130 = vmatprep.subr.mxu0 0.0
      %4131 = vmatpush1.msra.mxu0 %v4061
      %4132 = vmatprep.subr.mxu0 0.0
      %4133 = vmatpush1.msra.mxu0 %v4062
      %4134 = vmatprep.subr.mxu0 0.0
      %4135 = vmatpush1.msra.mxu0 %v4063
      %4136 = vmatprep.subr.mxu0 0.0
      %4137 = vmatpush1.msra.mxu0 %v4064
      %4138 = vmatprep.subr.mxu0 0.0
      %4139 = vmatpush1.msra.mxu0 %v4065
      %4140 = vmatprep.subr.mxu0 0.0
      %4141 = vmatpush1.msra.mxu0 %v4066
      %4142 = vmatprep.subr.mxu0 0.0
      %4143 = vmatpush1.msra.mxu0 %v4067
      %4144 = vmatprep.subr.mxu0 0.0
      %4145 = vmatpush1.msra.mxu0 %v4068
      %4146 = vmatprep.subr.mxu0 0.0
      %4147 = vmatpush1.msra.mxu0 %v4069
      %4148 = vmatprep.subr.mxu0 0.0
      %4149 = vmatpush1.msra.mxu0 %v4070
      %4150 = vmatprep.subr.mxu0 0.0
      %4151 = vmatpush1.msra.mxu0 %v4071
      %4152 = vmatprep.subr.mxu0 0.0
      %4153 = vmatpush1.msra.mxu0 0.0
      %4154 = vmatprep.subr.mxu0 0.0
      %4155 = vmatpush1.msra.mxu0 0.0
      %4156 = vmatprep.subr.mxu0 0.0
      %4157 = vmatpush1.msra.mxu0 0.0
      %4158 = vmatprep.subr.mxu0 0.0
      %4159 = vmatpush1.msra.mxu0 0.0
      %4160 = vmatprep.subr.mxu0 0.0
      %4161 = vmatpush1.msra.mxu0 0.0
      %4162 = vmatprep.subr.mxu0 0.0
      %4163 = vmatpush1.msra.mxu0 0.0
      %4164 = vmatprep.subr.mxu0 0.0
      %4165 = vmatpush1.msra.mxu0 0.0
      %4166 = vmatprep.subr.mxu0 0.0
      %4167 = vmatpush1.msra.mxu0 0.0
      %4168 = vmatprep.subr.mxu0 0.0
      %4169 = vmatpush1.msra.mxu0 0.0
      %4170 = vmatprep.subr.mxu0 0.0
      %4171 = vmatpush1.msra.mxu0 0.0
      %4172 = vmatprep.subr.mxu0 0.0
      %4173 = vmatpush1.msra.mxu0 0.0
      %4174 = vmatprep.subr.mxu0 0.0
      %4175 = vmatpush1.msra.mxu0 0.0
      %4176 = vmatprep.subr.mxu0 0.0
      %4177 = vmatpush1.msra.mxu0 0.0
      %4178 = vmatprep.subr.mxu0 0.0
      %4179 = vmatpush1.msra.mxu0 0.0
      %4180 = vmatprep.subr.mxu0 0.0
      %4181 = vmatpush1.msra.mxu0 0.0
      %4182 = vmatprep.subr.mxu0 0.0
      %4183 = vmatpush1.msra.mxu0 0.0
      %4184 = vmatprep.subr.mxu0 0.0
      %4185 = vmatpush1.msra.mxu0 0.0
      %4186 = vmatprep.subr.mxu0 0.0
      %4187 = vmatpush1.msra.mxu0 0.0
      %4188 = vmatprep.subr.mxu0 0.0
      %4189 = vmatpush1.msra.mxu0 0.0
      %4190 = vmatprep.subr.mxu0 0.0
      %4191 = vmatpush1.msra.mxu0 0.0
      %4192 = vmatprep.mubr.f32.mxu0 0.0
      %4193 = vmatmul.mubr.f32.gmra.mrb[0].mxu0 %v4081
      %v4194 = vpop.f32.mrb[0].mxu0
      %v4195 = vadd.f32 %v4077, %v4194
      %v4196 = vpop.f32.mrb[0].mxu0
      %4197 = vmatprep.mubr.f32.mxu0 0.0
      %4198 = vmatmul.mubr.f32.gmra.mrb[0].mxu0 %v4084
      %v4199 = vpop.f32.mrb[0].mxu0
      %v4200 = vadd.f32 %v4077, %v4199
      %v4201 = vpop.f32.mrb[0].mxu0
      %4202 = vmatprep.mubr.f32.mxu0 0.0
      %4203 = vmatmul.mubr.f32.gmra.mrb[0].mxu0 %v4087
      %v4204 = vpop.f32.mrb[0].mxu0
      %v4205 = vadd.f32 %v4077, %v4204
      %v4206 = vpop.f32.mrb[0].mxu0
      %4207 = vmatprep.mubr.f32.mxu0 0.0
      %4208 = vmatmul.mubr.f32.gmra.mrb[0].mxu0 %v4090
      %v4209 = vpop.f32.mrb[0].mxu0
      %v4210 = vadd.f32 %v4077, %v4209
      %v4211 = vpop.f32.mrb[0].mxu0
      %4212 = vmatprep.mubr.f32.mxu0 0.0
      %4213 = vmatmul.mubr.f32.gmra.mrb[0].mxu0 %v4093
      %v4214 = vpop.f32.mrb[0].mxu0
      %v4215 = vadd.f32 %v4077, %v4214
      %v4216 = vpop.f32.mrb[0].mxu0
      %4217 = vmatprep.mubr.f32.mxu0 0.0
      %4218 = vmatmul.mubr.f32.gmra.mrb[0].mxu0 %v4096
      %v4219 = vpop.f32.mrb[0].mxu0
      %v4220 = vadd.f32 %v4077, %v4219
      %v4221 = vpop.f32.mrb[0].mxu0
      %4222 = vmatprep.mubr.f32.mxu0 0.0
      %4223 = vmatmul.mubr.f32.gmra.mrb[0].mxu0 %v4099
      %v4224 = vpop.f32.mrb[0].mxu0
      %v4225 = vadd.f32 %v4077, %v4224
      %v4226 = vpop.f32.mrb[0].mxu0
      %4227 = vmatprep.mubr.f32.mxu0 0.0
      %4228 = vmatmul.mubr.f32.gmra.mrb[0].mxu0 %v4102
      %v4229 = vpop.f32.mrb[0].mxu0
      %v4230 = vadd.f32 %v4077, %v4229
      %v4231 = vpop.f32.mrb[0].mxu0
      %4232 = vmatprep.mubr.f32.mxu0 0.0
      %4233 = vmatmul.mubr.f32.gmra.mrb[0].mxu0 %v4105
      %v4234 = vpop.f32.mrb[0].mxu0
      %v4235 = vadd.f32 %v4077, %v4234
      %v4236 = vpop.f32.mrb[0].mxu0
      %4237 = vmatprep.mubr.f32.mxu0 0.0
      %4238 = vmatmul.mubr.f32.gmra.mrb[0].mxu0 %v4108
      %v4239 = vpop.f32.mrb[0].mxu0
      %v4240 = vadd.f32 %v4077, %v4239
      %v4241 = vpop.f32.mrb[0].mxu0
      %4242 = vmatprep.mubr.f32.mxu0 0.0
      %4243 = vmatmul.mubr.f32.gmra.mrb[0].mxu0 %v4111
      %v4244 = vpop.f32.mrb[0].mxu0
      %v4245 = vadd.f32 %v4077, %v4244
      %v4246 = vpop.f32.mrb[0].mxu0
      %4247 = vmatprep.mubr.f32.mxu0 0.0
      %4248 = vmatmul.mubr.f32.gmra.mrb[0].mxu0 %v4114
      %v4249 = vpop.f32.mrb[0].mxu0
      %v4250 = vadd.f32 %v4077, %v4249
      %v4251 = vpop.f32.mrb[0].mxu0
      %4252 = vmatprep.mubr.f32.mxu0 0.0
      %4253 = vmatmul.mubr.f32.gmra.mrb[0].mxu0 %v4117
      %v4254 = vpop.f32.mrb[0].mxu0
      %v4255 = vadd.f32 %v4077, %v4254
      %v4256 = vpop.f32.mrb[0].mxu0
      %4257 = vmatprep.mubr.f32.mxu0 0.0
      %4258 = vmatmul.mubr.f32.gmra.mrb[0].mxu0 %v4120
      %v4259 = vpop.f32.mrb[0].mxu0
      %v4260 = vadd.f32 %v4077, %v4259
      %v4261 = vpop.f32.mrb[0].mxu0
      %4262 = vmatprep.mubr.f32.mxu0 0.0
      %4263 = vmatmul.mubr.f32.gmra.mrb[0].mxu0 %v4123
      %v4264 = vpop.f32.mrb[0].mxu0
      %v4265 = vadd.f32 %v4077, %v4264
      %v4266 = vpop.f32.mrb[0].mxu0
      %4267 = vmatprep.mubr.f32.mxu0 0.0
      %4268 = vmatmul.mubr.f32.gmra.mrb[0].mxu0 %v4126
      %v4269 = vpop.f32.mrb[0].mxu0
      %v4270 = vadd.f32 %v4077, %v4269
      %v4271 = vpop.f32.mrb[0].mxu0
      %4272 = vdwg.mxu0
      %v4273 = vsel %vm2243, %v4195, 0.0
      %4274 = vadd.xlane.f32.xlu0 %v4273
      %v4275 = vpop.xlane.xlu0 %4274
      %v4276 = vsel %vm2243, %v4200, 0.0
      %4277 = vadd.xlane.f32.xlu0 %v4276
      %v4278 = vpop.xlane.xlu0 %4277
      %v4279 = vsel %vm2243, %v4205, 0.0
      %4280 = vadd.xlane.f32.xlu0 %v4279
      %v4281 = vpop.xlane.xlu0 %4280
      %v4282 = vsel %vm2243, %v4210, 0.0
      %4283 = vadd.xlane.f32.xlu0 %v4282
      %v4284 = vpop.xlane.xlu0 %4283
      %v4285 = vsel %vm2243, %v4215, 0.0
      %4286 = vadd.xlane.f32.xlu0 %v4285
      %v4287 = vpop.xlane.xlu0 %4286
      %v4288 = vsel %vm2243, %v4220, 0.0
      %4289 = vadd.xlane.f32.xlu0 %v4288
      %v4290 = vpop.xlane.xlu0 %4289
      %v4291 = vsel %vm2243, %v4225, 0.0
      %4292 = vadd.xlane.f32.xlu0 %v4291
      %v4293 = vpop.xlane.xlu0 %4292
      %v4294 = vsel %vm2243, %v4230, 0.0
      %4295 = vadd.xlane.f32.xlu0 %v4294
      %v4296 = vpop.xlane.xlu0 %4295
      %v4297 = vsel %vm2243, %v4235, 0.0
      %4298 = vadd.xlane.f32.xlu0 %v4297
      %v4299 = vpop.xlane.xlu0 %4298
      %v4300 = vsel %vm2243, %v4240, 0.0
      %4301 = vadd.xlane.f32.xlu0 %v4300
      %v4302 = vpop.xlane.xlu0 %4301
      %v4303 = vsel %vm2243, %v4245, 0.0
      %4304 = vadd.xlane.f32.xlu0 %v4303
      %v4305 = vpop.xlane.xlu0 %4304
      %v4306 = vsel %vm2243, %v4250, 0.0
      %4307 = vadd.xlane.f32.xlu0 %v4306
      %v4308 = vpop.xlane.xlu0 %4307
      %v4309 = vsel %vm2243, %v4255, 0.0
      %4310 = vadd.xlane.f32.xlu0 %v4309
      %v4311 = vpop.xlane.xlu0 %4310
      %v4312 = vsel %vm2243, %v4260, 0.0
      %4313 = vadd.xlane.f32.xlu0 %v4312
      %v4314 = vpop.xlane.xlu0 %4313
      %v4315 = vsel %vm2243, %v4265, 0.0
      %4316 = vadd.xlane.f32.xlu0 %v4315
      %v4317 = vpop.xlane.xlu0 %4316
      %v4318 = vsel %vm2243, %v4270, 0.0
      %4319 = vadd.xlane.f32.xlu0 %v4318
      %v4320 = vpop.xlane.xlu0 %4319
      %v4321 = vrcp.pop 48.0
      %v4322 = vmul.f32 %v4275, %v4321
      %v4323 = vmul.f32 %v4278, %v4321
      %v4324 = vmul.f32 %v4281, %v4321
      %v4325 = vmul.f32 %v4284, %v4321
      %v4326 = vmul.f32 %v4287, %v4321
      %v4327 = vmul.f32 %v4290, %v4321
      %v4328 = vmul.f32 %v4293, %v4321
      %v4329 = vmul.f32 %v4296, %v4321
      %v4330 = vmul.f32 %v4299, %v4321
      %v4331 = vmul.f32 %v4302, %v4321
      %v4332 = vmul.f32 %v4305, %v4321
      %v4333 = vmul.f32 %v4308, %v4321
      %v4334 = vmul.f32 %v4311, %v4321
      %v4335 = vmul.f32 %v4314, %v4321
      %v4336 = vmul.f32 %v4317, %v4321
      %v4337 = vmul.f32 %v4320, %v4321
      %v4338 = vsub.f32 %v4195, %v4322
      %v4339 = vsub.f32 %v4200, %v4323
      %v4340 = vsub.f32 %v4205, %v4324
      %v4341 = vsub.f32 %v4210, %v4325
      %v4342 = vsub.f32 %v4215, %v4326
      %v4343 = vsub.f32 %v4220, %v4327
      %v4344 = vsub.f32 %v4225, %v4328
      %v4345 = vsub.f32 %v4230, %v4329
      %v4346 = vsub.f32 %v4235, %v4330
      %v4347 = vsub.f32 %v4240, %v4331
      %v4348 = vsub.f32 %v4245, %v4332
      %v4349 = vsub.f32 %v4250, %v4333
      %v4350 = vsub.f32 %v4255, %v4334
      %v4351 = vsub.f32 %v4260, %v4335
      %v4352 = vsub.f32 %v4265, %v4336
      %v4353 = vsub.f32 %v4270, %v4337
      %v4354 = vmul.f32 %v4338, %v4338
      %v4355 = vmul.f32 %v4339, %v4339
      %v4356 = vmul.f32 %v4340, %v4340
      %v4357 = vmul.f32 %v4341, %v4341
      %v4358 = vmul.f32 %v4342, %v4342
      %v4359 = vmul.f32 %v4343, %v4343
      %v4360 = vmul.f32 %v4344, %v4344
      %v4361 = vmul.f32 %v4345, %v4345
      %v4362 = vmul.f32 %v4346, %v4346
      %v4363 = vmul.f32 %v4347, %v4347
      %v4364 = vmul.f32 %v4348, %v4348
      %v4365 = vmul.f32 %v4349, %v4349
      %v4366 = vmul.f32 %v4350, %v4350
      %v4367 = vmul.f32 %v4351, %v4351
      %v4368 = vmul.f32 %v4352, %v4352
      %v4369 = vmul.f32 %v4353, %v4353
      %v4370 = vsel %vm2243, %v4354, 0.0
      %4371 = vadd.xlane.f32.xlu0 %v4370
      %v4372 = vpop.xlane.xlu0 %4371
      %v4373 = vsel %vm2243, %v4355, 0.0
      %4374 = vadd.xlane.f32.xlu0 %v4373
      %v4375 = vpop.xlane.xlu0 %4374
      %v4376 = vsel %vm2243, %v4356, 0.0
      %4377 = vadd.xlane.f32.xlu0 %v4376
      %v4378 = vpop.xlane.xlu0 %4377
      %v4379 = vsel %vm2243, %v4357, 0.0
      %4380 = vadd.xlane.f32.xlu0 %v4379
      %v4381 = vpop.xlane.xlu0 %4380
      %v4382 = vsel %vm2243, %v4358, 0.0
      %4383 = vadd.xlane.f32.xlu0 %v4382
      %v4384 = vpop.xlane.xlu0 %4383
      %v4385 = vsel %vm2243, %v4359, 0.0
      %4386 = vadd.xlane.f32.xlu0 %v4385
      %v4387 = vpop.xlane.xlu0 %4386
      %v4388 = vsel %vm2243, %v4360, 0.0
      %4389 = vadd.xlane.f32.xlu0 %v4388
      %v4390 = vpop.xlane.xlu0 %4389
      %v4391 = vsel %vm2243, %v4361, 0.0
      %4392 = vadd.xlane.f32.xlu0 %v4391
      %v4393 = vpop.xlane.xlu0 %4392
      %v4394 = vsel %vm2243, %v4362, 0.0
      %4395 = vadd.xlane.f32.xlu0 %v4394
      %v4396 = vpop.xlane.xlu0 %4395
      %v4397 = vsel %vm2243, %v4363, 0.0
      %4398 = vadd.xlane.f32.xlu0 %v4397
      %v4399 = vpop.xlane.xlu0 %4398
      %v4400 = vsel %vm2243, %v4364, 0.0
      %4401 = vadd.xlane.f32.xlu0 %v4400
      %v4402 = vpop.xlane.xlu0 %4401
      %v4403 = vsel %vm2243, %v4365, 0.0
      %4404 = vadd.xlane.f32.xlu0 %v4403
      %v4405 = vpop.xlane.xlu0 %4404
      %v4406 = vsel %vm2243, %v4366, 0.0
      %4407 = vadd.xlane.f32.xlu0 %v4406
      %v4408 = vpop.xlane.xlu0 %4407
      %v4409 = vsel %vm2243, %v4367, 0.0
      %4410 = vadd.xlane.f32.xlu0 %v4409
      %v4411 = vpop.xlane.xlu0 %4410
      %v4412 = vsel %vm2243, %v4368, 0.0
      %4413 = vadd.xlane.f32.xlu0 %v4412
      %v4414 = vpop.xlane.xlu0 %4413
      %v4415 = vsel %vm2243, %v4369, 0.0
      %4416 = vadd.xlane.f32.xlu0 %v4415
      %v4417 = vpop.xlane.xlu0 %4416
      %v4418 = vmul.f32 %v4372, %v4321
      %v4419 = vmul.f32 %v4375, %v4321
      %v4420 = vmul.f32 %v4378, %v4321
      %v4421 = vmul.f32 %v4381, %v4321
      %v4422 = vmul.f32 %v4384, %v4321
      %v4423 = vmul.f32 %v4387, %v4321
      %v4424 = vmul.f32 %v4390, %v4321
      %v4425 = vmul.f32 %v4393, %v4321
      %v4426 = vmul.f32 %v4396, %v4321
      %v4427 = vmul.f32 %v4399, %v4321
      %v4428 = vmul.f32 %v4402, %v4321
      %v4429 = vmul.f32 %v4405, %v4321
      %v4430 = vmul.f32 %v4408, %v4321
      %v4431 = vmul.f32 %v4411, %v4321
      %v4432 = vmul.f32 %v4414, %v4321
      %v4433 = vmul.f32 %v4417, %v4321
      %v4434 = vadd.f32 %v4418, 1e-05
      %v4435 = vadd.f32 %v4419, 1e-05
      %v4436 = vadd.f32 %v4420, 1e-05
      %v4437 = vadd.f32 %v4421, 1e-05
      %v4438 = vadd.f32 %v4422, 1e-05
      %v4439 = vadd.f32 %v4423, 1e-05
      %v4440 = vadd.f32 %v4424, 1e-05
      %v4441 = vadd.f32 %v4425, 1e-05
      %v4442 = vadd.f32 %v4426, 1e-05
      %v4443 = vadd.f32 %v4427, 1e-05
      %v4444 = vadd.f32 %v4428, 1e-05
      %v4445 = vadd.f32 %v4429, 1e-05
      %v4446 = vadd.f32 %v4430, 1e-05
      %v4447 = vadd.f32 %v4431, 1e-05
      %v4448 = vadd.f32 %v4432, 1e-05
      %v4449 = vadd.f32 %v4433, 1e-05
      %v4450 = vrsqrt.pop %v4434
      %v4451 = vrsqrt.pop %v4435
      %v4452 = vrsqrt.pop %v4436
      %v4453 = vrsqrt.pop %v4437
      %v4454 = vrsqrt.pop %v4438
      %v4455 = vrsqrt.pop %v4439
      %v4456 = vrsqrt.pop %v4440
      %v4457 = vrsqrt.pop %v4441
      %v4458 = vrsqrt.pop %v4442
      %v4459 = vrsqrt.pop %v4443
      %v4460 = vrsqrt.pop %v4444
      %v4461 = vrsqrt.pop %v4445
      %v4462 = vrsqrt.pop %v4446
      %v4463 = vrsqrt.pop %v4447
      %v4464 = vrsqrt.pop %v4448
      %v4465 = vrsqrt.pop %v4449
      %v4466 = vmul.f32 %v4338, %v4450
      %v4467 = vmul.f32 %v4339, %v4451
      %v4468 = vmul.f32 %v4340, %v4452
      %v4469 = vmul.f32 %v4341, %v4453
      %v4470 = vmul.f32 %v4342, %v4454
      %v4471 = vmul.f32 %v4343, %v4455
      %v4472 = vmul.f32 %v4344, %v4456
      %v4473 = vmul.f32 %v4345, %v4457
      %v4474 = vmul.f32 %v4346, %v4458
      %v4475 = vmul.f32 %v4347, %v4459
      %v4476 = vmul.f32 %v4348, %v4460
      %v4477 = vmul.f32 %v4349, %v4461
      %v4478 = vmul.f32 %v4350, %v4462
      %v4479 = vmul.f32 %v4351, %v4463
      %v4480 = vmul.f32 %v4352, %v4464
      %v4481 = vmul.f32 %v4353, %v4465
      %v4482 = vld [vmem:[%s4] sm:$0x1]
      %v4484 = vlaneseq
      %v4485 = vshrl.u32 %v4484, 7
      %v4486 = vsub.s32 0, %v4485
      %v4487 = vrot.slane %v4482, %v4486
      %v4489 = vmul.f32 %v4466, %v4487
      %v4490 = vmul.f32 %v4467, %v4487
      %v4491 = vmul.f32 %v4468, %v4487
      %v4492 = vmul.f32 %v4469, %v4487
      %v4493 = vmul.f32 %v4470, %v4487
      %v4494 = vmul.f32 %v4471, %v4487
      %v4495 = vmul.f32 %v4472, %v4487
      %v4496 = vmul.f32 %v4473, %v4487
      %v4497 = vmul.f32 %v4474, %v4487
      %v4498 = vmul.f32 %v4475, %v4487
      %v4499 = vmul.f32 %v4476, %v4487
      %v4500 = vmul.f32 %v4477, %v4487
      %v4501 = vmul.f32 %v4478, %v4487
      %v4502 = vmul.f32 %v4479, %v4487
      %v4503 = vmul.f32 %v4480, %v4487
      %v4504 = vmul.f32 %v4481, %v4487
      %v4505 = vld [vmem:[%s5] sm:$0x1]
      %v4507 = vlaneseq
      %v4508 = vshrl.u32 %v4507, 7
      %v4509 = vsub.s32 0, %v4508
      %v4510 = vrot.slane %v4505, %v4509
      %v4512 = vadd.f32 %v4489, %v4510
      %v4513 = vadd.f32 %v4490, %v4510
      %v4514 = vadd.f32 %v4491, %v4510
      %v4515 = vadd.f32 %v4492, %v4510
      %v4516 = vadd.f32 %v4493, %v4510
      %v4517 = vadd.f32 %v4494, %v4510
      %v4518 = vadd.f32 %v4495, %v4510
      %v4519 = vadd.f32 %v4496, %v4510
      %v4520 = vadd.f32 %v4497, %v4510
      %v4521 = vadd.f32 %v4498, %v4510
      %v4522 = vadd.f32 %v4499, %v4510
      %v4523 = vadd.f32 %v4500, %v4510
      %v4524 = vadd.f32 %v4501, %v4510
      %v4525 = vadd.f32 %v4502, %v4510
      %v4526 = vadd.f32 %v4503, %v4510
      %v4527 = vadd.f32 %v4504, %v4510
      %4528 = vst.msk [vmem:[%s253] sm:$0xff] %vm2243, %v4512
      %4529 = vst.msk [vmem:[%s253 + $0x8] sm:$0xff] %vm2243, %v4513
      %4530 = vst.msk [vmem:[%s253 + $0x10] sm:$0xff] %vm2243, %v4514
      %4531 = vst.msk [vmem:[%s253 + $0x18] sm:$0xff] %vm2243, %v4515
      %4532 = vst.msk [vmem:[%s253 + $0x20] sm:$0xff] %vm2243, %v4516
      %4533 = vst.msk [vmem:[%s253 + $0x28] sm:$0xff] %vm2243, %v4517
      %4534 = vst.msk [vmem:[%s253 + $0x30] sm:$0xff] %vm2243, %v4518
      %4535 = vst.msk [vmem:[%s253 + $0x38] sm:$0xff] %vm2243, %v4519
      %4536 = vst.msk [vmem:[%s253 + $0x40] sm:$0xff] %vm2243, %v4520
      %4537 = vst.msk [vmem:[%s253 + $0x48] sm:$0xff] %vm2243, %v4521
      %4538 = vst.msk [vmem:[%s253 + $0x50] sm:$0xff] %vm2243, %v4522
      %4539 = vst.msk [vmem:[%s253 + $0x58] sm:$0xff] %vm2243, %v4523
      %4540 = vst.msk [vmem:[%s253 + $0x60] sm:$0xff] %vm2243, %v4524
      %4541 = vst.msk [vmem:[%s253 + $0x68] sm:$0xff] %vm2243, %v4525
      %4542 = vst.msk [vmem:[%s253 + $0x70] sm:$0xff] %vm2243, %v4526
      %4543 = vst.msk [vmem:[%s253 + $0x78] sm:$0xff] %vm2243, %v4527
      %s4544 = smul.u32 16, %s17
      %p4545 = scmp.lt.s32.totalorder %s4544, 63
      %s4546 = scalar_select %p4545, %s4544, 63
      %s4547 = smul.addr %s4546, 8
      %s4548 = scalar_lea.vmem %s6, %s4547
      // Predicated region
      $region45: #{tpu_custom_call.1} parent=43 // pred_check
        %p4549 = pneg %p166
      $region46: #{tpu_custom_call.1} parent=43 // pred_check_branch
        %4551 = sbr.rel (%p4549) target = $region48
      $region47: #{tpu_custom_call.1} parent=43 // pred_region
        %s4552 = smul.u32 16, %s17
      $region48: #{tpu_custom_call.1} parent=43 // pred_fallthru
        _
    $region44: #{tpu_custom_call.1} parent=5 // pred_fallthru
      _
    %p4553 = scmp.le.s32.totalorder 2, %s12
    // Predicated region
    $region49: #{tpu_custom_call.1} parent=5 // pred_check
      %p4554 = pneg %p4553
    $region50: #{tpu_custom_call.1} parent=5 // pred_check_branch
      %4556 = sbr.rel (%p4554) target = $region52
    $region51: #{tpu_custom_call.1} parent=5 // pred_region
      %s4557 = ssub.s32 %s12, 2
      // Predicated region
      $region53: #{tpu_custom_call.1} parent=51 // pred_check
        %p4558 = pneg %p172
      $region54: #{tpu_custom_call.1} parent=51 // pred_check_branch
        %4560 = sbr.rel (%p4558) target = $region56
      $region55: #{tpu_custom_call.1} parent=51 // pred_region
        %s4561 = smul.u32 16, %s18
        %p4562 = scmp.lt.s32.totalorder %s4561, 63
        %s4563 = scalar_select %p4562, %s4561, 63
        %s4564 = smul.addr %s4563, 8
        %s4565 = scalar_lea.vmem %s6, %s4564
      $region56: #{tpu_custom_call.1} parent=51 // pred_fallthru
        _
    $region52: #{tpu_custom_call.1} parent=5 // pred_fallthru
      _
  $region6: #{tpu_custom_call.1} parent=0 // loop_footer
    %s16 = sadd.s32 1, %s12
  $region7: #{tpu_custom_call.1} parent=0 // loop_footer_branch
    %11 = sbr.rel target = $region3
  $region8: #{tpu_custom_call.1} parent=0 // loop_exit
    _

</llo_original>
